<compile_context>
chip_gen: v5e
topology: v5e:2x2
jax: 0.10.0
libtpu: 0.0.40
codegen_flags: <defaults>
</compile_context>

<pallas_src>
import numpy as np
import jax
import jax.numpy as jnp
from jax.experimental import pallas as pl
from jax.experimental.pallas import tpu as pltpu

LRELU_SLOPE = 0.1

# ----- small synthetic HiFi-GAN config ---------------------------------------
MEL = 32                      # input mel channels
T = 8                         # input frames
CH0 = 32                      # upsample_initial_channel
UP_SCALES = [2, 2]            # upsample strides (stride-2 ConvTranspose1d)
UP_KERNELS = [4, 4]           # ConvTranspose kernel sizes
RES_KERNELS = [3, 5]          # MRF resblock kernel sizes
RES_DILATIONS = [[1, 3], [1, 3]]
CHS = [CH0, CH0 // 2, CH0 // 4]
_PAD = 8                      # in-kernel zero-pad rows (sublane-aligned concat)


# --------------------------- in-kernel building blocks ------------------------
def _lrelu(v):
    return jnp.where(v > 0.0, v, LRELU_SLOPE * v)


def _pad_rows(x):
    """Concat 8 zero rows on each side (sublane-aligned sizes only)."""
    z = jnp.zeros((_PAD, x.shape[1]), jnp.float32)
    return jnp.concatenate([z, x, z], axis=0)


def _conv(x, w_ref, b_ref, *, K, dilation, pad, lrelu):
    """Length-preserving Conv1d on (L, Cin): sum over K taps of shifted MXU matmuls.
    w_ref: (K, Cin, Cout); b_ref: (1, Cout)."""
    assert 2 * pad == dilation * (K - 1), "conv must preserve length"
    if lrelu:
        x = _lrelu(x)                       # lrelu(0)==0, so it commutes with zero padding
    L = x.shape[0]
    xp = _pad_rows(x)                       # (L + 16, Cin)
    acc = jnp.zeros((L, w_ref.shape[-1]), jnp.float32)
    base = _PAD - pad
    for k in range(K):                      # static unroll, K <= 7
        off = base + k * dilation
        acc = acc + jnp.dot(xp[off:off + L, :], w_ref[k],
                            preferred_element_type=jnp.float32)
    return acc + b_ref[...]


def _convT_s2k4p1(x, w_ref, b_ref, pe_ref, po_ref):
    """leaky_relu -> ConvTranspose1d(stride=2, kernel=4, padding=1), polyphase form:
        y[2t]   = x[t]   @ W[:,:,1] + x[t-1] @ W[:,:,3]
        y[2t+1] = x[t+1] @ W[:,:,0] + x[t]   @ W[:,:,2]
    w_ref: (4, Cin, Cout) with w_ref[j] == torch_W[:, :, j]; pe/po: (2L, L) row-scatter
    matrices that interleave the even/odd phases back into time order (no zero-insertion)."""
    x = _lrelu(x)
    L = x.shape[0]
    xp = _pad_rows(x)                       # (L + 16, Cin)
    x_prev = xp[_PAD - 1:_PAD - 1 + L, :]
    x_cur = xp[_PAD:_PAD + L, :]
    x_next = xp[_PAD + 1:_PAD + 1 + L, :]
    y_even = (jnp.dot(x_cur, w_ref[1], preferred_element_type=jnp.float32)
              + jnp.dot(x_prev, w_ref[3], preferred_element_type=jnp.float32))
    y_odd = (jnp.dot(x_next, w_ref[0], preferred_element_type=jnp.float32)
             + jnp.dot(x_cur, w_ref[2], preferred_element_type=jnp.float32))
    y = (jnp.dot(pe_ref[...], y_even, preferred_element_type=jnp.float32)
         + jnp.dot(po_ref[...], y_odd, preferred_element_type=jnp.float32))
    return y + b_ref[...]


# ------------------------------ fused kernel ----------------------------------
def _hifigan_fused_kernel(*refs):
    """refs = (spec, *flat_params, out).  Whole generator in one invocation;
    all intermediate activations live on-chip."""
    spec_ref, o_ref = refs[0], refs[-1]
    it = iter(refs[1:-1])
    nxt = lambda: next(it)

    x = spec_ref[...]                                           # (T, MEL)
    x = _conv(x, nxt(), nxt(), K=7, dilation=1, pad=3, lrelu=False)
    for _ in range(len(UP_SCALES)):
        w_up, b_up, pe, po = nxt(), nxt(), nxt(), nxt()
        x = _convT_s2k4p1(x, w_up, b_up, pe, po)                # (2L, C_next)
        outs = []
        for kr, dils in zip(RES_KERNELS, RES_DILATIONS):
            c1 = [(nxt(), nxt()) for _ in dils]
            c2 = [(nxt(), nxt()) for _ in dils]
            xb = x
            for di, d in enumerate(dils):
                xt = _conv(xb, c1[di][0], c1[di][1], K=kr, dilation=d,
                           pad=d * (kr - 1) // 2, lrelu=True)
                xb = xb + _conv(xt, c2[di][0], c2[di][1], K=kr, dilation=1,
                                pad=(kr - 1) // 2, lrelu=True)
            outs.append(xb)
        x = (outs[0] + outs[1]) * 0.5        # MRF average folded in (no extra kernel)
    y = _conv(x, nxt(), nxt(), K=7, dilation=1, pad=3, lrelu=True)
    o_ref[...] = jnp.tanh(y)                 # (Lout, 1)
    assert next(it, None) is None, "parameter flattening mismatch"


# -------------------- init-time weight layout preparation ---------------------
def _interleave_matrices(l_out):
    """pe, po: (l_out, l_out//2) with pe[2t, t] = po[2t+1, t] = 1 (phase interleave)."""
    l_in = l_out // 2
    pe = np.zeros((l_out, l_in), np.float32)
    po = np.zeros((l_out, l_in), np.float32)
    t = np.arange(l_in)
    pe[2 * t, t] = 1.0
    po[2 * t + 1, t] = 1.0
    return jnp.asarray(pe), jnp.asarray(po)


def prepare_params(params, n_frames):
    """One-time transforms from torch weight layouts to kernel layouts (flat tuple)."""
    def cw(Wt):        # torch Conv1d weight (Cout, Cin, K) -> (K, Cin, Cout)
        return jnp.transpose(Wt, (2, 1, 0)).astype(jnp.float32)

    def cb(b):         # bias (C,) -> (1, C)
        return b.reshape(1, -1).astype(jnp.float32)

    flat = [cw(params['conv_pre_w']), cb(params['conv_pre_b'])]
    length = n_frames
    for i, up in enumerate(params['ups']):
        assert UP_SCALES[i] == 2 and UP_KERNELS[i] == 4, "polyphase path assumes s=2, k=4, p=1"
        # torch ConvTranspose1d weight (Cin, Cout, K) -> (K, Cin, Cout) tap-indexed
        w_up = jnp.transpose(up['w'], (2, 0, 1)).astype(jnp.float32)
        length *= UP_SCALES[i]
        pe, po = _interleave_matrices(length)
        flat += [w_up, cb(up['b']), pe, po]
        for blk in params['mrf'][i]:
            for c in blk['convs1'] + blk['convs2']:
                flat += [cw(c['w']), cb(c['b'])]
    flat += [cw(params['conv_post_w']), cb(params['conv_post_b'])]
    return tuple(flat)


# ------------------------------ jitted forward --------------------------------
@jax.jit
def wrapper_hifigan_forward(spec, flat_kparams):
    """spec: (T, MEL) float32 -> wave: (T * prod(UP_SCALES),) float32."""
    # torch wrapper's transpose(1,0)+unsqueeze(0) is pure layout: the (L, C) kernel layout
    # is exactly the original (T, MEL) array, so no data movement is needed.
    l_out = spec.shape[0]
    for s in UP_SCALES:
        l_out *= s
    n_in = 1 + len(flat_kparams)
    y = pl.pallas_call(
        _hifigan_fused_kernel,
        out_shape=jax.ShapeDtypeStruct((l_out, 1), jnp.float32),
        in_specs=[pl.BlockSpec(memory_space=pltpu.MemorySpace.VMEM)] * n_in,
        out_specs=pl.BlockSpec(memory_space=pltpu.MemorySpace.VMEM),
    )(spec, *flat_kparams)
    # predictor output is (1, 1, Lout) in torch; wrapper takes [0, 0] -> (Lout,)
    return y[:, 0]


# ------------------------- pure-JAX reference (NCL) --------------------------
def ref_forward(spec, params):
    lrelu = lambda v: jnp.where(v > 0.0, v, LRELU_SLOPE * v)
    prec = jax.lax.Precision.HIGHEST

    def conv(x, Wt, b, dilation=1, pad=0):
        y = jax.lax.conv_general_dilated(x, Wt, (1,), [(pad, pad)],
                                         rhs_dilation=(dilation,),
                                         dimension_numbers=('NCH', 'OIH', 'NCH'),
                                         precision=prec)
        return y + b[None, :, None]

    def convT(x, Wt, b, stride, pad):
        K = Wt.shape[-1]
        W = jnp.transpose(Wt[:, :, ::-1], (1, 0, 2))
        y = jax.lax.conv_general_dilated(x, W, (1,), [(K - 1 - pad, K - 1 - pad)],
                                         lhs_dilation=(stride,),
                                         dimension_numbers=('NCH', 'OIH', 'NCH'),
                                         precision=prec)
        return y + b[None, :, None]

    x = spec.T[None, :, :]                                  # (1, MEL, T)
    x = conv(x, params['conv_pre_w'], params['conv_pre_b'], 1, 3)
    for i, up in enumerate(params['ups']):
        s, k = UP_SCALES[i], UP_KERNELS[i]
        x = convT(lrelu(x), up['w'], up['b'], s, (k - s) // 2)
        outs = []
        for j, block in enumerate(params['mrf'][i]):
            kr = RES_KERNELS[j]
            xb = x
            for di, d in enumerate(RES_DILATIONS[j]):
                c1, c2 = block['convs1'][di], block['convs2'][di]
                xt = conv(lrelu(xb), c1['w'], c1['b'], d, d * (kr - 1) // 2)
                xb = xb + conv(lrelu(xt), c2['w'], c2['b'], 1, (kr - 1) // 2)
            outs.append(xb)
        x = (outs[0] + outs[1]) * 0.5
    y = jnp.tanh(conv(lrelu(x), params['conv_post_w'], params['conv_post_b'], 1, 3))
    return y[0, 0]


# ------------------------------- parameters ----------------------------------
def init_params(key):
    keys = iter(jax.random.split(key, 64))

    def randn(shape, scale=0.1):
        return scale * jax.random.normal(next(keys), shape, jnp.float32)

    p = {
        'conv_pre_w': randn((CH0, MEL, 7)),            # torch Conv1d (Cout, Cin, K)
        'conv_pre_b': randn((CH0,)),
        'ups': [], 'mrf': [],
    }
    for i, k in enumerate(UP_KERNELS):
        p['ups'].append({'w': randn((CHS[i], CHS[i + 1], k)),   # torch ConvT (Cin, Cout, K)
                         'b': randn((CHS[i + 1],))})
        ch = CHS[i + 1]
        blocks = []
        for kr, dils in zip(RES_KERNELS, RES_DILATIONS):
            blocks.append({
                'convs1': [{'w': randn((ch, ch, kr)), 'b': randn((ch,))} for _ in dils],
                'convs2': [{'w': randn((ch, ch, kr)), 'b': randn((ch,))} for _ in dils],
            })
        p['mrf'].append(blocks)
    p['conv_post_w'] = randn((1, CHS[-1], 7))
    p['conv_post_b'] = randn((1,))
    return p


if __name__ == "__main__":
    key = jax.random.PRNGKey(0)
    pkey, xkey = jax.random.split(key)
    params = init_params(pkey)
    spec = jax.random.normal(xkey, (T, MEL), jnp.float32)   # (frames, mel)

    # Init-time layout prep: done once, not re-executed per forward call.
    flat_kparams = prepare_params(params, T)

    wave = wrapper_hifigan_forward(spec, flat_kparams)
    wave = jax.block_until_ready(wave)

    expected_len = T
    for s in UP_SCALES:
        expected_len *= s
    assert wave.shape == (expected_len,), wave.shape

    ref = jax.block_until_ready(ref_forward(spec, params))
    max_err = float(jnp.max(jnp.abs(wave - ref)))
    # Expected error is ~1e-5 (f32 accumulation-order differences); the 2e-2 budget only
    # covers the case where the MXU lowers f32 matmuls via reduced-precision bf16 passes.
    # Structural bugs (tap/padding misalignment, polyphase phase swap) give O(0.1) errors
    # and are still caught.
    assert max_err < 2e-2, f"mismatch vs reference: {max_err}"

    print("KERNEL_OK")
</pallas_src>

<mosaic_0001>
module attributes {stable_mosaic.version = 11 : i64} {
  func.func @_hifigan_fused_kernel(%arg0: memref<8x32xf32, #tpu.memory_space<vmem>>, %arg1: memref<7x32x32xf32, #tpu.memory_space<vmem>>, %arg2: memref<1x32xf32, #tpu.memory_space<vmem>>, %arg3: memref<4x32x16xf32, #tpu.memory_space<vmem>>, %arg4: memref<1x16xf32, #tpu.memory_space<vmem>>, %arg5: memref<16x8xf32, #tpu.memory_space<vmem>>, %arg6: memref<16x8xf32, #tpu.memory_space<vmem>>, %arg7: memref<3x16x16xf32, #tpu.memory_space<vmem>>, %arg8: memref<1x16xf32, #tpu.memory_space<vmem>>, %arg9: memref<3x16x16xf32, #tpu.memory_space<vmem>>, %arg10: memref<1x16xf32, #tpu.memory_space<vmem>>, %arg11: memref<3x16x16xf32, #tpu.memory_space<vmem>>, %arg12: memref<1x16xf32, #tpu.memory_space<vmem>>, %arg13: memref<3x16x16xf32, #tpu.memory_space<vmem>>, %arg14: memref<1x16xf32, #tpu.memory_space<vmem>>, %arg15: memref<5x16x16xf32, #tpu.memory_space<vmem>>, %arg16: memref<1x16xf32, #tpu.memory_space<vmem>>, %arg17: memref<5x16x16xf32, #tpu.memory_space<vmem>>, %arg18: memref<1x16xf32, #tpu.memory_space<vmem>>, %arg19: memref<5x16x16xf32, #tpu.memory_space<vmem>>, %arg20: memref<1x16xf32, #tpu.memory_space<vmem>>, %arg21: memref<5x16x16xf32, #tpu.memory_space<vmem>>, %arg22: memref<1x16xf32, #tpu.memory_space<vmem>>, %arg23: memref<4x16x8xf32, #tpu.memory_space<vmem>>, %arg24: memref<1x8xf32, #tpu.memory_space<vmem>>, %arg25: memref<32x16xf32, #tpu.memory_space<vmem>>, %arg26: memref<32x16xf32, #tpu.memory_space<vmem>>, %arg27: memref<3x8x8xf32, #tpu.memory_space<vmem>>, %arg28: memref<1x8xf32, #tpu.memory_space<vmem>>, %arg29: memref<3x8x8xf32, #tpu.memory_space<vmem>>, %arg30: memref<1x8xf32, #tpu.memory_space<vmem>>, %arg31: memref<3x8x8xf32, #tpu.memory_space<vmem>>, %arg32: memref<1x8xf32, #tpu.memory_space<vmem>>, %arg33: memref<3x8x8xf32, #tpu.memory_space<vmem>>, %arg34: memref<1x8xf32, #tpu.memory_space<vmem>>, %arg35: memref<5x8x8xf32, #tpu.memory_space<vmem>>, %arg36: memref<1x8xf32, #tpu.memory_space<vmem>>, %arg37: memref<5x8x8xf32, #tpu.memory_space<vmem>>, %arg38: memref<1x8xf32, #tpu.memory_space<vmem>>, %arg39: memref<5x8x8xf32, #tpu.memory_space<vmem>>, %arg40: memref<1x8xf32, #tpu.memory_space<vmem>>, %arg41: memref<5x8x8xf32, #tpu.memory_space<vmem>>, %arg42: memref<1x8xf32, #tpu.memory_space<vmem>>, %arg43: memref<7x8x1xf32, #tpu.memory_space<vmem>>, %arg44: memref<1x1xf32, #tpu.memory_space<vmem>>, %arg45: memref<32x1xf32, #tpu.memory_space<vmem>>) attributes {dimension_semantics = [], scalar_prefetch = 0 : i64, scratch_operands = 0 : i64, tpu.core_type = #tpu.core_type<tc>} {
    %c0 = arith.constant 0 : index
    %c0_0 = arith.constant 0 : index
    %0 = vector.load %arg0[%c0, %c0_0] : memref<8x32xf32, #tpu.memory_space<vmem>>, vector<8x32xf32>
    %cst = arith.constant 0.000000e+00 : f32
    %1 = vector.broadcast %cst : f32 to vector<8x32xf32>
    %2 = tpu.concatenate %1, %0, %1 in 0 : vector<8x32xf32>, vector<8x32xf32>, vector<8x32xf32> -> vector<24x32xf32>
    %cst_1 = arith.constant 0.000000e+00 : f32
    %3 = vector.broadcast %cst_1 : f32 to vector<8x32xf32>
    %4 = vector.extract_strided_slice %2 {offsets = [5, 0], sizes = [8, 32], strides = [1, 1]} : vector<24x32xf32> to vector<8x32xf32>
    %c0_2 = arith.constant 0 : index
    %c0_3 = arith.constant 0 : index
    %c0_4 = arith.constant 0 : index
    %5 = vector.load %arg1[%c0_2, %c0_3, %c0_4] : memref<7x32x32xf32, #tpu.memory_space<vmem>>, vector<1x32x32xf32>
    %6 = vector.shape_cast %5 : vector<1x32x32xf32> to vector<32x32xf32>
    %cst_5 = arith.constant dense<0.000000e+00> : vector<8x32xf32>
    %7 = tpu.matmul %4, %6, %cst_5 {dimension_numbers = #tpu.dot_dimension_numbers<[1], [0], [0], [1], [0, 0, 1, 1], [], []>} : vector<8x32xf32>, vector<32x32xf32>, vector<8x32xf32> -> vector<8x32xf32>
    %8 = arith.addf %3, %7 : vector<8x32xf32>
    %9 = vector.extract_strided_slice %2 {offsets = [6, 0], sizes = [8, 32], strides = [1, 1]} : vector<24x32xf32> to vector<8x32xf32>
    %c1 = arith.constant 1 : index
    %c0_6 = arith.constant 0 : index
    %c0_7 = arith.constant 0 : index
    %10 = vector.load %arg1[%c1, %c0_6, %c0_7] : memref<7x32x32xf32, #tpu.memory_space<vmem>>, vector<1x32x32xf32>
    %11 = vector.shape_cast %10 : vector<1x32x32xf32> to vector<32x32xf32>
    %cst_8 = arith.constant dense<0.000000e+00> : vector<8x32xf32>
    %12 = tpu.matmul %9, %11, %cst_8 {dimension_numbers = #tpu.dot_dimension_numbers<[1], [0], [0], [1], [0, 0, 1, 1], [], []>} : vector<8x32xf32>, vector<32x32xf32>, vector<8x32xf32> -> vector<8x32xf32>
    %13 = arith.addf %8, %12 : vector<8x32xf32>
    %14 = vector.extract_strided_slice %2 {offsets = [7, 0], sizes = [8, 32], strides = [1, 1]} : vector<24x32xf32> to vector<8x32xf32>
    %c2 = arith.constant 2 : index
    %c0_9 = arith.constant 0 : index
    %c0_10 = arith.constant 0 : index
    %15 = vector.load %arg1[%c2, %c0_9, %c0_10] : memref<7x32x32xf32, #tpu.memory_space<vmem>>, vector<1x32x32xf32>
    %16 = vector.shape_cast %15 : vector<1x32x32xf32> to vector<32x32xf32>
    %cst_11 = arith.constant dense<0.000000e+00> : vector<8x32xf32>
    %17 = tpu.matmul %14, %16, %cst_11 {dimension_numbers = #tpu.dot_dimension_numbers<[1], [0], [0], [1], [0, 0, 1, 1], [], []>} : vector<8x32xf32>, vector<32x32xf32>, vector<8x32xf32> -> vector<8x32xf32>
    %18 = arith.addf %13, %17 : vector<8x32xf32>
    %19 = vector.extract_strided_slice %2 {offsets = [8, 0], sizes = [8, 32], strides = [1, 1]} : vector<24x32xf32> to vector<8x32xf32>
    %c3 = arith.constant 3 : index
    %c0_12 = arith.constant 0 : index
    %c0_13 = arith.constant 0 : index
    %20 = vector.load %arg1[%c3, %c0_12, %c0_13] : memref<7x32x32xf32, #tpu.memory_space<vmem>>, vector<1x32x32xf32>
    %21 = vector.shape_cast %20 : vector<1x32x32xf32> to vector<32x32xf32>
    %cst_14 = arith.constant dense<0.000000e+00> : vector<8x32xf32>
    %22 = tpu.matmul %19, %21, %cst_14 {dimension_numbers = #tpu.dot_dimension_numbers<[1], [0], [0], [1], [0, 0, 1, 1], [], []>} : vector<8x32xf32>, vector<32x32xf32>, vector<8x32xf32> -> vector<8x32xf32>
    %23 = arith.addf %18, %22 : vector<8x32xf32>
    %24 = vector.extract_strided_slice %2 {offsets = [9, 0], sizes = [8, 32], strides = [1, 1]} : vector<24x32xf32> to vector<8x32xf32>
    %c4 = arith.constant 4 : index
    %c0_15 = arith.constant 0 : index
    %c0_16 = arith.constant 0 : index
    %25 = vector.load %arg1[%c4, %c0_15, %c0_16] : memref<7x32x32xf32, #tpu.memory_space<vmem>>, vector<1x32x32xf32>
    %26 = vector.shape_cast %25 : vector<1x32x32xf32> to vector<32x32xf32>
    %cst_17 = arith.constant dense<0.000000e+00> : vector<8x32xf32>
    %27 = tpu.matmul %24, %26, %cst_17 {dimension_numbers = #tpu.dot_dimension_numbers<[1], [0], [0], [1], [0, 0, 1, 1], [], []>} : vector<8x32xf32>, vector<32x32xf32>, vector<8x32xf32> -> vector<8x32xf32>
    %28 = arith.addf %23, %27 : vector<8x32xf32>
    %29 = vector.extract_strided_slice %2 {offsets = [10, 0], sizes = [8, 32], strides = [1, 1]} : vector<24x32xf32> to vector<8x32xf32>
    %c5 = arith.constant 5 : index
    %c0_18 = arith.constant 0 : index
    %c0_19 = arith.constant 0 : index
    %30 = vector.load %arg1[%c5, %c0_18, %c0_19] : memref<7x32x32xf32, #tpu.memory_space<vmem>>, vector<1x32x32xf32>
    %31 = vector.shape_cast %30 : vector<1x32x32xf32> to vector<32x32xf32>
    %cst_20 = arith.constant dense<0.000000e+00> : vector<8x32xf32>
    %32 = tpu.matmul %29, %31, %cst_20 {dimension_numbers = #tpu.dot_dimension_numbers<[1], [0], [0], [1], [0, 0, 1, 1], [], []>} : vector<8x32xf32>, vector<32x32xf32>, vector<8x32xf32> -> vector<8x32xf32>
    %33 = arith.addf %28, %32 : vector<8x32xf32>
    %34 = vector.extract_strided_slice %2 {offsets = [11, 0], sizes = [8, 32], strides = [1, 1]} : vector<24x32xf32> to vector<8x32xf32>
    %c6 = arith.constant 6 : index
    %c0_21 = arith.constant 0 : index
    %c0_22 = arith.constant 0 : index
    %35 = vector.load %arg1[%c6, %c0_21, %c0_22] : memref<7x32x32xf32, #tpu.memory_space<vmem>>, vector<1x32x32xf32>
    %36 = vector.shape_cast %35 : vector<1x32x32xf32> to vector<32x32xf32>
    %cst_23 = arith.constant dense<0.000000e+00> : vector<8x32xf32>
    %37 = tpu.matmul %34, %36, %cst_23 {dimension_numbers = #tpu.dot_dimension_numbers<[1], [0], [0], [1], [0, 0, 1, 1], [], []>} : vector<8x32xf32>, vector<32x32xf32>, vector<8x32xf32> -> vector<8x32xf32>
    %38 = arith.addf %33, %37 : vector<8x32xf32>
    %c0_24 = arith.constant 0 : index
    %c0_25 = arith.constant 0 : index
    %39 = vector.load %arg2[%c0_24, %c0_25] : memref<1x32xf32, #tpu.memory_space<vmem>>, vector<1x32xf32>
    %40 = vector.broadcast %39 : vector<1x32xf32> to vector<8x32xf32>
    %41 = arith.addf %38, %40 : vector<8x32xf32>
    %cst_26 = arith.constant 0.000000e+00 : f32
    %42 = vector.broadcast %cst_26 : f32 to vector<8x32xf32>
    %43 = arith.cmpf ogt, %41, %42 : vector<8x32xf32>
    %cst_27 = arith.constant 1.000000e-01 : f32
    %44 = vector.broadcast %cst_27 : f32 to vector<8x32xf32>
    %45 = arith.mulf %44, %41 : vector<8x32xf32>
    %46 = arith.select %43, %41, %45 : vector<8x32xi1>, vector<8x32xf32>
    %cst_28 = arith.constant 0.000000e+00 : f32
    %47 = vector.broadcast %cst_28 : f32 to vector<8x32xf32>
    %48 = tpu.concatenate %47, %46, %47 in 0 : vector<8x32xf32>, vector<8x32xf32>, vector<8x32xf32> -> vector<24x32xf32>
    %49 = vector.extract_strided_slice %48 {offsets = [7, 0], sizes = [8, 32], strides = [1, 1]} : vector<24x32xf32> to vector<8x32xf32>
    %50 = vector.extract_strided_slice %48 {offsets = [8, 0], sizes = [8, 32], strides = [1, 1]} : vector<24x32xf32> to vector<8x32xf32>
    %51 = vector.extract_strided_slice %48 {offsets = [9, 0], sizes = [8, 32], strides = [1, 1]} : vector<24x32xf32> to vector<8x32xf32>
    %c1_29 = arith.constant 1 : index
    %c0_30 = arith.constant 0 : index
    %c0_31 = arith.constant 0 : index
    %52 = vector.load %arg3[%c1_29, %c0_30, %c0_31] : memref<4x32x16xf32, #tpu.memory_space<vmem>>, vector<1x32x16xf32>
    %53 = vector.shape_cast %52 : vector<1x32x16xf32> to vector<32x16xf32>
    %cst_32 = arith.constant dense<0.000000e+00> : vector<8x16xf32>
    %54 = tpu.matmul %50, %53, %cst_32 {dimension_numbers = #tpu.dot_dimension_numbers<[1], [0], [0], [1], [0, 0, 1, 1], [], []>} : vector<8x32xf32>, vector<32x16xf32>, vector<8x16xf32> -> vector<8x16xf32>
    %c3_33 = arith.constant 3 : index
    %c0_34 = arith.constant 0 : index
    %c0_35 = arith.constant 0 : index
    %55 = vector.load %arg3[%c3_33, %c0_34, %c0_35] : memref<4x32x16xf32, #tpu.memory_space<vmem>>, vector<1x32x16xf32>
    %56 = vector.shape_cast %55 : vector<1x32x16xf32> to vector<32x16xf32>
    %cst_36 = arith.constant dense<0.000000e+00> : vector<8x16xf32>
    %57 = tpu.matmul %49, %56, %cst_36 {dimension_numbers = #tpu.dot_dimension_numbers<[1], [0], [0], [1], [0, 0, 1, 1], [], []>} : vector<8x32xf32>, vector<32x16xf32>, vector<8x16xf32> -> vector<8x16xf32>
    %58 = arith.addf %54, %57 : vector<8x16xf32>
    %c0_37 = arith.constant 0 : index
    %c0_38 = arith.constant 0 : index
    %c0_39 = arith.constant 0 : index
    %59 = vector.load %arg3[%c0_37, %c0_38, %c0_39] : memref<4x32x16xf32, #tpu.memory_space<vmem>>, vector<1x32x16xf32>
    %60 = vector.shape_cast %59 : vector<1x32x16xf32> to vector<32x16xf32>
    %cst_40 = arith.constant dense<0.000000e+00> : vector<8x16xf32>
    %61 = tpu.matmul %51, %60, %cst_40 {dimension_numbers = #tpu.dot_dimension_numbers<[1], [0], [0], [1], [0, 0, 1, 1], [], []>} : vector<8x32xf32>, vector<32x16xf32>, vector<8x16xf32> -> vector<8x16xf32>
    %c2_41 = arith.constant 2 : index
    %c0_42 = arith.constant 0 : index
    %c0_43 = arith.constant 0 : index
    %62 = vector.load %arg3[%c2_41, %c0_42, %c0_43] : memref<4x32x16xf32, #tpu.memory_space<vmem>>, vector<1x32x16xf32>
    %63 = vector.shape_cast %62 : vector<1x32x16xf32> to vector<32x16xf32>
    %cst_44 = arith.constant dense<0.000000e+00> : vector<8x16xf32>
    %64 = tpu.matmul %50, %63, %cst_44 {dimension_numbers = #tpu.dot_dimension_numbers<[1], [0], [0], [1], [0, 0, 1, 1], [], []>} : vector<8x32xf32>, vector<32x16xf32>, vector<8x16xf32> -> vector<8x16xf32>
    %65 = arith.addf %61, %64 : vector<8x16xf32>
    %c0_45 = arith.constant 0 : index
    %c0_46 = arith.constant 0 : index
    %66 = vector.load %arg5[%c0_45, %c0_46] : memref<16x8xf32, #tpu.memory_space<vmem>>, vector<16x8xf32>
    %cst_47 = arith.constant dense<0.000000e+00> : vector<16x16xf32>
    %67 = tpu.matmul %66, %58, %cst_47 {dimension_numbers = #tpu.dot_dimension_numbers<[1], [0], [0], [1], [0, 0, 1, 1], [], []>} : vector<16x8xf32>, vector<8x16xf32>, vector<16x16xf32> -> vector<16x16xf32>
    %c0_48 = arith.constant 0 : index
    %c0_49 = arith.constant 0 : index
    %68 = vector.load %arg6[%c0_48, %c0_49] : memref<16x8xf32, #tpu.memory_space<vmem>>, vector<16x8xf32>
    %cst_50 = arith.constant dense<0.000000e+00> : vector<16x16xf32>
    %69 = tpu.matmul %68, %65, %cst_50 {dimension_numbers = #tpu.dot_dimension_numbers<[1], [0], [0], [1], [0, 0, 1, 1], [], []>} : vector<16x8xf32>, vector<8x16xf32>, vector<16x16xf32> -> vector<16x16xf32>
    %70 = arith.addf %67, %69 : vector<16x16xf32>
    %c0_51 = arith.constant 0 : index
    %c0_52 = arith.constant 0 : index
    %71 = vector.load %arg4[%c0_51, %c0_52] : memref<1x16xf32, #tpu.memory_space<vmem>>, vector<1x16xf32>
    %72 = vector.broadcast %71 : vector<1x16xf32> to vector<16x16xf32>
    %73 = arith.addf %70, %72 : vector<16x16xf32>
    %cst_53 = arith.constant 0.000000e+00 : f32
    %74 = vector.broadcast %cst_53 : f32 to vector<16x16xf32>
    %75 = arith.cmpf ogt, %73, %74 : vector<16x16xf32>
    %cst_54 = arith.constant 1.000000e-01 : f32
    %76 = vector.broadcast %cst_54 : f32 to vector<16x16xf32>
    %77 = arith.mulf %76, %73 : vector<16x16xf32>
    %78 = arith.select %75, %73, %77 : vector<16x16xi1>, vector<16x16xf32>
    %cst_55 = arith.constant 0.000000e+00 : f32
    %79 = vector.broadcast %cst_55 : f32 to vector<8x16xf32>
    %80 = tpu.concatenate %79, %78, %79 in 0 : vector<8x16xf32>, vector<16x16xf32>, vector<8x16xf32> -> vector<32x16xf32>
    %cst_56 = arith.constant 0.000000e+00 : f32
    %81 = vector.broadcast %cst_56 : f32 to vector<16x16xf32>
    %82 = vector.extract_strided_slice %80 {offsets = [7, 0], sizes = [16, 16], strides = [1, 1]} : vector<32x16xf32> to vector<16x16xf32>
    %c0_57 = arith.constant 0 : index
    %c0_58 = arith.constant 0 : index
    %c0_59 = arith.constant 0 : index
    %83 = vector.load %arg7[%c0_57, %c0_58, %c0_59] : memref<3x16x16xf32, #tpu.memory_space<vmem>>, vector<1x16x16xf32>
    %84 = vector.shape_cast %83 : vector<1x16x16xf32> to vector<16x16xf32>
    %cst_60 = arith.constant dense<0.000000e+00> : vector<16x16xf32>
    %85 = tpu.matmul %82, %84, %cst_60 {dimension_numbers = #tpu.dot_dimension_numbers<[1], [0], [0], [1], [0, 0, 1, 1], [], []>} : vector<16x16xf32>, vector<16x16xf32>, vector<16x16xf32> -> vector<16x16xf32>
    %86 = arith.addf %81, %85 : vector<16x16xf32>
    %87 = vector.extract_strided_slice %80 {offsets = [8, 0], sizes = [16, 16], strides = [1, 1]} : vector<32x16xf32> to vector<16x16xf32>
    %c1_61 = arith.constant 1 : index
    %c0_62 = arith.constant 0 : index
    %c0_63 = arith.constant 0 : index
    %88 = vector.load %arg7[%c1_61, %c0_62, %c0_63] : memref<3x16x16xf32, #tpu.memory_space<vmem>>, vector<1x16x16xf32>
    %89 = vector.shape_cast %88 : vector<1x16x16xf32> to vector<16x16xf32>
    %cst_64 = arith.constant dense<0.000000e+00> : vector<16x16xf32>
    %90 = tpu.matmul %87, %89, %cst_64 {dimension_numbers = #tpu.dot_dimension_numbers<[1], [0], [0], [1], [0, 0, 1, 1], [], []>} : vector<16x16xf32>, vector<16x16xf32>, vector<16x16xf32> -> vector<16x16xf32>
    %91 = arith.addf %86, %90 : vector<16x16xf32>
    %92 = vector.extract_strided_slice %80 {offsets = [9, 0], sizes = [16, 16], strides = [1, 1]} : vector<32x16xf32> to vector<16x16xf32>
    %c2_65 = arith.constant 2 : index
    %c0_66 = arith.constant 0 : index
    %c0_67 = arith.constant 0 : index
    %93 = vector.load %arg7[%c2_65, %c0_66, %c0_67] : memref<3x16x16xf32, #tpu.memory_space<vmem>>, vector<1x16x16xf32>
    %94 = vector.shape_cast %93 : vector<1x16x16xf32> to vector<16x16xf32>
    %cst_68 = arith.constant dense<0.000000e+00> : vector<16x16xf32>
    %95 = tpu.matmul %92, %94, %cst_68 {dimension_numbers = #tpu.dot_dimension_numbers<[1], [0], [0], [1], [0, 0, 1, 1], [], []>} : vector<16x16xf32>, vector<16x16xf32>, vector<16x16xf32> -> vector<16x16xf32>
    %96 = arith.addf %91, %95 : vector<16x16xf32>
    %c0_69 = arith.constant 0 : index
    %c0_70 = arith.constant 0 : index
    %97 = vector.load %arg8[%c0_69, %c0_70] : memref<1x16xf32, #tpu.memory_space<vmem>>, vector<1x16xf32>
    %98 = vector.broadcast %97 : vector<1x16xf32> to vector<16x16xf32>
    %99 = arith.addf %96, %98 : vector<16x16xf32>
    %cst_71 = arith.constant 0.000000e+00 : f32
    %100 = vector.broadcast %cst_71 : f32 to vector<16x16xf32>
    %101 = arith.cmpf ogt, %99, %100 : vector<16x16xf32>
    %cst_72 = arith.constant 1.000000e-01 : f32
    %102 = vector.broadcast %cst_72 : f32 to vector<16x16xf32>
    %103 = arith.mulf %102, %99 : vector<16x16xf32>
    %104 = arith.select %101, %99, %103 : vector<16x16xi1>, vector<16x16xf32>
    %cst_73 = arith.constant 0.000000e+00 : f32
    %105 = vector.broadcast %cst_73 : f32 to vector<8x16xf32>
    %106 = tpu.concatenate %105, %104, %105 in 0 : vector<8x16xf32>, vector<16x16xf32>, vector<8x16xf32> -> vector<32x16xf32>
    %cst_74 = arith.constant 0.000000e+00 : f32
    %107 = vector.broadcast %cst_74 : f32 to vector<16x16xf32>
    %108 = vector.extract_strided_slice %106 {offsets = [7, 0], sizes = [16, 16], strides = [1, 1]} : vector<32x16xf32> to vector<16x16xf32>
    %c0_75 = arith.constant 0 : index
    %c0_76 = arith.constant 0 : index
    %c0_77 = arith.constant 0 : index
    %109 = vector.load %arg11[%c0_75, %c0_76, %c0_77] : memref<3x16x16xf32, #tpu.memory_space<vmem>>, vector<1x16x16xf32>
    %110 = vector.shape_cast %109 : vector<1x16x16xf32> to vector<16x16xf32>
    %cst_78 = arith.constant dense<0.000000e+00> : vector<16x16xf32>
    %111 = tpu.matmul %108, %110, %cst_78 {dimension_numbers = #tpu.dot_dimension_numbers<[1], [0], [0], [1], [0, 0, 1, 1], [], []>} : vector<16x16xf32>, vector<16x16xf32>, vector<16x16xf32> -> vector<16x16xf32>
    %112 = arith.addf %107, %111 : vector<16x16xf32>
    %113 = vector.extract_strided_slice %106 {offsets = [8, 0], sizes = [16, 16], strides = [1, 1]} : vector<32x16xf32> to vector<16x16xf32>
    %c1_79 = arith.constant 1 : index
    %c0_80 = arith.constant 0 : index
    %c0_81 = arith.constant 0 : index
    %114 = vector.load %arg11[%c1_79, %c0_80, %c0_81] : memref<3x16x16xf32, #tpu.memory_space<vmem>>, vector<1x16x16xf32>
    %115 = vector.shape_cast %114 : vector<1x16x16xf32> to vector<16x16xf32>
    %cst_82 = arith.constant dense<0.000000e+00> : vector<16x16xf32>
    %116 = tpu.matmul %113, %115, %cst_82 {dimension_numbers = #tpu.dot_dimension_numbers<[1], [0], [0], [1], [0, 0, 1, 1], [], []>} : vector<16x16xf32>, vector<16x16xf32>, vector<16x16xf32> -> vector<16x16xf32>
    %117 = arith.addf %112, %116 : vector<16x16xf32>
    %118 = vector.extract_strided_slice %106 {offsets = [9, 0], sizes = [16, 16], strides = [1, 1]} : vector<32x16xf32> to vector<16x16xf32>
    %c2_83 = arith.constant 2 : index
    %c0_84 = arith.constant 0 : index
    %c0_85 = arith.constant 0 : index
    %119 = vector.load %arg11[%c2_83, %c0_84, %c0_85] : memref<3x16x16xf32, #tpu.memory_space<vmem>>, vector<1x16x16xf32>
    %120 = vector.shape_cast %119 : vector<1x16x16xf32> to vector<16x16xf32>
    %cst_86 = arith.constant dense<0.000000e+00> : vector<16x16xf32>
    %121 = tpu.matmul %118, %120, %cst_86 {dimension_numbers = #tpu.dot_dimension_numbers<[1], [0], [0], [1], [0, 0, 1, 1], [], []>} : vector<16x16xf32>, vector<16x16xf32>, vector<16x16xf32> -> vector<16x16xf32>
    %122 = arith.addf %117, %121 : vector<16x16xf32>
    %c0_87 = arith.constant 0 : index
    %c0_88 = arith.constant 0 : index
    %123 = vector.load %arg12[%c0_87, %c0_88] : memref<1x16xf32, #tpu.memory_space<vmem>>, vector<1x16xf32>
    %124 = vector.broadcast %123 : vector<1x16xf32> to vector<16x16xf32>
    %125 = arith.addf %122, %124 : vector<16x16xf32>
    %126 = arith.addf %73, %125 : vector<16x16xf32>
    %cst_89 = arith.constant 0.000000e+00 : f32
    %127 = vector.broadcast %cst_89 : f32 to vector<16x16xf32>
    %128 = arith.cmpf ogt, %126, %127 : vector<16x16xf32>
    %cst_90 = arith.constant 1.000000e-01 : f32
    %129 = vector.broadcast %cst_90 : f32 to vector<16x16xf32>
    %130 = arith.mulf %129, %126 : vector<16x16xf32>
    %131 = arith.select %128, %126, %130 : vector<16x16xi1>, vector<16x16xf32>
    %cst_91 = arith.constant 0.000000e+00 : f32
    %132 = vector.broadcast %cst_91 : f32 to vector<8x16xf32>
    %133 = tpu.concatenate %132, %131, %132 in 0 : vector<8x16xf32>, vector<16x16xf32>, vector<8x16xf32> -> vector<32x16xf32>
    %cst_92 = arith.constant 0.000000e+00 : f32
    %134 = vector.broadcast %cst_92 : f32 to vector<16x16xf32>
    %135 = vector.extract_strided_slice %133 {offsets = [5, 0], sizes = [16, 16], strides = [1, 1]} : vector<32x16xf32> to vector<16x16xf32>
    %c0_93 = arith.constant 0 : index
    %c0_94 = arith.constant 0 : index
    %c0_95 = arith.constant 0 : index
    %136 = vector.load %arg9[%c0_93, %c0_94, %c0_95] : memref<3x16x16xf32, #tpu.memory_space<vmem>>, vector<1x16x16xf32>
    %137 = vector.shape_cast %136 : vector<1x16x16xf32> to vector<16x16xf32>
    %cst_96 = arith.constant dense<0.000000e+00> : vector<16x16xf32>
    %138 = tpu.matmul %135, %137, %cst_96 {dimension_numbers = #tpu.dot_dimension_numbers<[1], [0], [0], [1], [0, 0, 1, 1], [], []>} : vector<16x16xf32>, vector<16x16xf32>, vector<16x16xf32> -> vector<16x16xf32>
    %139 = arith.addf %134, %138 : vector<16x16xf32>
    %140 = vector.extract_strided_slice %133 {offsets = [8, 0], sizes = [16, 16], strides = [1, 1]} : vector<32x16xf32> to vector<16x16xf32>
    %c1_97 = arith.constant 1 : index
    %c0_98 = arith.constant 0 : index
    %c0_99 = arith.constant 0 : index
    %141 = vector.load %arg9[%c1_97, %c0_98, %c0_99] : memref<3x16x16xf32, #tpu.memory_space<vmem>>, vector<1x16x16xf32>
    %142 = vector.shape_cast %141 : vector<1x16x16xf32> to vector<16x16xf32>
    %cst_100 = arith.constant dense<0.000000e+00> : vector<16x16xf32>
    %143 = tpu.matmul %140, %142, %cst_100 {dimension_numbers = #tpu.dot_dimension_numbers<[1], [0], [0], [1], [0, 0, 1, 1], [], []>} : vector<16x16xf32>, vector<16x16xf32>, vector<16x16xf32> -> vector<16x16xf32>
    %144 = arith.addf %139, %143 : vector<16x16xf32>
    %145 = vector.extract_strided_slice %133 {offsets = [11, 0], sizes = [16, 16], strides = [1, 1]} : vector<32x16xf32> to vector<16x16xf32>
    %c2_101 = arith.constant 2 : index
    %c0_102 = arith.constant 0 : index
    %c0_103 = arith.constant 0 : index
    %146 = vector.load %arg9[%c2_101, %c0_102, %c0_103] : memref<3x16x16xf32, #tpu.memory_space<vmem>>, vector<1x16x16xf32>
    %147 = vector.shape_cast %146 : vector<1x16x16xf32> to vector<16x16xf32>
    %cst_104 = arith.constant dense<0.000000e+00> : vector<16x16xf32>
    %148 = tpu.matmul %145, %147, %cst_104 {dimension_numbers = #tpu.dot_dimension_numbers<[1], [0], [0], [1], [0, 0, 1, 1], [], []>} : vector<16x16xf32>, vector<16x16xf32>, vector<16x16xf32> -> vector<16x16xf32>
    %149 = arith.addf %144, %148 : vector<16x16xf32>
    %c0_105 = arith.constant 0 : index
    %c0_106 = arith.constant 0 : index
    %150 = vector.load %arg10[%c0_105, %c0_106] : memref<1x16xf32, #tpu.memory_space<vmem>>, vector<1x16xf32>
    %151 = vector.broadcast %150 : vector<1x16xf32> to vector<16x16xf32>
    %152 = arith.addf %149, %151 : vector<16x16xf32>
    %cst_107 = arith.constant 0.000000e+00 : f32
    %153 = vector.broadcast %cst_107 : f32 to vector<16x16xf32>
    %154 = arith.cmpf ogt, %152, %153 : vector<16x16xf32>
    %cst_108 = arith.constant 1.000000e-01 : f32
    %155 = vector.broadcast %cst_108 : f32 to vector<16x16xf32>
    %156 = arith.mulf %155, %152 : vector<16x16xf32>
    %157 = arith.select %154, %152, %156 : vector<16x16xi1>, vector<16x16xf32>
    %cst_109 = arith.constant 0.000000e+00 : f32
    %158 = vector.broadcast %cst_109 : f32 to vector<8x16xf32>
    %159 = tpu.concatenate %158, %157, %158 in 0 : vector<8x16xf32>, vector<16x16xf32>, vector<8x16xf32> -> vector<32x16xf32>
    %cst_110 = arith.constant 0.000000e+00 : f32
    %160 = vector.broadcast %cst_110 : f32 to vector<16x16xf32>
    %161 = vector.extract_strided_slice %159 {offsets = [7, 0], sizes = [16, 16], strides = [1, 1]} : vector<32x16xf32> to vector<16x16xf32>
    %c0_111 = arith.constant 0 : index
    %c0_112 = arith.constant 0 : index
    %c0_113 = arith.constant 0 : index
    %162 = vector.load %arg13[%c0_111, %c0_112, %c0_113] : memref<3x16x16xf32, #tpu.memory_space<vmem>>, vector<1x16x16xf32>
    %163 = vector.shape_cast %162 : vector<1x16x16xf32> to vector<16x16xf32>
    %cst_114 = arith.constant dense<0.000000e+00> : vector<16x16xf32>
    %164 = tpu.matmul %161, %163, %cst_114 {dimension_numbers = #tpu.dot_dimension_numbers<[1], [0], [0], [1], [0, 0, 1, 1], [], []>} : vector<16x16xf32>, vector<16x16xf32>, vector<16x16xf32> -> vector<16x16xf32>
    %165 = arith.addf %160, %164 : vector<16x16xf32>
    %166 = vector.extract_strided_slice %159 {offsets = [8, 0], sizes = [16, 16], strides = [1, 1]} : vector<32x16xf32> to vector<16x16xf32>
    %c1_115 = arith.constant 1 : index
    %c0_116 = arith.constant 0 : index
    %c0_117 = arith.constant 0 : index
    %167 = vector.load %arg13[%c1_115, %c0_116, %c0_117] : memref<3x16x16xf32, #tpu.memory_space<vmem>>, vector<1x16x16xf32>
    %168 = vector.shape_cast %167 : vector<1x16x16xf32> to vector<16x16xf32>
    %cst_118 = arith.constant dense<0.000000e+00> : vector<16x16xf32>
    %169 = tpu.matmul %166, %168, %cst_118 {dimension_numbers = #tpu.dot_dimension_numbers<[1], [0], [0], [1], [0, 0, 1, 1], [], []>} : vector<16x16xf32>, vector<16x16xf32>, vector<16x16xf32> -> vector<16x16xf32>
    %170 = arith.addf %165, %169 : vector<16x16xf32>
    %171 = vector.extract_strided_slice %159 {offsets = [9, 0], sizes = [16, 16], strides = [1, 1]} : vector<32x16xf32> to vector<16x16xf32>
    %c2_119 = arith.constant 2 : index
    %c0_120 = arith.constant 0 : index
    %c0_121 = arith.constant 0 : index
    %172 = vector.load %arg13[%c2_119, %c0_120, %c0_121] : memref<3x16x16xf32, #tpu.memory_space<vmem>>, vector<1x16x16xf32>
    %173 = vector.shape_cast %172 : vector<1x16x16xf32> to vector<16x16xf32>
    %cst_122 = arith.constant dense<0.000000e+00> : vector<16x16xf32>
    %174 = tpu.matmul %171, %173, %cst_122 {dimension_numbers = #tpu.dot_dimension_numbers<[1], [0], [0], [1], [0, 0, 1, 1], [], []>} : vector<16x16xf32>, vector<16x16xf32>, vector<16x16xf32> -> vector<16x16xf32>
    %175 = arith.addf %170, %174 : vector<16x16xf32>
    %c0_123 = arith.constant 0 : index
    %c0_124 = arith.constant 0 : index
    %176 = vector.load %arg14[%c0_123, %c0_124] : memref<1x16xf32, #tpu.memory_space<vmem>>, vector<1x16xf32>
    %177 = vector.broadcast %176 : vector<1x16xf32> to vector<16x16xf32>
    %178 = arith.addf %175, %177 : vector<16x16xf32>
    %179 = arith.addf %126, %178 : vector<16x16xf32>
    %cst_125 = arith.constant 0.000000e+00 : f32
    %180 = vector.broadcast %cst_125 : f32 to vector<16x16xf32>
    %181 = arith.cmpf ogt, %73, %180 : vector<16x16xf32>
    %cst_126 = arith.constant 1.000000e-01 : f32
    %182 = vector.broadcast %cst_126 : f32 to vector<16x16xf32>
    %183 = arith.mulf %182, %73 : vector<16x16xf32>
    %184 = arith.select %181, %73, %183 : vector<16x16xi1>, vector<16x16xf32>
    %cst_127 = arith.constant 0.000000e+00 : f32
    %185 = vector.broadcast %cst_127 : f32 to vector<8x16xf32>
    %186 = tpu.concatenate %185, %184, %185 in 0 : vector<8x16xf32>, vector<16x16xf32>, vector<8x16xf32> -> vector<32x16xf32>
    %cst_128 = arith.constant 0.000000e+00 : f32
    %187 = vector.broadcast %cst_128 : f32 to vector<16x16xf32>
    %188 = vector.extract_strided_slice %186 {offsets = [6, 0], sizes = [16, 16], strides = [1, 1]} : vector<32x16xf32> to vector<16x16xf32>
    %c0_129 = arith.constant 0 : index
    %c0_130 = arith.constant 0 : index
    %c0_131 = arith.constant 0 : index
    %189 = vector.load %arg15[%c0_129, %c0_130, %c0_131] : memref<5x16x16xf32, #tpu.memory_space<vmem>>, vector<1x16x16xf32>
    %190 = vector.shape_cast %189 : vector<1x16x16xf32> to vector<16x16xf32>
    %cst_132 = arith.constant dense<0.000000e+00> : vector<16x16xf32>
    %191 = tpu.matmul %188, %190, %cst_132 {dimension_numbers = #tpu.dot_dimension_numbers<[1], [0], [0], [1], [0, 0, 1, 1], [], []>} : vector<16x16xf32>, vector<16x16xf32>, vector<16x16xf32> -> vector<16x16xf32>
    %192 = arith.addf %187, %191 : vector<16x16xf32>
    %193 = vector.extract_strided_slice %186 {offsets = [7, 0], sizes = [16, 16], strides = [1, 1]} : vector<32x16xf32> to vector<16x16xf32>
    %c1_133 = arith.constant 1 : index
    %c0_134 = arith.constant 0 : index
    %c0_135 = arith.constant 0 : index
    %194 = vector.load %arg15[%c1_133, %c0_134, %c0_135] : memref<5x16x16xf32, #tpu.memory_space<vmem>>, vector<1x16x16xf32>
    %195 = vector.shape_cast %194 : vector<1x16x16xf32> to vector<16x16xf32>
    %cst_136 = arith.constant dense<0.000000e+00> : vector<16x16xf32>
    %196 = tpu.matmul %193, %195, %cst_136 {dimension_numbers = #tpu.dot_dimension_numbers<[1], [0], [0], [1], [0, 0, 1, 1], [], []>} : vector<16x16xf32>, vector<16x16xf32>, vector<16x16xf32> -> vector<16x16xf32>
    %197 = arith.addf %192, %196 : vector<16x16xf32>
    %198 = vector.extract_strided_slice %186 {offsets = [8, 0], sizes = [16, 16], strides = [1, 1]} : vector<32x16xf32> to vector<16x16xf32>
    %c2_137 = arith.constant 2 : index
    %c0_138 = arith.constant 0 : index
    %c0_139 = arith.constant 0 : index
    %199 = vector.load %arg15[%c2_137, %c0_138, %c0_139] : memref<5x16x16xf32, #tpu.memory_space<vmem>>, vector<1x16x16xf32>
    %200 = vector.shape_cast %199 : vector<1x16x16xf32> to vector<16x16xf32>
    %cst_140 = arith.constant dense<0.000000e+00> : vector<16x16xf32>
    %201 = tpu.matmul %198, %200, %cst_140 {dimension_numbers = #tpu.dot_dimension_numbers<[1], [0], [0], [1], [0, 0, 1, 1], [], []>} : vector<16x16xf32>, vector<16x16xf32>, vector<16x16xf32> -> vector<16x16xf32>
    %202 = arith.addf %197, %201 : vector<16x16xf32>
    %203 = vector.extract_strided_slice %186 {offsets = [9, 0], sizes = [16, 16], strides = [1, 1]} : vector<32x16xf32> to vector<16x16xf32>
    %c3_141 = arith.constant 3 : index
    %c0_142 = arith.constant 0 : index
    %c0_143 = arith.constant 0 : index
    %204 = vector.load %arg15[%c3_141, %c0_142, %c0_143] : memref<5x16x16xf32, #tpu.memory_space<vmem>>, vector<1x16x16xf32>
    %205 = vector.shape_cast %204 : vector<1x16x16xf32> to vector<16x16xf32>
    %cst_144 = arith.constant dense<0.000000e+00> : vector<16x16xf32>
    %206 = tpu.matmul %203, %205, %cst_144 {dimension_numbers = #tpu.dot_dimension_numbers<[1], [0], [0], [1], [0, 0, 1, 1], [], []>} : vector<16x16xf32>, vector<16x16xf32>, vector<16x16xf32> -> vector<16x16xf32>
    %207 = arith.addf %202, %206 : vector<16x16xf32>
    %208 = vector.extract_strided_slice %186 {offsets = [10, 0], sizes = [16, 16], strides = [1, 1]} : vector<32x16xf32> to vector<16x16xf32>
    %c4_145 = arith.constant 4 : index
    %c0_146 = arith.constant 0 : index
    %c0_147 = arith.constant 0 : index
    %209 = vector.load %arg15[%c4_145, %c0_146, %c0_147] : memref<5x16x16xf32, #tpu.memory_space<vmem>>, vector<1x16x16xf32>
    %210 = vector.shape_cast %209 : vector<1x16x16xf32> to vector<16x16xf32>
    %cst_148 = arith.constant dense<0.000000e+00> : vector<16x16xf32>
    %211 = tpu.matmul %208, %210, %cst_148 {dimension_numbers = #tpu.dot_dimension_numbers<[1], [0], [0], [1], [0, 0, 1, 1], [], []>} : vector<16x16xf32>, vector<16x16xf32>, vector<16x16xf32> -> vector<16x16xf32>
    %212 = arith.addf %207, %211 : vector<16x16xf32>
    %c0_149 = arith.constant 0 : index
    %c0_150 = arith.constant 0 : index
    %213 = vector.load %arg16[%c0_149, %c0_150] : memref<1x16xf32, #tpu.memory_space<vmem>>, vector<1x16xf32>
    %214 = vector.broadcast %213 : vector<1x16xf32> to vector<16x16xf32>
    %215 = arith.addf %212, %214 : vector<16x16xf32>
    %cst_151 = arith.constant 0.000000e+00 : f32
    %216 = vector.broadcast %cst_151 : f32 to vector<16x16xf32>
    %217 = arith.cmpf ogt, %215, %216 : vector<16x16xf32>
    %cst_152 = arith.constant 1.000000e-01 : f32
    %218 = vector.broadcast %cst_152 : f32 to vector<16x16xf32>
    %219 = arith.mulf %218, %215 : vector<16x16xf32>
    %220 = arith.select %217, %215, %219 : vector<16x16xi1>, vector<16x16xf32>
    %cst_153 = arith.constant 0.000000e+00 : f32
    %221 = vector.broadcast %cst_153 : f32 to vector<8x16xf32>
    %222 = tpu.concatenate %221, %220, %221 in 0 : vector<8x16xf32>, vector<16x16xf32>, vector<8x16xf32> -> vector<32x16xf32>
    %cst_154 = arith.constant 0.000000e+00 : f32
    %223 = vector.broadcast %cst_154 : f32 to vector<16x16xf32>
    %224 = vector.extract_strided_slice %222 {offsets = [6, 0], sizes = [16, 16], strides = [1, 1]} : vector<32x16xf32> to vector<16x16xf32>
    %c0_155 = arith.constant 0 : index
    %c0_156 = arith.constant 0 : index
    %c0_157 = arith.constant 0 : index
    %225 = vector.load %arg19[%c0_155, %c0_156, %c0_157] : memref<5x16x16xf32, #tpu.memory_space<vmem>>, vector<1x16x16xf32>
    %226 = vector.shape_cast %225 : vector<1x16x16xf32> to vector<16x16xf32>
    %cst_158 = arith.constant dense<0.000000e+00> : vector<16x16xf32>
    %227 = tpu.matmul %224, %226, %cst_158 {dimension_numbers = #tpu.dot_dimension_numbers<[1], [0], [0], [1], [0, 0, 1, 1], [], []>} : vector<16x16xf32>, vector<16x16xf32>, vector<16x16xf32> -> vector<16x16xf32>
    %228 = arith.addf %223, %227 : vector<16x16xf32>
    %229 = vector.extract_strided_slice %222 {offsets = [7, 0], sizes = [16, 16], strides = [1, 1]} : vector<32x16xf32> to vector<16x16xf32>
    %c1_159 = arith.constant 1 : index
    %c0_160 = arith.constant 0 : index
    %c0_161 = arith.constant 0 : index
    %230 = vector.load %arg19[%c1_159, %c0_160, %c0_161] : memref<5x16x16xf32, #tpu.memory_space<vmem>>, vector<1x16x16xf32>
    %231 = vector.shape_cast %230 : vector<1x16x16xf32> to vector<16x16xf32>
    %cst_162 = arith.constant dense<0.000000e+00> : vector<16x16xf32>
    %232 = tpu.matmul %229, %231, %cst_162 {dimension_numbers = #tpu.dot_dimension_numbers<[1], [0], [0], [1], [0, 0, 1, 1], [], []>} : vector<16x16xf32>, vector<16x16xf32>, vector<16x16xf32> -> vector<16x16xf32>
    %233 = arith.addf %228, %232 : vector<16x16xf32>
    %234 = vector.extract_strided_slice %222 {offsets = [8, 0], sizes = [16, 16], strides = [1, 1]} : vector<32x16xf32> to vector<16x16xf32>
    %c2_163 = arith.constant 2 : index
    %c0_164 = arith.constant 0 : index
    %c0_165 = arith.constant 0 : index
    %235 = vector.load %arg19[%c2_163, %c0_164, %c0_165] : memref<5x16x16xf32, #tpu.memory_space<vmem>>, vector<1x16x16xf32>
    %236 = vector.shape_cast %235 : vector<1x16x16xf32> to vector<16x16xf32>
    %cst_166 = arith.constant dense<0.000000e+00> : vector<16x16xf32>
    %237 = tpu.matmul %234, %236, %cst_166 {dimension_numbers = #tpu.dot_dimension_numbers<[1], [0], [0], [1], [0, 0, 1, 1], [], []>} : vector<16x16xf32>, vector<16x16xf32>, vector<16x16xf32> -> vector<16x16xf32>
    %238 = arith.addf %233, %237 : vector<16x16xf32>
    %239 = vector.extract_strided_slice %222 {offsets = [9, 0], sizes = [16, 16], strides = [1, 1]} : vector<32x16xf32> to vector<16x16xf32>
    %c3_167 = arith.constant 3 : index
    %c0_168 = arith.constant 0 : index
    %c0_169 = arith.constant 0 : index
    %240 = vector.load %arg19[%c3_167, %c0_168, %c0_169] : memref<5x16x16xf32, #tpu.memory_space<vmem>>, vector<1x16x16xf32>
    %241 = vector.shape_cast %240 : vector<1x16x16xf32> to vector<16x16xf32>
    %cst_170 = arith.constant dense<0.000000e+00> : vector<16x16xf32>
    %242 = tpu.matmul %239, %241, %cst_170 {dimension_numbers = #tpu.dot_dimension_numbers<[1], [0], [0], [1], [0, 0, 1, 1], [], []>} : vector<16x16xf32>, vector<16x16xf32>, vector<16x16xf32> -> vector<16x16xf32>
    %243 = arith.addf %238, %242 : vector<16x16xf32>
    %244 = vector.extract_strided_slice %222 {offsets = [10, 0], sizes = [16, 16], strides = [1, 1]} : vector<32x16xf32> to vector<16x16xf32>
    %c4_171 = arith.constant 4 : index
    %c0_172 = arith.constant 0 : index
    %c0_173 = arith.constant 0 : index
    %245 = vector.load %arg19[%c4_171, %c0_172, %c0_173] : memref<5x16x16xf32, #tpu.memory_space<vmem>>, vector<1x16x16xf32>
    %246 = vector.shape_cast %245 : vector<1x16x16xf32> to vector<16x16xf32>
    %cst_174 = arith.constant dense<0.000000e+00> : vector<16x16xf32>
    %247 = tpu.matmul %244, %246, %cst_174 {dimension_numbers = #tpu.dot_dimension_numbers<[1], [0], [0], [1], [0, 0, 1, 1], [], []>} : vector<16x16xf32>, vector<16x16xf32>, vector<16x16xf32> -> vector<16x16xf32>
    %248 = arith.addf %243, %247 : vector<16x16xf32>
    %c0_175 = arith.constant 0 : index
    %c0_176 = arith.constant 0 : index
    %249 = vector.load %arg20[%c0_175, %c0_176] : memref<1x16xf32, #tpu.memory_space<vmem>>, vector<1x16xf32>
    %250 = vector.broadcast %249 : vector<1x16xf32> to vector<16x16xf32>
    %251 = arith.addf %248, %250 : vector<16x16xf32>
    %252 = arith.addf %73, %251 : vector<16x16xf32>
    %cst_177 = arith.constant 0.000000e+00 : f32
    %253 = vector.broadcast %cst_177 : f32 to vector<16x16xf32>
    %254 = arith.cmpf ogt, %252, %253 : vector<16x16xf32>
    %cst_178 = arith.constant 1.000000e-01 : f32
    %255 = vector.broadcast %cst_178 : f32 to vector<16x16xf32>
    %256 = arith.mulf %255, %252 : vector<16x16xf32>
    %257 = arith.select %254, %252, %256 : vector<16x16xi1>, vector<16x16xf32>
    %cst_179 = arith.constant 0.000000e+00 : f32
    %258 = vector.broadcast %cst_179 : f32 to vector<8x16xf32>
    %259 = tpu.concatenate %258, %257, %258 in 0 : vector<8x16xf32>, vector<16x16xf32>, vector<8x16xf32> -> vector<32x16xf32>
    %cst_180 = arith.constant 0.000000e+00 : f32
    %260 = vector.broadcast %cst_180 : f32 to vector<16x16xf32>
    %261 = vector.extract_strided_slice %259 {offsets = [2, 0], sizes = [16, 16], strides = [1, 1]} : vector<32x16xf32> to vector<16x16xf32>
    %c0_181 = arith.constant 0 : index
    %c0_182 = arith.constant 0 : index
    %c0_183 = arith.constant 0 : index
    %262 = vector.load %arg17[%c0_181, %c0_182, %c0_183] : memref<5x16x16xf32, #tpu.memory_space<vmem>>, vector<1x16x16xf32>
    %263 = vector.shape_cast %262 : vector<1x16x16xf32> to vector<16x16xf32>
    %cst_184 = arith.constant dense<0.000000e+00> : vector<16x16xf32>
    %264 = tpu.matmul %261, %263, %cst_184 {dimension_numbers = #tpu.dot_dimension_numbers<[1], [0], [0], [1], [0, 0, 1, 1], [], []>} : vector<16x16xf32>, vector<16x16xf32>, vector<16x16xf32> -> vector<16x16xf32>
    %265 = arith.addf %260, %264 : vector<16x16xf32>
    %266 = vector.extract_strided_slice %259 {offsets = [5, 0], sizes = [16, 16], strides = [1, 1]} : vector<32x16xf32> to vector<16x16xf32>
    %c1_185 = arith.constant 1 : index
    %c0_186 = arith.constant 0 : index
    %c0_187 = arith.constant 0 : index
    %267 = vector.load %arg17[%c1_185, %c0_186, %c0_187] : memref<5x16x16xf32, #tpu.memory_space<vmem>>, vector<1x16x16xf32>
    %268 = vector.shape_cast %267 : vector<1x16x16xf32> to vector<16x16xf32>
    %cst_188 = arith.constant dense<0.000000e+00> : vector<16x16xf32>
    %269 = tpu.matmul %266, %268, %cst_188 {dimension_numbers = #tpu.dot_dimension_numbers<[1], [0], [0], [1], [0, 0, 1, 1], [], []>} : vector<16x16xf32>, vector<16x16xf32>, vector<16x16xf32> -> vector<16x16xf32>
    %270 = arith.addf %265, %269 : vector<16x16xf32>
    %271 = vector.extract_strided_slice %259 {offsets = [8, 0], sizes = [16, 16], strides = [1, 1]} : vector<32x16xf32> to vector<16x16xf32>
    %c2_189 = arith.constant 2 : index
    %c0_190 = arith.constant 0 : index
    %c0_191 = arith.constant 0 : index
    %272 = vector.load %arg17[%c2_189, %c0_190, %c0_191] : memref<5x16x16xf32, #tpu.memory_space<vmem>>, vector<1x16x16xf32>
    %273 = vector.shape_cast %272 : vector<1x16x16xf32> to vector<16x16xf32>
    %cst_192 = arith.constant dense<0.000000e+00> : vector<16x16xf32>
    %274 = tpu.matmul %271, %273, %cst_192 {dimension_numbers = #tpu.dot_dimension_numbers<[1], [0], [0], [1], [0, 0, 1, 1], [], []>} : vector<16x16xf32>, vector<16x16xf32>, vector<16x16xf32> -> vector<16x16xf32>
    %275 = arith.addf %270, %274 : vector<16x16xf32>
    %276 = vector.extract_strided_slice %259 {offsets = [11, 0], sizes = [16, 16], strides = [1, 1]} : vector<32x16xf32> to vector<16x16xf32>
    %c3_193 = arith.constant 3 : index
    %c0_194 = arith.constant 0 : index
    %c0_195 = arith.constant 0 : index
    %277 = vector.load %arg17[%c3_193, %c0_194, %c0_195] : memref<5x16x16xf32, #tpu.memory_space<vmem>>, vector<1x16x16xf32>
    %278 = vector.shape_cast %277 : vector<1x16x16xf32> to vector<16x16xf32>
    %cst_196 = arith.constant dense<0.000000e+00> : vector<16x16xf32>
    %279 = tpu.matmul %276, %278, %cst_196 {dimension_numbers = #tpu.dot_dimension_numbers<[1], [0], [0], [1], [0, 0, 1, 1], [], []>} : vector<16x16xf32>, vector<16x16xf32>, vector<16x16xf32> -> vector<16x16xf32>
    %280 = arith.addf %275, %279 : vector<16x16xf32>
    %281 = vector.extract_strided_slice %259 {offsets = [14, 0], sizes = [16, 16], strides = [1, 1]} : vector<32x16xf32> to vector<16x16xf32>
    %c4_197 = arith.constant 4 : index
    %c0_198 = arith.constant 0 : index
    %c0_199 = arith.constant 0 : index
    %282 = vector.load %arg17[%c4_197, %c0_198, %c0_199] : memref<5x16x16xf32, #tpu.memory_space<vmem>>, vector<1x16x16xf32>
    %283 = vector.shape_cast %282 : vector<1x16x16xf32> to vector<16x16xf32>
    %cst_200 = arith.constant dense<0.000000e+00> : vector<16x16xf32>
    %284 = tpu.matmul %281, %283, %cst_200 {dimension_numbers = #tpu.dot_dimension_numbers<[1], [0], [0], [1], [0, 0, 1, 1], [], []>} : vector<16x16xf32>, vector<16x16xf32>, vector<16x16xf32> -> vector<16x16xf32>
    %285 = arith.addf %280, %284 : vector<16x16xf32>
    %c0_201 = arith.constant 0 : index
    %c0_202 = arith.constant 0 : index
    %286 = vector.load %arg18[%c0_201, %c0_202] : memref<1x16xf32, #tpu.memory_space<vmem>>, vector<1x16xf32>
    %287 = vector.broadcast %286 : vector<1x16xf32> to vector<16x16xf32>
    %288 = arith.addf %285, %287 : vector<16x16xf32>
    %cst_203 = arith.constant 0.000000e+00 : f32
    %289 = vector.broadcast %cst_203 : f32 to vector<16x16xf32>
    %290 = arith.cmpf ogt, %288, %289 : vector<16x16xf32>
    %cst_204 = arith.constant 1.000000e-01 : f32
    %291 = vector.broadcast %cst_204 : f32 to vector<16x16xf32>
    %292 = arith.mulf %291, %288 : vector<16x16xf32>
    %293 = arith.select %290, %288, %292 : vector<16x16xi1>, vector<16x16xf32>
    %cst_205 = arith.constant 0.000000e+00 : f32
    %294 = vector.broadcast %cst_205 : f32 to vector<8x16xf32>
    %295 = tpu.concatenate %294, %293, %294 in 0 : vector<8x16xf32>, vector<16x16xf32>, vector<8x16xf32> -> vector<32x16xf32>
    %cst_206 = arith.constant 0.000000e+00 : f32
    %296 = vector.broadcast %cst_206 : f32 to vector<16x16xf32>
    %297 = vector.extract_strided_slice %295 {offsets = [6, 0], sizes = [16, 16], strides = [1, 1]} : vector<32x16xf32> to vector<16x16xf32>
    %c0_207 = arith.constant 0 : index
    %c0_208 = arith.constant 0 : index
    %c0_209 = arith.constant 0 : index
    %298 = vector.load %arg21[%c0_207, %c0_208, %c0_209] : memref<5x16x16xf32, #tpu.memory_space<vmem>>, vector<1x16x16xf32>
    %299 = vector.shape_cast %298 : vector<1x16x16xf32> to vector<16x16xf32>
    %cst_210 = arith.constant dense<0.000000e+00> : vector<16x16xf32>
    %300 = tpu.matmul %297, %299, %cst_210 {dimension_numbers = #tpu.dot_dimension_numbers<[1], [0], [0], [1], [0, 0, 1, 1], [], []>} : vector<16x16xf32>, vector<16x16xf32>, vector<16x16xf32> -> vector<16x16xf32>
    %301 = arith.addf %296, %300 : vector<16x16xf32>
    %302 = vector.extract_strided_slice %295 {offsets = [7, 0], sizes = [16, 16], strides = [1, 1]} : vector<32x16xf32> to vector<16x16xf32>
    %c1_211 = arith.constant 1 : index
    %c0_212 = arith.constant 0 : index
    %c0_213 = arith.constant 0 : index
    %303 = vector.load %arg21[%c1_211, %c0_212, %c0_213] : memref<5x16x16xf32, #tpu.memory_space<vmem>>, vector<1x16x16xf32>
    %304 = vector.shape_cast %303 : vector<1x16x16xf32> to vector<16x16xf32>
    %cst_214 = arith.constant dense<0.000000e+00> : vector<16x16xf32>
    %305 = tpu.matmul %302, %304, %cst_214 {dimension_numbers = #tpu.dot_dimension_numbers<[1], [0], [0], [1], [0, 0, 1, 1], [], []>} : vector<16x16xf32>, vector<16x16xf32>, vector<16x16xf32> -> vector<16x16xf32>
    %306 = arith.addf %301, %305 : vector<16x16xf32>
    %307 = vector.extract_strided_slice %295 {offsets = [8, 0], sizes = [16, 16], strides = [1, 1]} : vector<32x16xf32> to vector<16x16xf32>
    %c2_215 = arith.constant 2 : index
    %c0_216 = arith.constant 0 : index
    %c0_217 = arith.constant 0 : index
    %308 = vector.load %arg21[%c2_215, %c0_216, %c0_217] : memref<5x16x16xf32, #tpu.memory_space<vmem>>, vector<1x16x16xf32>
    %309 = vector.shape_cast %308 : vector<1x16x16xf32> to vector<16x16xf32>
    %cst_218 = arith.constant dense<0.000000e+00> : vector<16x16xf32>
    %310 = tpu.matmul %307, %309, %cst_218 {dimension_numbers = #tpu.dot_dimension_numbers<[1], [0], [0], [1], [0, 0, 1, 1], [], []>} : vector<16x16xf32>, vector<16x16xf32>, vector<16x16xf32> -> vector<16x16xf32>
    %311 = arith.addf %306, %310 : vector<16x16xf32>
    %312 = vector.extract_strided_slice %295 {offsets = [9, 0], sizes = [16, 16], strides = [1, 1]} : vector<32x16xf32> to vector<16x16xf32>
    %c3_219 = arith.constant 3 : index
    %c0_220 = arith.constant 0 : index
    %c0_221 = arith.constant 0 : index
    %313 = vector.load %arg21[%c3_219, %c0_220, %c0_221] : memref<5x16x16xf32, #tpu.memory_space<vmem>>, vector<1x16x16xf32>
    %314 = vector.shape_cast %313 : vector<1x16x16xf32> to vector<16x16xf32>
    %cst_222 = arith.constant dense<0.000000e+00> : vector<16x16xf32>
    %315 = tpu.matmul %312, %314, %cst_222 {dimension_numbers = #tpu.dot_dimension_numbers<[1], [0], [0], [1], [0, 0, 1, 1], [], []>} : vector<16x16xf32>, vector<16x16xf32>, vector<16x16xf32> -> vector<16x16xf32>
    %316 = arith.addf %311, %315 : vector<16x16xf32>
    %317 = vector.extract_strided_slice %295 {offsets = [10, 0], sizes = [16, 16], strides = [1, 1]} : vector<32x16xf32> to vector<16x16xf32>
    %c4_223 = arith.constant 4 : index
    %c0_224 = arith.constant 0 : index
    %c0_225 = arith.constant 0 : index
    %318 = vector.load %arg21[%c4_223, %c0_224, %c0_225] : memref<5x16x16xf32, #tpu.memory_space<vmem>>, vector<1x16x16xf32>
    %319 = vector.shape_cast %318 : vector<1x16x16xf32> to vector<16x16xf32>
    %cst_226 = arith.constant dense<0.000000e+00> : vector<16x16xf32>
    %320 = tpu.matmul %317, %319, %cst_226 {dimension_numbers = #tpu.dot_dimension_numbers<[1], [0], [0], [1], [0, 0, 1, 1], [], []>} : vector<16x16xf32>, vector<16x16xf32>, vector<16x16xf32> -> vector<16x16xf32>
    %321 = arith.addf %316, %320 : vector<16x16xf32>
    %c0_227 = arith.constant 0 : index
    %c0_228 = arith.constant 0 : index
    %322 = vector.load %arg22[%c0_227, %c0_228] : memref<1x16xf32, #tpu.memory_space<vmem>>, vector<1x16xf32>
    %323 = vector.broadcast %322 : vector<1x16xf32> to vector<16x16xf32>
    %324 = arith.addf %321, %323 : vector<16x16xf32>
    %325 = arith.addf %252, %324 : vector<16x16xf32>
    %326 = arith.addf %179, %325 : vector<16x16xf32>
    %cst_229 = arith.constant 5.000000e-01 : f32
    %327 = vector.broadcast %cst_229 : f32 to vector<16x16xf32>
    %328 = arith.mulf %326, %327 : vector<16x16xf32>
    %cst_230 = arith.constant 0.000000e+00 : f32
    %329 = vector.broadcast %cst_230 : f32 to vector<16x16xf32>
    %330 = arith.cmpf ogt, %328, %329 : vector<16x16xf32>
    %cst_231 = arith.constant 1.000000e-01 : f32
    %331 = vector.broadcast %cst_231 : f32 to vector<16x16xf32>
    %332 = arith.mulf %331, %328 : vector<16x16xf32>
    %333 = arith.select %330, %328, %332 : vector<16x16xi1>, vector<16x16xf32>
    %cst_232 = arith.constant 0.000000e+00 : f32
    %334 = vector.broadcast %cst_232 : f32 to vector<8x16xf32>
    %335 = tpu.concatenate %334, %333, %334 in 0 : vector<8x16xf32>, vector<16x16xf32>, vector<8x16xf32> -> vector<32x16xf32>
    %336 = vector.extract_strided_slice %335 {offsets = [7, 0], sizes = [16, 16], strides = [1, 1]} : vector<32x16xf32> to vector<16x16xf32>
    %337 = vector.extract_strided_slice %335 {offsets = [8, 0], sizes = [16, 16], strides = [1, 1]} : vector<32x16xf32> to vector<16x16xf32>
    %338 = vector.extract_strided_slice %335 {offsets = [9, 0], sizes = [16, 16], strides = [1, 1]} : vector<32x16xf32> to vector<16x16xf32>
    %c1_233 = arith.constant 1 : index
    %c0_234 = arith.constant 0 : index
    %c0_235 = arith.constant 0 : index
    %339 = vector.load %arg23[%c1_233, %c0_234, %c0_235] : memref<4x16x8xf32, #tpu.memory_space<vmem>>, vector<1x16x8xf32>
    %340 = vector.shape_cast %339 : vector<1x16x8xf32> to vector<16x8xf32>
    %cst_236 = arith.constant dense<0.000000e+00> : vector<16x8xf32>
    %341 = tpu.matmul %337, %340, %cst_236 {dimension_numbers = #tpu.dot_dimension_numbers<[1], [0], [0], [1], [0, 0, 1, 1], [], []>} : vector<16x16xf32>, vector<16x8xf32>, vector<16x8xf32> -> vector<16x8xf32>
    %c3_237 = arith.constant 3 : index
    %c0_238 = arith.constant 0 : index
    %c0_239 = arith.constant 0 : index
    %342 = vector.load %arg23[%c3_237, %c0_238, %c0_239] : memref<4x16x8xf32, #tpu.memory_space<vmem>>, vector<1x16x8xf32>
    %343 = vector.shape_cast %342 : vector<1x16x8xf32> to vector<16x8xf32>
    %cst_240 = arith.constant dense<0.000000e+00> : vector<16x8xf32>
    %344 = tpu.matmul %336, %343, %cst_240 {dimension_numbers = #tpu.dot_dimension_numbers<[1], [0], [0], [1], [0, 0, 1, 1], [], []>} : vector<16x16xf32>, vector<16x8xf32>, vector<16x8xf32> -> vector<16x8xf32>
    %345 = arith.addf %341, %344 : vector<16x8xf32>
    %c0_241 = arith.constant 0 : index
    %c0_242 = arith.constant 0 : index
    %c0_243 = arith.constant 0 : index
    %346 = vector.load %arg23[%c0_241, %c0_242, %c0_243] : memref<4x16x8xf32, #tpu.memory_space<vmem>>, vector<1x16x8xf32>
    %347 = vector.shape_cast %346 : vector<1x16x8xf32> to vector<16x8xf32>
    %cst_244 = arith.constant dense<0.000000e+00> : vector<16x8xf32>
    %348 = tpu.matmul %338, %347, %cst_244 {dimension_numbers = #tpu.dot_dimension_numbers<[1], [0], [0], [1], [0, 0, 1, 1], [], []>} : vector<16x16xf32>, vector<16x8xf32>, vector<16x8xf32> -> vector<16x8xf32>
    %c2_245 = arith.constant 2 : index
    %c0_246 = arith.constant 0 : index
    %c0_247 = arith.constant 0 : index
    %349 = vector.load %arg23[%c2_245, %c0_246, %c0_247] : memref<4x16x8xf32, #tpu.memory_space<vmem>>, vector<1x16x8xf32>
    %350 = vector.shape_cast %349 : vector<1x16x8xf32> to vector<16x8xf32>
    %cst_248 = arith.constant dense<0.000000e+00> : vector<16x8xf32>
    %351 = tpu.matmul %337, %350, %cst_248 {dimension_numbers = #tpu.dot_dimension_numbers<[1], [0], [0], [1], [0, 0, 1, 1], [], []>} : vector<16x16xf32>, vector<16x8xf32>, vector<16x8xf32> -> vector<16x8xf32>
    %352 = arith.addf %348, %351 : vector<16x8xf32>
    %c0_249 = arith.constant 0 : index
    %c0_250 = arith.constant 0 : index
    %353 = vector.load %arg25[%c0_249, %c0_250] : memref<32x16xf32, #tpu.memory_space<vmem>>, vector<32x16xf32>
    %cst_251 = arith.constant dense<0.000000e+00> : vector<32x8xf32>
    %354 = tpu.matmul %353, %345, %cst_251 {dimension_numbers = #tpu.dot_dimension_numbers<[1], [0], [0], [1], [0, 0, 1, 1], [], []>} : vector<32x16xf32>, vector<16x8xf32>, vector<32x8xf32> -> vector<32x8xf32>
    %c0_252 = arith.constant 0 : index
    %c0_253 = arith.constant 0 : index
    %355 = vector.load %arg26[%c0_252, %c0_253] : memref<32x16xf32, #tpu.memory_space<vmem>>, vector<32x16xf32>
    %cst_254 = arith.constant dense<0.000000e+00> : vector<32x8xf32>
    %356 = tpu.matmul %355, %352, %cst_254 {dimension_numbers = #tpu.dot_dimension_numbers<[1], [0], [0], [1], [0, 0, 1, 1], [], []>} : vector<32x16xf32>, vector<16x8xf32>, vector<32x8xf32> -> vector<32x8xf32>
    %357 = arith.addf %354, %356 : vector<32x8xf32>
    %c0_255 = arith.constant 0 : index
    %c0_256 = arith.constant 0 : index
    %358 = vector.load %arg24[%c0_255, %c0_256] : memref<1x8xf32, #tpu.memory_space<vmem>>, vector<1x8xf32>
    %359 = vector.broadcast %358 : vector<1x8xf32> to vector<32x8xf32>
    %360 = arith.addf %357, %359 : vector<32x8xf32>
    %cst_257 = arith.constant 0.000000e+00 : f32
    %361 = vector.broadcast %cst_257 : f32 to vector<32x8xf32>
    %362 = arith.cmpf ogt, %360, %361 : vector<32x8xf32>
    %cst_258 = arith.constant 1.000000e-01 : f32
    %363 = vector.broadcast %cst_258 : f32 to vector<32x8xf32>
    %364 = arith.mulf %363, %360 : vector<32x8xf32>
    %365 = arith.select %362, %360, %364 : vector<32x8xi1>, vector<32x8xf32>
    %cst_259 = arith.constant 0.000000e+00 : f32
    %366 = vector.broadcast %cst_259 : f32 to vector<8x8xf32>
    %367 = tpu.concatenate %366, %365, %366 in 0 : vector<8x8xf32>, vector<32x8xf32>, vector<8x8xf32> -> vector<48x8xf32>
    %cst_260 = arith.constant 0.000000e+00 : f32
    %368 = vector.broadcast %cst_260 : f32 to vector<32x8xf32>
    %369 = vector.extract_strided_slice %367 {offsets = [7, 0], sizes = [32, 8], strides = [1, 1]} : vector<48x8xf32> to vector<32x8xf32>
    %c0_261 = arith.constant 0 : index
    %c0_262 = arith.constant 0 : index
    %c0_263 = arith.constant 0 : index
    %370 = vector.load %arg27[%c0_261, %c0_262, %c0_263] : memref<3x8x8xf32, #tpu.memory_space<vmem>>, vector<1x8x8xf32>
    %371 = vector.shape_cast %370 : vector<1x8x8xf32> to vector<8x8xf32>
    %cst_264 = arith.constant dense<0.000000e+00> : vector<32x8xf32>
    %372 = tpu.matmul %369, %371, %cst_264 {dimension_numbers = #tpu.dot_dimension_numbers<[1], [0], [0], [1], [0, 0, 1, 1], [], []>} : vector<32x8xf32>, vector<8x8xf32>, vector<32x8xf32> -> vector<32x8xf32>
    %373 = arith.addf %368, %372 : vector<32x8xf32>
    %374 = vector.extract_strided_slice %367 {offsets = [8, 0], sizes = [32, 8], strides = [1, 1]} : vector<48x8xf32> to vector<32x8xf32>
    %c1_265 = arith.constant 1 : index
    %c0_266 = arith.constant 0 : index
    %c0_267 = arith.constant 0 : index
    %375 = vector.load %arg27[%c1_265, %c0_266, %c0_267] : memref<3x8x8xf32, #tpu.memory_space<vmem>>, vector<1x8x8xf32>
    %376 = vector.shape_cast %375 : vector<1x8x8xf32> to vector<8x8xf32>
    %cst_268 = arith.constant dense<0.000000e+00> : vector<32x8xf32>
    %377 = tpu.matmul %374, %376, %cst_268 {dimension_numbers = #tpu.dot_dimension_numbers<[1], [0], [0], [1], [0, 0, 1, 1], [], []>} : vector<32x8xf32>, vector<8x8xf32>, vector<32x8xf32> -> vector<32x8xf32>
    %378 = arith.addf %373, %377 : vector<32x8xf32>
    %379 = vector.extract_strided_slice %367 {offsets = [9, 0], sizes = [32, 8], strides = [1, 1]} : vector<48x8xf32> to vector<32x8xf32>
    %c2_269 = arith.constant 2 : index
    %c0_270 = arith.constant 0 : index
    %c0_271 = arith.constant 0 : index
    %380 = vector.load %arg27[%c2_269, %c0_270, %c0_271] : memref<3x8x8xf32, #tpu.memory_space<vmem>>, vector<1x8x8xf32>
    %381 = vector.shape_cast %380 : vector<1x8x8xf32> to vector<8x8xf32>
    %cst_272 = arith.constant dense<0.000000e+00> : vector<32x8xf32>
    %382 = tpu.matmul %379, %381, %cst_272 {dimension_numbers = #tpu.dot_dimension_numbers<[1], [0], [0], [1], [0, 0, 1, 1], [], []>} : vector<32x8xf32>, vector<8x8xf32>, vector<32x8xf32> -> vector<32x8xf32>
    %383 = arith.addf %378, %382 : vector<32x8xf32>
    %c0_273 = arith.constant 0 : index
    %c0_274 = arith.constant 0 : index
    %384 = vector.load %arg28[%c0_273, %c0_274] : memref<1x8xf32, #tpu.memory_space<vmem>>, vector<1x8xf32>
    %385 = vector.broadcast %384 : vector<1x8xf32> to vector<32x8xf32>
    %386 = arith.addf %383, %385 : vector<32x8xf32>
    %cst_275 = arith.constant 0.000000e+00 : f32
    %387 = vector.broadcast %cst_275 : f32 to vector<32x8xf32>
    %388 = arith.cmpf ogt, %386, %387 : vector<32x8xf32>
    %cst_276 = arith.constant 1.000000e-01 : f32
    %389 = vector.broadcast %cst_276 : f32 to vector<32x8xf32>
    %390 = arith.mulf %389, %386 : vector<32x8xf32>
    %391 = arith.select %388, %386, %390 : vector<32x8xi1>, vector<32x8xf32>
    %cst_277 = arith.constant 0.000000e+00 : f32
    %392 = vector.broadcast %cst_277 : f32 to vector<8x8xf32>
    %393 = tpu.concatenate %392, %391, %392 in 0 : vector<8x8xf32>, vector<32x8xf32>, vector<8x8xf32> -> vector<48x8xf32>
    %cst_278 = arith.constant 0.000000e+00 : f32
    %394 = vector.broadcast %cst_278 : f32 to vector<32x8xf32>
    %395 = vector.extract_strided_slice %393 {offsets = [7, 0], sizes = [32, 8], strides = [1, 1]} : vector<48x8xf32> to vector<32x8xf32>
    %c0_279 = arith.constant 0 : index
    %c0_280 = arith.constant 0 : index
    %c0_281 = arith.constant 0 : index
    %396 = vector.load %arg31[%c0_279, %c0_280, %c0_281] : memref<3x8x8xf32, #tpu.memory_space<vmem>>, vector<1x8x8xf32>
    %397 = vector.shape_cast %396 : vector<1x8x8xf32> to vector<8x8xf32>
    %cst_282 = arith.constant dense<0.000000e+00> : vector<32x8xf32>
    %398 = tpu.matmul %395, %397, %cst_282 {dimension_numbers = #tpu.dot_dimension_numbers<[1], [0], [0], [1], [0, 0, 1, 1], [], []>} : vector<32x8xf32>, vector<8x8xf32>, vector<32x8xf32> -> vector<32x8xf32>
    %399 = arith.addf %394, %398 : vector<32x8xf32>
    %400 = vector.extract_strided_slice %393 {offsets = [8, 0], sizes = [32, 8], strides = [1, 1]} : vector<48x8xf32> to vector<32x8xf32>
    %c1_283 = arith.constant 1 : index
    %c0_284 = arith.constant 0 : index
    %c0_285 = arith.constant 0 : index
    %401 = vector.load %arg31[%c1_283, %c0_284, %c0_285] : memref<3x8x8xf32, #tpu.memory_space<vmem>>, vector<1x8x8xf32>
    %402 = vector.shape_cast %401 : vector<1x8x8xf32> to vector<8x8xf32>
    %cst_286 = arith.constant dense<0.000000e+00> : vector<32x8xf32>
    %403 = tpu.matmul %400, %402, %cst_286 {dimension_numbers = #tpu.dot_dimension_numbers<[1], [0], [0], [1], [0, 0, 1, 1], [], []>} : vector<32x8xf32>, vector<8x8xf32>, vector<32x8xf32> -> vector<32x8xf32>
    %404 = arith.addf %399, %403 : vector<32x8xf32>
    %405 = vector.extract_strided_slice %393 {offsets = [9, 0], sizes = [32, 8], strides = [1, 1]} : vector<48x8xf32> to vector<32x8xf32>
    %c2_287 = arith.constant 2 : index
    %c0_288 = arith.constant 0 : index
    %c0_289 = arith.constant 0 : index
    %406 = vector.load %arg31[%c2_287, %c0_288, %c0_289] : memref<3x8x8xf32, #tpu.memory_space<vmem>>, vector<1x8x8xf32>
    %407 = vector.shape_cast %406 : vector<1x8x8xf32> to vector<8x8xf32>
    %cst_290 = arith.constant dense<0.000000e+00> : vector<32x8xf32>
    %408 = tpu.matmul %405, %407, %cst_290 {dimension_numbers = #tpu.dot_dimension_numbers<[1], [0], [0], [1], [0, 0, 1, 1], [], []>} : vector<32x8xf32>, vector<8x8xf32>, vector<32x8xf32> -> vector<32x8xf32>
    %409 = arith.addf %404, %408 : vector<32x8xf32>
    %c0_291 = arith.constant 0 : index
    %c0_292 = arith.constant 0 : index
    %410 = vector.load %arg32[%c0_291, %c0_292] : memref<1x8xf32, #tpu.memory_space<vmem>>, vector<1x8xf32>
    %411 = vector.broadcast %410 : vector<1x8xf32> to vector<32x8xf32>
    %412 = arith.addf %409, %411 : vector<32x8xf32>
    %413 = arith.addf %360, %412 : vector<32x8xf32>
    %cst_293 = arith.constant 0.000000e+00 : f32
    %414 = vector.broadcast %cst_293 : f32 to vector<32x8xf32>
    %415 = arith.cmpf ogt, %413, %414 : vector<32x8xf32>
    %cst_294 = arith.constant 1.000000e-01 : f32
    %416 = vector.broadcast %cst_294 : f32 to vector<32x8xf32>
    %417 = arith.mulf %416, %413 : vector<32x8xf32>
    %418 = arith.select %415, %413, %417 : vector<32x8xi1>, vector<32x8xf32>
    %cst_295 = arith.constant 0.000000e+00 : f32
    %419 = vector.broadcast %cst_295 : f32 to vector<8x8xf32>
    %420 = tpu.concatenate %419, %418, %419 in 0 : vector<8x8xf32>, vector<32x8xf32>, vector<8x8xf32> -> vector<48x8xf32>
    %cst_296 = arith.constant 0.000000e+00 : f32
    %421 = vector.broadcast %cst_296 : f32 to vector<32x8xf32>
    %422 = vector.extract_strided_slice %420 {offsets = [5, 0], sizes = [32, 8], strides = [1, 1]} : vector<48x8xf32> to vector<32x8xf32>
    %c0_297 = arith.constant 0 : index
    %c0_298 = arith.constant 0 : index
    %c0_299 = arith.constant 0 : index
    %423 = vector.load %arg29[%c0_297, %c0_298, %c0_299] : memref<3x8x8xf32, #tpu.memory_space<vmem>>, vector<1x8x8xf32>
    %424 = vector.shape_cast %423 : vector<1x8x8xf32> to vector<8x8xf32>
    %cst_300 = arith.constant dense<0.000000e+00> : vector<32x8xf32>
    %425 = tpu.matmul %422, %424, %cst_300 {dimension_numbers = #tpu.dot_dimension_numbers<[1], [0], [0], [1], [0, 0, 1, 1], [], []>} : vector<32x8xf32>, vector<8x8xf32>, vector<32x8xf32> -> vector<32x8xf32>
    %426 = arith.addf %421, %425 : vector<32x8xf32>
    %427 = vector.extract_strided_slice %420 {offsets = [8, 0], sizes = [32, 8], strides = [1, 1]} : vector<48x8xf32> to vector<32x8xf32>
    %c1_301 = arith.constant 1 : index
    %c0_302 = arith.constant 0 : index
    %c0_303 = arith.constant 0 : index
    %428 = vector.load %arg29[%c1_301, %c0_302, %c0_303] : memref<3x8x8xf32, #tpu.memory_space<vmem>>, vector<1x8x8xf32>
    %429 = vector.shape_cast %428 : vector<1x8x8xf32> to vector<8x8xf32>
    %cst_304 = arith.constant dense<0.000000e+00> : vector<32x8xf32>
    %430 = tpu.matmul %427, %429, %cst_304 {dimension_numbers = #tpu.dot_dimension_numbers<[1], [0], [0], [1], [0, 0, 1, 1], [], []>} : vector<32x8xf32>, vector<8x8xf32>, vector<32x8xf32> -> vector<32x8xf32>
    %431 = arith.addf %426, %430 : vector<32x8xf32>
    %432 = vector.extract_strided_slice %420 {offsets = [11, 0], sizes = [32, 8], strides = [1, 1]} : vector<48x8xf32> to vector<32x8xf32>
    %c2_305 = arith.constant 2 : index
    %c0_306 = arith.constant 0 : index
    %c0_307 = arith.constant 0 : index
    %433 = vector.load %arg29[%c2_305, %c0_306, %c0_307] : memref<3x8x8xf32, #tpu.memory_space<vmem>>, vector<1x8x8xf32>
    %434 = vector.shape_cast %433 : vector<1x8x8xf32> to vector<8x8xf32>
    %cst_308 = arith.constant dense<0.000000e+00> : vector<32x8xf32>
    %435 = tpu.matmul %432, %434, %cst_308 {dimension_numbers = #tpu.dot_dimension_numbers<[1], [0], [0], [1], [0, 0, 1, 1], [], []>} : vector<32x8xf32>, vector<8x8xf32>, vector<32x8xf32> -> vector<32x8xf32>
    %436 = arith.addf %431, %435 : vector<32x8xf32>
    %c0_309 = arith.constant 0 : index
    %c0_310 = arith.constant 0 : index
    %437 = vector.load %arg30[%c0_309, %c0_310] : memref<1x8xf32, #tpu.memory_space<vmem>>, vector<1x8xf32>
    %438 = vector.broadcast %437 : vector<1x8xf32> to vector<32x8xf32>
    %439 = arith.addf %436, %438 : vector<32x8xf32>
    %cst_311 = arith.constant 0.000000e+00 : f32
    %440 = vector.broadcast %cst_311 : f32 to vector<32x8xf32>
    %441 = arith.cmpf ogt, %439, %440 : vector<32x8xf32>
    %cst_312 = arith.constant 1.000000e-01 : f32
    %442 = vector.broadcast %cst_312 : f32 to vector<32x8xf32>
    %443 = arith.mulf %442, %439 : vector<32x8xf32>
    %444 = arith.select %441, %439, %443 : vector<32x8xi1>, vector<32x8xf32>
    %cst_313 = arith.constant 0.000000e+00 : f32
    %445 = vector.broadcast %cst_313 : f32 to vector<8x8xf32>
    %446 = tpu.concatenate %445, %444, %445 in 0 : vector<8x8xf32>, vector<32x8xf32>, vector<8x8xf32> -> vector<48x8xf32>
    %cst_314 = arith.constant 0.000000e+00 : f32
    %447 = vector.broadcast %cst_314 : f32 to vector<32x8xf32>
    %448 = vector.extract_strided_slice %446 {offsets = [7, 0], sizes = [32, 8], strides = [1, 1]} : vector<48x8xf32> to vector<32x8xf32>
    %c0_315 = arith.constant 0 : index
    %c0_316 = arith.constant 0 : index
    %c0_317 = arith.constant 0 : index
    %449 = vector.load %arg33[%c0_315, %c0_316, %c0_317] : memref<3x8x8xf32, #tpu.memory_space<vmem>>, vector<1x8x8xf32>
    %450 = vector.shape_cast %449 : vector<1x8x8xf32> to vector<8x8xf32>
    %cst_318 = arith.constant dense<0.000000e+00> : vector<32x8xf32>
    %451 = tpu.matmul %448, %450, %cst_318 {dimension_numbers = #tpu.dot_dimension_numbers<[1], [0], [0], [1], [0, 0, 1, 1], [], []>} : vector<32x8xf32>, vector<8x8xf32>, vector<32x8xf32> -> vector<32x8xf32>
    %452 = arith.addf %447, %451 : vector<32x8xf32>
    %453 = vector.extract_strided_slice %446 {offsets = [8, 0], sizes = [32, 8], strides = [1, 1]} : vector<48x8xf32> to vector<32x8xf32>
    %c1_319 = arith.constant 1 : index
    %c0_320 = arith.constant 0 : index
    %c0_321 = arith.constant 0 : index
    %454 = vector.load %arg33[%c1_319, %c0_320, %c0_321] : memref<3x8x8xf32, #tpu.memory_space<vmem>>, vector<1x8x8xf32>
    %455 = vector.shape_cast %454 : vector<1x8x8xf32> to vector<8x8xf32>
    %cst_322 = arith.constant dense<0.000000e+00> : vector<32x8xf32>
    %456 = tpu.matmul %453, %455, %cst_322 {dimension_numbers = #tpu.dot_dimension_numbers<[1], [0], [0], [1], [0, 0, 1, 1], [], []>} : vector<32x8xf32>, vector<8x8xf32>, vector<32x8xf32> -> vector<32x8xf32>
    %457 = arith.addf %452, %456 : vector<32x8xf32>
    %458 = vector.extract_strided_slice %446 {offsets = [9, 0], sizes = [32, 8], strides = [1, 1]} : vector<48x8xf32> to vector<32x8xf32>
    %c2_323 = arith.constant 2 : index
    %c0_324 = arith.constant 0 : index
    %c0_325 = arith.constant 0 : index
    %459 = vector.load %arg33[%c2_323, %c0_324, %c0_325] : memref<3x8x8xf32, #tpu.memory_space<vmem>>, vector<1x8x8xf32>
    %460 = vector.shape_cast %459 : vector<1x8x8xf32> to vector<8x8xf32>
    %cst_326 = arith.constant dense<0.000000e+00> : vector<32x8xf32>
    %461 = tpu.matmul %458, %460, %cst_326 {dimension_numbers = #tpu.dot_dimension_numbers<[1], [0], [0], [1], [0, 0, 1, 1], [], []>} : vector<32x8xf32>, vector<8x8xf32>, vector<32x8xf32> -> vector<32x8xf32>
    %462 = arith.addf %457, %461 : vector<32x8xf32>
    %c0_327 = arith.constant 0 : index
    %c0_328 = arith.constant 0 : index
    %463 = vector.load %arg34[%c0_327, %c0_328] : memref<1x8xf32, #tpu.memory_space<vmem>>, vector<1x8xf32>
    %464 = vector.broadcast %463 : vector<1x8xf32> to vector<32x8xf32>
    %465 = arith.addf %462, %464 : vector<32x8xf32>
    %466 = arith.addf %413, %465 : vector<32x8xf32>
    %cst_329 = arith.constant 0.000000e+00 : f32
    %467 = vector.broadcast %cst_329 : f32 to vector<32x8xf32>
    %468 = arith.cmpf ogt, %360, %467 : vector<32x8xf32>
    %cst_330 = arith.constant 1.000000e-01 : f32
    %469 = vector.broadcast %cst_330 : f32 to vector<32x8xf32>
    %470 = arith.mulf %469, %360 : vector<32x8xf32>
    %471 = arith.select %468, %360, %470 : vector<32x8xi1>, vector<32x8xf32>
    %cst_331 = arith.constant 0.000000e+00 : f32
    %472 = vector.broadcast %cst_331 : f32 to vector<8x8xf32>
    %473 = tpu.concatenate %472, %471, %472 in 0 : vector<8x8xf32>, vector<32x8xf32>, vector<8x8xf32> -> vector<48x8xf32>
    %cst_332 = arith.constant 0.000000e+00 : f32
    %474 = vector.broadcast %cst_332 : f32 to vector<32x8xf32>
    %475 = vector.extract_strided_slice %473 {offsets = [6, 0], sizes = [32, 8], strides = [1, 1]} : vector<48x8xf32> to vector<32x8xf32>
    %c0_333 = arith.constant 0 : index
    %c0_334 = arith.constant 0 : index
    %c0_335 = arith.constant 0 : index
    %476 = vector.load %arg35[%c0_333, %c0_334, %c0_335] : memref<5x8x8xf32, #tpu.memory_space<vmem>>, vector<1x8x8xf32>
    %477 = vector.shape_cast %476 : vector<1x8x8xf32> to vector<8x8xf32>
    %cst_336 = arith.constant dense<0.000000e+00> : vector<32x8xf32>
    %478 = tpu.matmul %475, %477, %cst_336 {dimension_numbers = #tpu.dot_dimension_numbers<[1], [0], [0], [1], [0, 0, 1, 1], [], []>} : vector<32x8xf32>, vector<8x8xf32>, vector<32x8xf32> -> vector<32x8xf32>
    %479 = arith.addf %474, %478 : vector<32x8xf32>
    %480 = vector.extract_strided_slice %473 {offsets = [7, 0], sizes = [32, 8], strides = [1, 1]} : vector<48x8xf32> to vector<32x8xf32>
    %c1_337 = arith.constant 1 : index
    %c0_338 = arith.constant 0 : index
    %c0_339 = arith.constant 0 : index
    %481 = vector.load %arg35[%c1_337, %c0_338, %c0_339] : memref<5x8x8xf32, #tpu.memory_space<vmem>>, vector<1x8x8xf32>
    %482 = vector.shape_cast %481 : vector<1x8x8xf32> to vector<8x8xf32>
    %cst_340 = arith.constant dense<0.000000e+00> : vector<32x8xf32>
    %483 = tpu.matmul %480, %482, %cst_340 {dimension_numbers = #tpu.dot_dimension_numbers<[1], [0], [0], [1], [0, 0, 1, 1], [], []>} : vector<32x8xf32>, vector<8x8xf32>, vector<32x8xf32> -> vector<32x8xf32>
    %484 = arith.addf %479, %483 : vector<32x8xf32>
    %485 = vector.extract_strided_slice %473 {offsets = [8, 0], sizes = [32, 8], strides = [1, 1]} : vector<48x8xf32> to vector<32x8xf32>
    %c2_341 = arith.constant 2 : index
    %c0_342 = arith.constant 0 : index
    %c0_343 = arith.constant 0 : index
    %486 = vector.load %arg35[%c2_341, %c0_342, %c0_343] : memref<5x8x8xf32, #tpu.memory_space<vmem>>, vector<1x8x8xf32>
    %487 = vector.shape_cast %486 : vector<1x8x8xf32> to vector<8x8xf32>
    %cst_344 = arith.constant dense<0.000000e+00> : vector<32x8xf32>
    %488 = tpu.matmul %485, %487, %cst_344 {dimension_numbers = #tpu.dot_dimension_numbers<[1], [0], [0], [1], [0, 0, 1, 1], [], []>} : vector<32x8xf32>, vector<8x8xf32>, vector<32x8xf32> -> vector<32x8xf32>
    %489 = arith.addf %484, %488 : vector<32x8xf32>
    %490 = vector.extract_strided_slice %473 {offsets = [9, 0], sizes = [32, 8], strides = [1, 1]} : vector<48x8xf32> to vector<32x8xf32>
    %c3_345 = arith.constant 3 : index
    %c0_346 = arith.constant 0 : index
    %c0_347 = arith.constant 0 : index
    %491 = vector.load %arg35[%c3_345, %c0_346, %c0_347] : memref<5x8x8xf32, #tpu.memory_space<vmem>>, vector<1x8x8xf32>
    %492 = vector.shape_cast %491 : vector<1x8x8xf32> to vector<8x8xf32>
    %cst_348 = arith.constant dense<0.000000e+00> : vector<32x8xf32>
    %493 = tpu.matmul %490, %492, %cst_348 {dimension_numbers = #tpu.dot_dimension_numbers<[1], [0], [0], [1], [0, 0, 1, 1], [], []>} : vector<32x8xf32>, vector<8x8xf32>, vector<32x8xf32> -> vector<32x8xf32>
    %494 = arith.addf %489, %493 : vector<32x8xf32>
    %495 = vector.extract_strided_slice %473 {offsets = [10, 0], sizes = [32, 8], strides = [1, 1]} : vector<48x8xf32> to vector<32x8xf32>
    %c4_349 = arith.constant 4 : index
    %c0_350 = arith.constant 0 : index
    %c0_351 = arith.constant 0 : index
    %496 = vector.load %arg35[%c4_349, %c0_350, %c0_351] : memref<5x8x8xf32, #tpu.memory_space<vmem>>, vector<1x8x8xf32>
    %497 = vector.shape_cast %496 : vector<1x8x8xf32> to vector<8x8xf32>
    %cst_352 = arith.constant dense<0.000000e+00> : vector<32x8xf32>
    %498 = tpu.matmul %495, %497, %cst_352 {dimension_numbers = #tpu.dot_dimension_numbers<[1], [0], [0], [1], [0, 0, 1, 1], [], []>} : vector<32x8xf32>, vector<8x8xf32>, vector<32x8xf32> -> vector<32x8xf32>
    %499 = arith.addf %494, %498 : vector<32x8xf32>
    %c0_353 = arith.constant 0 : index
    %c0_354 = arith.constant 0 : index
    %500 = vector.load %arg36[%c0_353, %c0_354] : memref<1x8xf32, #tpu.memory_space<vmem>>, vector<1x8xf32>
    %501 = vector.broadcast %500 : vector<1x8xf32> to vector<32x8xf32>
    %502 = arith.addf %499, %501 : vector<32x8xf32>
    %cst_355 = arith.constant 0.000000e+00 : f32
    %503 = vector.broadcast %cst_355 : f32 to vector<32x8xf32>
    %504 = arith.cmpf ogt, %502, %503 : vector<32x8xf32>
    %cst_356 = arith.constant 1.000000e-01 : f32
    %505 = vector.broadcast %cst_356 : f32 to vector<32x8xf32>
    %506 = arith.mulf %505, %502 : vector<32x8xf32>
    %507 = arith.select %504, %502, %506 : vector<32x8xi1>, vector<32x8xf32>
    %cst_357 = arith.constant 0.000000e+00 : f32
    %508 = vector.broadcast %cst_357 : f32 to vector<8x8xf32>
    %509 = tpu.concatenate %508, %507, %508 in 0 : vector<8x8xf32>, vector<32x8xf32>, vector<8x8xf32> -> vector<48x8xf32>
    %cst_358 = arith.constant 0.000000e+00 : f32
    %510 = vector.broadcast %cst_358 : f32 to vector<32x8xf32>
    %511 = vector.extract_strided_slice %509 {offsets = [6, 0], sizes = [32, 8], strides = [1, 1]} : vector<48x8xf32> to vector<32x8xf32>
    %c0_359 = arith.constant 0 : index
    %c0_360 = arith.constant 0 : index
    %c0_361 = arith.constant 0 : index
    %512 = vector.load %arg39[%c0_359, %c0_360, %c0_361] : memref<5x8x8xf32, #tpu.memory_space<vmem>>, vector<1x8x8xf32>
    %513 = vector.shape_cast %512 : vector<1x8x8xf32> to vector<8x8xf32>
    %cst_362 = arith.constant dense<0.000000e+00> : vector<32x8xf32>
    %514 = tpu.matmul %511, %513, %cst_362 {dimension_numbers = #tpu.dot_dimension_numbers<[1], [0], [0], [1], [0, 0, 1, 1], [], []>} : vector<32x8xf32>, vector<8x8xf32>, vector<32x8xf32> -> vector<32x8xf32>
    %515 = arith.addf %510, %514 : vector<32x8xf32>
    %516 = vector.extract_strided_slice %509 {offsets = [7, 0], sizes = [32, 8], strides = [1, 1]} : vector<48x8xf32> to vector<32x8xf32>
    %c1_363 = arith.constant 1 : index
    %c0_364 = arith.constant 0 : index
    %c0_365 = arith.constant 0 : index
    %517 = vector.load %arg39[%c1_363, %c0_364, %c0_365] : memref<5x8x8xf32, #tpu.memory_space<vmem>>, vector<1x8x8xf32>
    %518 = vector.shape_cast %517 : vector<1x8x8xf32> to vector<8x8xf32>
    %cst_366 = arith.constant dense<0.000000e+00> : vector<32x8xf32>
    %519 = tpu.matmul %516, %518, %cst_366 {dimension_numbers = #tpu.dot_dimension_numbers<[1], [0], [0], [1], [0, 0, 1, 1], [], []>} : vector<32x8xf32>, vector<8x8xf32>, vector<32x8xf32> -> vector<32x8xf32>
    %520 = arith.addf %515, %519 : vector<32x8xf32>
    %521 = vector.extract_strided_slice %509 {offsets = [8, 0], sizes = [32, 8], strides = [1, 1]} : vector<48x8xf32> to vector<32x8xf32>
    %c2_367 = arith.constant 2 : index
    %c0_368 = arith.constant 0 : index
    %c0_369 = arith.constant 0 : index
    %522 = vector.load %arg39[%c2_367, %c0_368, %c0_369] : memref<5x8x8xf32, #tpu.memory_space<vmem>>, vector<1x8x8xf32>
    %523 = vector.shape_cast %522 : vector<1x8x8xf32> to vector<8x8xf32>
    %cst_370 = arith.constant dense<0.000000e+00> : vector<32x8xf32>
    %524 = tpu.matmul %521, %523, %cst_370 {dimension_numbers = #tpu.dot_dimension_numbers<[1], [0], [0], [1], [0, 0, 1, 1], [], []>} : vector<32x8xf32>, vector<8x8xf32>, vector<32x8xf32> -> vector<32x8xf32>
    %525 = arith.addf %520, %524 : vector<32x8xf32>
    %526 = vector.extract_strided_slice %509 {offsets = [9, 0], sizes = [32, 8], strides = [1, 1]} : vector<48x8xf32> to vector<32x8xf32>
    %c3_371 = arith.constant 3 : index
    %c0_372 = arith.constant 0 : index
    %c0_373 = arith.constant 0 : index
    %527 = vector.load %arg39[%c3_371, %c0_372, %c0_373] : memref<5x8x8xf32, #tpu.memory_space<vmem>>, vector<1x8x8xf32>
    %528 = vector.shape_cast %527 : vector<1x8x8xf32> to vector<8x8xf32>
    %cst_374 = arith.constant dense<0.000000e+00> : vector<32x8xf32>
    %529 = tpu.matmul %526, %528, %cst_374 {dimension_numbers = #tpu.dot_dimension_numbers<[1], [0], [0], [1], [0, 0, 1, 1], [], []>} : vector<32x8xf32>, vector<8x8xf32>, vector<32x8xf32> -> vector<32x8xf32>
    %530 = arith.addf %525, %529 : vector<32x8xf32>
    %531 = vector.extract_strided_slice %509 {offsets = [10, 0], sizes = [32, 8], strides = [1, 1]} : vector<48x8xf32> to vector<32x8xf32>
    %c4_375 = arith.constant 4 : index
    %c0_376 = arith.constant 0 : index
    %c0_377 = arith.constant 0 : index
    %532 = vector.load %arg39[%c4_375, %c0_376, %c0_377] : memref<5x8x8xf32, #tpu.memory_space<vmem>>, vector<1x8x8xf32>
    %533 = vector.shape_cast %532 : vector<1x8x8xf32> to vector<8x8xf32>
    %cst_378 = arith.constant dense<0.000000e+00> : vector<32x8xf32>
    %534 = tpu.matmul %531, %533, %cst_378 {dimension_numbers = #tpu.dot_dimension_numbers<[1], [0], [0], [1], [0, 0, 1, 1], [], []>} : vector<32x8xf32>, vector<8x8xf32>, vector<32x8xf32> -> vector<32x8xf32>
    %535 = arith.addf %530, %534 : vector<32x8xf32>
    %c0_379 = arith.constant 0 : index
    %c0_380 = arith.constant 0 : index
    %536 = vector.load %arg40[%c0_379, %c0_380] : memref<1x8xf32, #tpu.memory_space<vmem>>, vector<1x8xf32>
    %537 = vector.broadcast %536 : vector<1x8xf32> to vector<32x8xf32>
    %538 = arith.addf %535, %537 : vector<32x8xf32>
    %539 = arith.addf %360, %538 : vector<32x8xf32>
    %cst_381 = arith.constant 0.000000e+00 : f32
    %540 = vector.broadcast %cst_381 : f32 to vector<32x8xf32>
    %541 = arith.cmpf ogt, %539, %540 : vector<32x8xf32>
    %cst_382 = arith.constant 1.000000e-01 : f32
    %542 = vector.broadcast %cst_382 : f32 to vector<32x8xf32>
    %543 = arith.mulf %542, %539 : vector<32x8xf32>
    %544 = arith.select %541, %539, %543 : vector<32x8xi1>, vector<32x8xf32>
    %cst_383 = arith.constant 0.000000e+00 : f32
    %545 = vector.broadcast %cst_383 : f32 to vector<8x8xf32>
    %546 = tpu.concatenate %545, %544, %545 in 0 : vector<8x8xf32>, vector<32x8xf32>, vector<8x8xf32> -> vector<48x8xf32>
    %cst_384 = arith.constant 0.000000e+00 : f32
    %547 = vector.broadcast %cst_384 : f32 to vector<32x8xf32>
    %548 = vector.extract_strided_slice %546 {offsets = [2, 0], sizes = [32, 8], strides = [1, 1]} : vector<48x8xf32> to vector<32x8xf32>
    %c0_385 = arith.constant 0 : index
    %c0_386 = arith.constant 0 : index
    %c0_387 = arith.constant 0 : index
    %549 = vector.load %arg37[%c0_385, %c0_386, %c0_387] : memref<5x8x8xf32, #tpu.memory_space<vmem>>, vector<1x8x8xf32>
    %550 = vector.shape_cast %549 : vector<1x8x8xf32> to vector<8x8xf32>
    %cst_388 = arith.constant dense<0.000000e+00> : vector<32x8xf32>
    %551 = tpu.matmul %548, %550, %cst_388 {dimension_numbers = #tpu.dot_dimension_numbers<[1], [0], [0], [1], [0, 0, 1, 1], [], []>} : vector<32x8xf32>, vector<8x8xf32>, vector<32x8xf32> -> vector<32x8xf32>
    %552 = arith.addf %547, %551 : vector<32x8xf32>
    %553 = vector.extract_strided_slice %546 {offsets = [5, 0], sizes = [32, 8], strides = [1, 1]} : vector<48x8xf32> to vector<32x8xf32>
    %c1_389 = arith.constant 1 : index
    %c0_390 = arith.constant 0 : index
    %c0_391 = arith.constant 0 : index
    %554 = vector.load %arg37[%c1_389, %c0_390, %c0_391] : memref<5x8x8xf32, #tpu.memory_space<vmem>>, vector<1x8x8xf32>
    %555 = vector.shape_cast %554 : vector<1x8x8xf32> to vector<8x8xf32>
    %cst_392 = arith.constant dense<0.000000e+00> : vector<32x8xf32>
    %556 = tpu.matmul %553, %555, %cst_392 {dimension_numbers = #tpu.dot_dimension_numbers<[1], [0], [0], [1], [0, 0, 1, 1], [], []>} : vector<32x8xf32>, vector<8x8xf32>, vector<32x8xf32> -> vector<32x8xf32>
    %557 = arith.addf %552, %556 : vector<32x8xf32>
    %558 = vector.extract_strided_slice %546 {offsets = [8, 0], sizes = [32, 8], strides = [1, 1]} : vector<48x8xf32> to vector<32x8xf32>
    %c2_393 = arith.constant 2 : index
    %c0_394 = arith.constant 0 : index
    %c0_395 = arith.constant 0 : index
    %559 = vector.load %arg37[%c2_393, %c0_394, %c0_395] : memref<5x8x8xf32, #tpu.memory_space<vmem>>, vector<1x8x8xf32>
    %560 = vector.shape_cast %559 : vector<1x8x8xf32> to vector<8x8xf32>
    %cst_396 = arith.constant dense<0.000000e+00> : vector<32x8xf32>
    %561 = tpu.matmul %558, %560, %cst_396 {dimension_numbers = #tpu.dot_dimension_numbers<[1], [0], [0], [1], [0, 0, 1, 1], [], []>} : vector<32x8xf32>, vector<8x8xf32>, vector<32x8xf32> -> vector<32x8xf32>
    %562 = arith.addf %557, %561 : vector<32x8xf32>
    %563 = vector.extract_strided_slice %546 {offsets = [11, 0], sizes = [32, 8], strides = [1, 1]} : vector<48x8xf32> to vector<32x8xf32>
    %c3_397 = arith.constant 3 : index
    %c0_398 = arith.constant 0 : index
    %c0_399 = arith.constant 0 : index
    %564 = vector.load %arg37[%c3_397, %c0_398, %c0_399] : memref<5x8x8xf32, #tpu.memory_space<vmem>>, vector<1x8x8xf32>
    %565 = vector.shape_cast %564 : vector<1x8x8xf32> to vector<8x8xf32>
    %cst_400 = arith.constant dense<0.000000e+00> : vector<32x8xf32>
    %566 = tpu.matmul %563, %565, %cst_400 {dimension_numbers = #tpu.dot_dimension_numbers<[1], [0], [0], [1], [0, 0, 1, 1], [], []>} : vector<32x8xf32>, vector<8x8xf32>, vector<32x8xf32> -> vector<32x8xf32>
    %567 = arith.addf %562, %566 : vector<32x8xf32>
    %568 = vector.extract_strided_slice %546 {offsets = [14, 0], sizes = [32, 8], strides = [1, 1]} : vector<48x8xf32> to vector<32x8xf32>
    %c4_401 = arith.constant 4 : index
    %c0_402 = arith.constant 0 : index
    %c0_403 = arith.constant 0 : index
    %569 = vector.load %arg37[%c4_401, %c0_402, %c0_403] : memref<5x8x8xf32, #tpu.memory_space<vmem>>, vector<1x8x8xf32>
    %570 = vector.shape_cast %569 : vector<1x8x8xf32> to vector<8x8xf32>
    %cst_404 = arith.constant dense<0.000000e+00> : vector<32x8xf32>
    %571 = tpu.matmul %568, %570, %cst_404 {dimension_numbers = #tpu.dot_dimension_numbers<[1], [0], [0], [1], [0, 0, 1, 1], [], []>} : vector<32x8xf32>, vector<8x8xf32>, vector<32x8xf32> -> vector<32x8xf32>
    %572 = arith.addf %567, %571 : vector<32x8xf32>
    %c0_405 = arith.constant 0 : index
    %c0_406 = arith.constant 0 : index
    %573 = vector.load %arg38[%c0_405, %c0_406] : memref<1x8xf32, #tpu.memory_space<vmem>>, vector<1x8xf32>
    %574 = vector.broadcast %573 : vector<1x8xf32> to vector<32x8xf32>
    %575 = arith.addf %572, %574 : vector<32x8xf32>
    %cst_407 = arith.constant 0.000000e+00 : f32
    %576 = vector.broadcast %cst_407 : f32 to vector<32x8xf32>
    %577 = arith.cmpf ogt, %575, %576 : vector<32x8xf32>
    %cst_408 = arith.constant 1.000000e-01 : f32
    %578 = vector.broadcast %cst_408 : f32 to vector<32x8xf32>
    %579 = arith.mulf %578, %575 : vector<32x8xf32>
    %580 = arith.select %577, %575, %579 : vector<32x8xi1>, vector<32x8xf32>
    %cst_409 = arith.constant 0.000000e+00 : f32
    %581 = vector.broadcast %cst_409 : f32 to vector<8x8xf32>
    %582 = tpu.concatenate %581, %580, %581 in 0 : vector<8x8xf32>, vector<32x8xf32>, vector<8x8xf32> -> vector<48x8xf32>
    %cst_410 = arith.constant 0.000000e+00 : f32
    %583 = vector.broadcast %cst_410 : f32 to vector<32x8xf32>
    %584 = vector.extract_strided_slice %582 {offsets = [6, 0], sizes = [32, 8], strides = [1, 1]} : vector<48x8xf32> to vector<32x8xf32>
    %c0_411 = arith.constant 0 : index
    %c0_412 = arith.constant 0 : index
    %c0_413 = arith.constant 0 : index
    %585 = vector.load %arg41[%c0_411, %c0_412, %c0_413] : memref<5x8x8xf32, #tpu.memory_space<vmem>>, vector<1x8x8xf32>
    %586 = vector.shape_cast %585 : vector<1x8x8xf32> to vector<8x8xf32>
    %cst_414 = arith.constant dense<0.000000e+00> : vector<32x8xf32>
    %587 = tpu.matmul %584, %586, %cst_414 {dimension_numbers = #tpu.dot_dimension_numbers<[1], [0], [0], [1], [0, 0, 1, 1], [], []>} : vector<32x8xf32>, vector<8x8xf32>, vector<32x8xf32> -> vector<32x8xf32>
    %588 = arith.addf %583, %587 : vector<32x8xf32>
    %589 = vector.extract_strided_slice %582 {offsets = [7, 0], sizes = [32, 8], strides = [1, 1]} : vector<48x8xf32> to vector<32x8xf32>
    %c1_415 = arith.constant 1 : index
    %c0_416 = arith.constant 0 : index
    %c0_417 = arith.constant 0 : index
    %590 = vector.load %arg41[%c1_415, %c0_416, %c0_417] : memref<5x8x8xf32, #tpu.memory_space<vmem>>, vector<1x8x8xf32>
    %591 = vector.shape_cast %590 : vector<1x8x8xf32> to vector<8x8xf32>
    %cst_418 = arith.constant dense<0.000000e+00> : vector<32x8xf32>
    %592 = tpu.matmul %589, %591, %cst_418 {dimension_numbers = #tpu.dot_dimension_numbers<[1], [0], [0], [1], [0, 0, 1, 1], [], []>} : vector<32x8xf32>, vector<8x8xf32>, vector<32x8xf32> -> vector<32x8xf32>
    %593 = arith.addf %588, %592 : vector<32x8xf32>
    %594 = vector.extract_strided_slice %582 {offsets = [8, 0], sizes = [32, 8], strides = [1, 1]} : vector<48x8xf32> to vector<32x8xf32>
    %c2_419 = arith.constant 2 : index
    %c0_420 = arith.constant 0 : index
    %c0_421 = arith.constant 0 : index
    %595 = vector.load %arg41[%c2_419, %c0_420, %c0_421] : memref<5x8x8xf32, #tpu.memory_space<vmem>>, vector<1x8x8xf32>
    %596 = vector.shape_cast %595 : vector<1x8x8xf32> to vector<8x8xf32>
    %cst_422 = arith.constant dense<0.000000e+00> : vector<32x8xf32>
    %597 = tpu.matmul %594, %596, %cst_422 {dimension_numbers = #tpu.dot_dimension_numbers<[1], [0], [0], [1], [0, 0, 1, 1], [], []>} : vector<32x8xf32>, vector<8x8xf32>, vector<32x8xf32> -> vector<32x8xf32>
    %598 = arith.addf %593, %597 : vector<32x8xf32>
    %599 = vector.extract_strided_slice %582 {offsets = [9, 0], sizes = [32, 8], strides = [1, 1]} : vector<48x8xf32> to vector<32x8xf32>
    %c3_423 = arith.constant 3 : index
    %c0_424 = arith.constant 0 : index
    %c0_425 = arith.constant 0 : index
    %600 = vector.load %arg41[%c3_423, %c0_424, %c0_425] : memref<5x8x8xf32, #tpu.memory_space<vmem>>, vector<1x8x8xf32>
    %601 = vector.shape_cast %600 : vector<1x8x8xf32> to vector<8x8xf32>
    %cst_426 = arith.constant dense<0.000000e+00> : vector<32x8xf32>
    %602 = tpu.matmul %599, %601, %cst_426 {dimension_numbers = #tpu.dot_dimension_numbers<[1], [0], [0], [1], [0, 0, 1, 1], [], []>} : vector<32x8xf32>, vector<8x8xf32>, vector<32x8xf32> -> vector<32x8xf32>
    %603 = arith.addf %598, %602 : vector<32x8xf32>
    %604 = vector.extract_strided_slice %582 {offsets = [10, 0], sizes = [32, 8], strides = [1, 1]} : vector<48x8xf32> to vector<32x8xf32>
    %c4_427 = arith.constant 4 : index
    %c0_428 = arith.constant 0 : index
    %c0_429 = arith.constant 0 : index
    %605 = vector.load %arg41[%c4_427, %c0_428, %c0_429] : memref<5x8x8xf32, #tpu.memory_space<vmem>>, vector<1x8x8xf32>
    %606 = vector.shape_cast %605 : vector<1x8x8xf32> to vector<8x8xf32>
    %cst_430 = arith.constant dense<0.000000e+00> : vector<32x8xf32>
    %607 = tpu.matmul %604, %606, %cst_430 {dimension_numbers = #tpu.dot_dimension_numbers<[1], [0], [0], [1], [0, 0, 1, 1], [], []>} : vector<32x8xf32>, vector<8x8xf32>, vector<32x8xf32> -> vector<32x8xf32>
    %608 = arith.addf %603, %607 : vector<32x8xf32>
    %c0_431 = arith.constant 0 : index
    %c0_432 = arith.constant 0 : index
    %609 = vector.load %arg42[%c0_431, %c0_432] : memref<1x8xf32, #tpu.memory_space<vmem>>, vector<1x8xf32>
    %610 = vector.broadcast %609 : vector<1x8xf32> to vector<32x8xf32>
    %611 = arith.addf %608, %610 : vector<32x8xf32>
    %612 = arith.addf %539, %611 : vector<32x8xf32>
    %613 = arith.addf %466, %612 : vector<32x8xf32>
    %cst_433 = arith.constant 5.000000e-01 : f32
    %614 = vector.broadcast %cst_433 : f32 to vector<32x8xf32>
    %615 = arith.mulf %613, %614 : vector<32x8xf32>
    %cst_434 = arith.constant 0.000000e+00 : f32
    %616 = vector.broadcast %cst_434 : f32 to vector<32x8xf32>
    %617 = arith.cmpf ogt, %615, %616 : vector<32x8xf32>
    %cst_435 = arith.constant 1.000000e-01 : f32
    %618 = vector.broadcast %cst_435 : f32 to vector<32x8xf32>
    %619 = arith.mulf %618, %615 : vector<32x8xf32>
    %620 = arith.select %617, %615, %619 : vector<32x8xi1>, vector<32x8xf32>
    %cst_436 = arith.constant 0.000000e+00 : f32
    %621 = vector.broadcast %cst_436 : f32 to vector<8x8xf32>
    %622 = tpu.concatenate %621, %620, %621 in 0 : vector<8x8xf32>, vector<32x8xf32>, vector<8x8xf32> -> vector<48x8xf32>
    %cst_437 = arith.constant 0.000000e+00 : f32
    %623 = vector.broadcast %cst_437 : f32 to vector<32x1xf32>
    %624 = vector.extract_strided_slice %622 {offsets = [5, 0], sizes = [32, 8], strides = [1, 1]} : vector<48x8xf32> to vector<32x8xf32>
    %c0_438 = arith.constant 0 : index
    %c0_439 = arith.constant 0 : index
    %c0_440 = arith.constant 0 : index
    %625 = vector.load %arg43[%c0_438, %c0_439, %c0_440] : memref<7x8x1xf32, #tpu.memory_space<vmem>>, vector<1x8x1xf32>
    %626 = vector.shape_cast %625 : vector<1x8x1xf32> to vector<8x1xf32>
    %cst_441 = arith.constant dense<0.000000e+00> : vector<32x1xf32>
    %627 = tpu.matmul %624, %626, %cst_441 {dimension_numbers = #tpu.dot_dimension_numbers<[1], [0], [0], [1], [0, 0, 1, 1], [], []>} : vector<32x8xf32>, vector<8x1xf32>, vector<32x1xf32> -> vector<32x1xf32>
    %628 = arith.addf %623, %627 : vector<32x1xf32>
    %629 = vector.extract_strided_slice %622 {offsets = [6, 0], sizes = [32, 8], strides = [1, 1]} : vector<48x8xf32> to vector<32x8xf32>
    %c1_442 = arith.constant 1 : index
    %c0_443 = arith.constant 0 : index
    %c0_444 = arith.constant 0 : index
    %630 = vector.load %arg43[%c1_442, %c0_443, %c0_444] : memref<7x8x1xf32, #tpu.memory_space<vmem>>, vector<1x8x1xf32>
    %631 = vector.shape_cast %630 : vector<1x8x1xf32> to vector<8x1xf32>
    %cst_445 = arith.constant dense<0.000000e+00> : vector<32x1xf32>
    %632 = tpu.matmul %629, %631, %cst_445 {dimension_numbers = #tpu.dot_dimension_numbers<[1], [0], [0], [1], [0, 0, 1, 1], [], []>} : vector<32x8xf32>, vector<8x1xf32>, vector<32x1xf32> -> vector<32x1xf32>
    %633 = arith.addf %628, %632 : vector<32x1xf32>
    %634 = vector.extract_strided_slice %622 {offsets = [7, 0], sizes = [32, 8], strides = [1, 1]} : vector<48x8xf32> to vector<32x8xf32>
    %c2_446 = arith.constant 2 : index
    %c0_447 = arith.constant 0 : index
    %c0_448 = arith.constant 0 : index
    %635 = vector.load %arg43[%c2_446, %c0_447, %c0_448] : memref<7x8x1xf32, #tpu.memory_space<vmem>>, vector<1x8x1xf32>
    %636 = vector.shape_cast %635 : vector<1x8x1xf32> to vector<8x1xf32>
    %cst_449 = arith.constant dense<0.000000e+00> : vector<32x1xf32>
    %637 = tpu.matmul %634, %636, %cst_449 {dimension_numbers = #tpu.dot_dimension_numbers<[1], [0], [0], [1], [0, 0, 1, 1], [], []>} : vector<32x8xf32>, vector<8x1xf32>, vector<32x1xf32> -> vector<32x1xf32>
    %638 = arith.addf %633, %637 : vector<32x1xf32>
    %639 = vector.extract_strided_slice %622 {offsets = [8, 0], sizes = [32, 8], strides = [1, 1]} : vector<48x8xf32> to vector<32x8xf32>
    %c3_450 = arith.constant 3 : index
    %c0_451 = arith.constant 0 : index
    %c0_452 = arith.constant 0 : index
    %640 = vector.load %arg43[%c3_450, %c0_451, %c0_452] : memref<7x8x1xf32, #tpu.memory_space<vmem>>, vector<1x8x1xf32>
    %641 = vector.shape_cast %640 : vector<1x8x1xf32> to vector<8x1xf32>
    %cst_453 = arith.constant dense<0.000000e+00> : vector<32x1xf32>
    %642 = tpu.matmul %639, %641, %cst_453 {dimension_numbers = #tpu.dot_dimension_numbers<[1], [0], [0], [1], [0, 0, 1, 1], [], []>} : vector<32x8xf32>, vector<8x1xf32>, vector<32x1xf32> -> vector<32x1xf32>
    %643 = arith.addf %638, %642 : vector<32x1xf32>
    %644 = vector.extract_strided_slice %622 {offsets = [9, 0], sizes = [32, 8], strides = [1, 1]} : vector<48x8xf32> to vector<32x8xf32>
    %c4_454 = arith.constant 4 : index
    %c0_455 = arith.constant 0 : index
    %c0_456 = arith.constant 0 : index
    %645 = vector.load %arg43[%c4_454, %c0_455, %c0_456] : memref<7x8x1xf32, #tpu.memory_space<vmem>>, vector<1x8x1xf32>
    %646 = vector.shape_cast %645 : vector<1x8x1xf32> to vector<8x1xf32>
    %cst_457 = arith.constant dense<0.000000e+00> : vector<32x1xf32>
    %647 = tpu.matmul %644, %646, %cst_457 {dimension_numbers = #tpu.dot_dimension_numbers<[1], [0], [0], [1], [0, 0, 1, 1], [], []>} : vector<32x8xf32>, vector<8x1xf32>, vector<32x1xf32> -> vector<32x1xf32>
    %648 = arith.addf %643, %647 : vector<32x1xf32>
    %649 = vector.extract_strided_slice %622 {offsets = [10, 0], sizes = [32, 8], strides = [1, 1]} : vector<48x8xf32> to vector<32x8xf32>
    %c5_458 = arith.constant 5 : index
    %c0_459 = arith.constant 0 : index
    %c0_460 = arith.constant 0 : index
    %650 = vector.load %arg43[%c5_458, %c0_459, %c0_460] : memref<7x8x1xf32, #tpu.memory_space<vmem>>, vector<1x8x1xf32>
    %651 = vector.shape_cast %650 : vector<1x8x1xf32> to vector<8x1xf32>
    %cst_461 = arith.constant dense<0.000000e+00> : vector<32x1xf32>
    %652 = tpu.matmul %649, %651, %cst_461 {dimension_numbers = #tpu.dot_dimension_numbers<[1], [0], [0], [1], [0, 0, 1, 1], [], []>} : vector<32x8xf32>, vector<8x1xf32>, vector<32x1xf32> -> vector<32x1xf32>
    %653 = arith.addf %648, %652 : vector<32x1xf32>
    %654 = vector.extract_strided_slice %622 {offsets = [11, 0], sizes = [32, 8], strides = [1, 1]} : vector<48x8xf32> to vector<32x8xf32>
    %c6_462 = arith.constant 6 : index
    %c0_463 = arith.constant 0 : index
    %c0_464 = arith.constant 0 : index
    %655 = vector.load %arg43[%c6_462, %c0_463, %c0_464] : memref<7x8x1xf32, #tpu.memory_space<vmem>>, vector<1x8x1xf32>
    %656 = vector.shape_cast %655 : vector<1x8x1xf32> to vector<8x1xf32>
    %cst_465 = arith.constant dense<0.000000e+00> : vector<32x1xf32>
    %657 = tpu.matmul %654, %656, %cst_465 {dimension_numbers = #tpu.dot_dimension_numbers<[1], [0], [0], [1], [0, 0, 1, 1], [], []>} : vector<32x8xf32>, vector<8x1xf32>, vector<32x1xf32> -> vector<32x1xf32>
    %658 = arith.addf %653, %657 : vector<32x1xf32>
    %c0_466 = arith.constant 0 : index
    %c0_467 = arith.constant 0 : index
    %659 = vector.load %arg44[%c0_466, %c0_467] : memref<1x1xf32, #tpu.memory_space<vmem>>, vector<1x1xf32>
    %660 = vector.broadcast %659 : vector<1x1xf32> to vector<32x1xf32>
    %661 = arith.addf %658, %660 : vector<32x1xf32>
    %662 = math.tanh %661 : vector<32x1xf32>
    %c0_468 = arith.constant 0 : index
    %c0_469 = arith.constant 0 : index
    %663 = vector.load %arg45[%c0_468, %c0_469] : memref<32x1xf32, #tpu.memory_space<vmem>>, vector<32x1xf32>
    tpu.vector_store %arg45[%c0_468, %c0_469], %662 {strides = array<i32>} : memref<32x1xf32, #tpu.memory_space<vmem>>, vector<32x1xf32>,
    return
  }
}

</mosaic_0001>

<llo_original>
// kernel: wrapper_hifigan_forward.1
$region0: #{wrapper_hifigan_forward.1}
  #allocation0 [shape = 'u32[]', space=smem, size = 0x4, offset = 0x4, fixed_abs, tag = 'smem constant byte address 0x4 - core index']
  #allocation1 [shape = 'u32[72,128]{1,0:T(1,128)}', space=vmem, size = 0x9000, scoped, tag = 'internal scratch']
  #allocation2 [shape = 'f32[1,1]{1,0:T(1,128)S(1)}', space=vmem, size = 0x200, scoped, tag = 'scoped memory for wrapper_hifigan_forward.1']
  %s0 = inlined_call_operand.smem [shape: u32[46], index: -1, kind: input, shape index: {}]
  %s1 = sld [smem:[%s0]]
  %s2 = scalar_lea.smem %s0, 1
  %s3 = sld [smem:[%s2]]
  %s4 = scalar_lea.smem %s0, 2
  %s5 = sld [smem:[%s4]]
  %s6 = scalar_lea.smem %s0, 3
  %s7 = sld [smem:[%s6]]
  %s8 = scalar_lea.smem %s0, 4
  %s9 = sld [smem:[%s8]]
  %s10 = scalar_lea.smem %s0, 5
  %s11 = sld [smem:[%s10]]
  %s12 = scalar_lea.smem %s0, 6
  %s13 = sld [smem:[%s12]]
  %s14 = scalar_lea.smem %s0, 7
  %s15 = sld [smem:[%s14]]
  %s16 = scalar_lea.smem %s0, 8
  %s17 = sld [smem:[%s16]]
  %s18 = scalar_lea.smem %s0, 9
  %s19 = sld [smem:[%s18]]
  %s20 = scalar_lea.smem %s0, 10
  %s21 = sld [smem:[%s20]]
  %s22 = scalar_lea.smem %s0, 11
  %s23 = sld [smem:[%s22]]
  %s24 = scalar_lea.smem %s0, 12
  %s25 = sld [smem:[%s24]]
  %s26 = scalar_lea.smem %s0, 13
  %s27 = sld [smem:[%s26]]
  %s28 = scalar_lea.smem %s0, 14
  %s29 = sld [smem:[%s28]]
  %s30 = scalar_lea.smem %s0, 15
  %s31 = sld [smem:[%s30]]
  %s32 = scalar_lea.smem %s0, 16
  %s33 = sld [smem:[%s32]]
  %s34 = scalar_lea.smem %s0, 17
  %s35 = sld [smem:[%s34]]
  %s36 = scalar_lea.smem %s0, 18
  %s37 = sld [smem:[%s36]]
  %s38 = scalar_lea.smem %s0, 19
  %s39 = sld [smem:[%s38]]
  %s40 = scalar_lea.smem %s0, 20
  %s41 = sld [smem:[%s40]]
  %s42 = scalar_lea.smem %s0, 21
  %s43 = sld [smem:[%s42]]
  %s44 = scalar_lea.smem %s0, 22
  %s45 = sld [smem:[%s44]]
  %s46 = scalar_lea.smem %s0, 23
  %s47 = sld [smem:[%s46]]
  %s48 = scalar_lea.smem %s0, 24
  %s49 = sld [smem:[%s48]]
  %s50 = scalar_lea.smem %s0, 25
  %s51 = sld [smem:[%s50]]
  %s52 = scalar_lea.smem %s0, 26
  %s53 = sld [smem:[%s52]]
  %s54 = scalar_lea.smem %s0, 27
  %s55 = sld [smem:[%s54]]
  %s56 = scalar_lea.smem %s0, 28
  %s57 = sld [smem:[%s56]]
  %s58 = scalar_lea.smem %s0, 29
  %s59 = sld [smem:[%s58]]
  %s60 = scalar_lea.smem %s0, 30
  %s61 = sld [smem:[%s60]]
  %s62 = scalar_lea.smem %s0, 31
  %s63 = sld [smem:[%s62]]
  %s64 = scalar_lea.smem %s0, 32
  %s65 = sld [smem:[%s64]]
  %s66 = scalar_lea.smem %s0, 33
  %s67 = sld [smem:[%s66]]
  %s68 = scalar_lea.smem %s0, 34
  %s69 = sld [smem:[%s68]]
  %s70 = scalar_lea.smem %s0, 35
  %s71 = sld [smem:[%s70]]
  %s72 = scalar_lea.smem %s0, 36
  %s73 = sld [smem:[%s72]]
  %s74 = scalar_lea.smem %s0, 37
  %s75 = sld [smem:[%s74]]
  %s76 = scalar_lea.smem %s0, 38
  %s77 = sld [smem:[%s76]]
  %s78 = scalar_lea.smem %s0, 39
  %s79 = sld [smem:[%s78]]
  %s80 = scalar_lea.smem %s0, 40
  %s81 = sld [smem:[%s80]]
  %s82 = scalar_lea.smem %s0, 41
  %s83 = sld [smem:[%s82]]
  %s84 = scalar_lea.smem %s0, 42
  %s85 = sld [smem:[%s84]]
  %s86 = scalar_lea.smem %s0, 43
  %s87 = sld [smem:[%s86]]
  %s88 = scalar_lea.smem %s0, 44
  %s89 = sld [smem:[%s88]]
  %s90 = scalar_lea.smem %s0, 45
  %s91 = sld [smem:[%s90]]
  %s92 = sld [smem:[#allocation0]]
  $region242: #{wrapper_hifigan_forward.1} parent=0
    _
  %s94 = ssub.s32 1, %s92
  %s95 = scalar_select 0, %s94, %s92
  %v96 = vstv %s89
  %97 = vst [vmem:[#allocation2] sm:$0x1] %v96
  $region1: #{wrapper_hifigan_forward.1} parent=0
    #allocation3 [shape = 'u8[24576]{0}', space=vmem, size = 0x6000, scoped, tag = 'input window, operand 9, single buffered']
    #allocation4 [shape = 's32[1]{0}', space=sflag, size = 0x4, scoped, tag = 'scoped memory for wrapper_hifigan_forward.1']
    #allocation5 [shape = 'u8[24576]{0}', space=vmem, size = 0x6000, scoped, tag = 'input window, operand 11, single buffered']
    #allocation6 [shape = 's32[1]{0}', space=sflag, size = 0x4, scoped, tag = 'scoped memory for wrapper_hifigan_forward.1']
    #allocation7 [shape = 'u8[24576]{0}', space=vmem, size = 0x6000, scoped, tag = 'input window, operand 13, single buffered']
    #allocation8 [shape = 'u8[40960]{0}', space=vmem, size = 0xa000, scoped, tag = 'input window, operand 15, single buffered']
    #allocation9 [shape = 's32[1]{0}', space=sflag, size = 0x4, scoped, tag = 'scoped memory for wrapper_hifigan_forward.1']
    #allocation10 [shape = 'u8[40960]{0}', space=vmem, size = 0xa000, scoped, tag = 'input window, operand 17, single buffered']
    #allocation11 [shape = 'u8[40960]{0}', space=vmem, size = 0xa000, scoped, tag = 'input window, operand 19, single buffered']
    #allocation12 [shape = 's32[1]{0}', space=sflag, size = 0x4, scoped, tag = 'scoped memory for wrapper_hifigan_forward.1']
    #allocation13 [shape = 'u8[40960]{0}', space=vmem, size = 0xa000, scoped, tag = 'input window, operand 21, single buffered']
    #allocation14 [shape = 'u8[12288]{0}', space=vmem, size = 0x3000, scoped, tag = 'input window, operand 27, single buffered']
    #allocation15 [shape = 's32[1]{0}', space=sflag, size = 0x4, scoped, tag = 'scoped memory for wrapper_hifigan_forward.1']
    #allocation16 [shape = 'u8[12288]{0}', space=vmem, size = 0x3000, scoped, tag = 'input window, operand 29, single buffered']
    #allocation17 [shape = 'u8[12288]{0}', space=vmem, size = 0x3000, scoped, tag = 'input window, operand 31, single buffered']
    #allocation18 [shape = 's32[1]{0}', space=sflag, size = 0x4, scoped, tag = 'scoped memory for wrapper_hifigan_forward.1']
    #allocation19 [shape = 'u8[12288]{0}', space=vmem, size = 0x3000, scoped, tag = 'input window, operand 33, single buffered']
    #allocation20 [shape = 'u8[20480]{0}', space=vmem, size = 0x5000, scoped, tag = 'input window, operand 39, single buffered']
    #allocation21 [shape = 's32[1]{0}', space=sflag, size = 0x4, scoped, tag = 'scoped memory for wrapper_hifigan_forward.1']
    #allocation22 [shape = 'u8[20480]{0}', space=vmem, size = 0x5000, scoped, tag = 'input window, operand 41, single buffered']
    %98 = vsyncpa [#allocation4], 0
    %99 = vsyncpa [#allocation6], 0
    %100 = vsyncpa [#allocation9], 0
    %101 = vsyncpa [#allocation12], 0
    %102 = vsyncpa [#allocation15], 0
    %103 = vsyncpa [#allocation18], 0
    %104 = vsyncpa [#allocation21], 0
    // Predicated region
    $region2: #{wrapper_hifigan_forward.1} parent=1 // pred_check
      _
    $region3: #{wrapper_hifigan_forward.1} parent=1 // pred_check_branch
      %106 = sbr.rel (0) target = $region5
    $region4: #{wrapper_hifigan_forward.1} parent=1 // pred_region
      _
    $region5: #{wrapper_hifigan_forward.1} parent=1 // pred_fallthru
      _
    // Predicated region
    $region6: #{wrapper_hifigan_forward.1} parent=1 // pred_check
      _
    $region7: #{wrapper_hifigan_forward.1} parent=1 // pred_check_branch
      %108 = sbr.rel (0) target = $region9
    $region8: #{wrapper_hifigan_forward.1} parent=1 // pred_region
      _
    $region9: #{wrapper_hifigan_forward.1} parent=1 // pred_fallthru
      _
    // Predicated region
    $region10: #{wrapper_hifigan_forward.1} parent=1 // pred_check
      _
    $region11: #{wrapper_hifigan_forward.1} parent=1 // pred_check_branch
      %110 = sbr.rel (0) target = $region13
    $region12: #{wrapper_hifigan_forward.1} parent=1 // pred_region
      _
    $region13: #{wrapper_hifigan_forward.1} parent=1 // pred_fallthru
      _
    // Predicated region
    $region14: #{wrapper_hifigan_forward.1} parent=1 // pred_check
      _
    $region15: #{wrapper_hifigan_forward.1} parent=1 // pred_check_branch
      %112 = sbr.rel (0) target = $region17
    $region16: #{wrapper_hifigan_forward.1} parent=1 // pred_region
      _
    $region17: #{wrapper_hifigan_forward.1} parent=1 // pred_fallthru
      _
    // Predicated region
    $region18: #{wrapper_hifigan_forward.1} parent=1 // pred_check
      _
    $region19: #{wrapper_hifigan_forward.1} parent=1 // pred_check_branch
      %114 = sbr.rel (0) target = $region21
    $region20: #{wrapper_hifigan_forward.1} parent=1 // pred_region
      _
    $region21: #{wrapper_hifigan_forward.1} parent=1 // pred_fallthru
      _
    // Predicated region
    $region22: #{wrapper_hifigan_forward.1} parent=1 // pred_check
      _
    $region23: #{wrapper_hifigan_forward.1} parent=1 // pred_check_branch
      %116 = sbr.rel (0) target = $region25
    $region24: #{wrapper_hifigan_forward.1} parent=1 // pred_region
      _
    $region25: #{wrapper_hifigan_forward.1} parent=1 // pred_fallthru
      _
    // Predicated region
    $region26: #{wrapper_hifigan_forward.1} parent=1 // pred_check
      _
    $region27: #{wrapper_hifigan_forward.1} parent=1 // pred_check_branch
      %118 = sbr.rel (0) target = $region29
    $region28: #{wrapper_hifigan_forward.1} parent=1 // pred_region
      _
    $region29: #{wrapper_hifigan_forward.1} parent=1 // pred_fallthru
      _
    // Predicated region
    $region30: #{wrapper_hifigan_forward.1} parent=1 // pred_check
      _
    $region31: #{wrapper_hifigan_forward.1} parent=1 // pred_check_branch
      %120 = sbr.rel (0) target = $region33
    $region32: #{wrapper_hifigan_forward.1} parent=1 // pred_region
      _
    $region33: #{wrapper_hifigan_forward.1} parent=1 // pred_fallthru
      _
    // Predicated region
    $region34: #{wrapper_hifigan_forward.1} parent=1 // pred_check
      _
    $region35: #{wrapper_hifigan_forward.1} parent=1 // pred_check_branch
      %122 = sbr.rel (0) target = $region37
    $region36: #{wrapper_hifigan_forward.1} parent=1 // pred_region
      _
    $region37: #{wrapper_hifigan_forward.1} parent=1 // pred_fallthru
      _
    // Predicated region
    $region38: #{wrapper_hifigan_forward.1} parent=1 // pred_check
      _
    $region39: #{wrapper_hifigan_forward.1} parent=1 // pred_check_branch
      %124 = sbr.rel (0) target = $region41
    $region40: #{wrapper_hifigan_forward.1} parent=1 // pred_region
      %126 = vsyncadd [#allocation4], 0
      %s127 = sshll.u32 %s19, 4
      %s128 = int_to_ptr.hbm [resolvable:$true] %s127
      %s129 = sshll.u32 [#allocation3], 4
      %s130 = int_to_ptr.vmem [resolvable:$true] %s129
      %135 = dma.hbm_to_vmem [thread:$0]  %s128, 768, %s130, [#allocation4], 128, 128, 8
    $region41: #{wrapper_hifigan_forward.1} parent=1 // pred_fallthru
      _
    // Predicated region
    $region42: #{wrapper_hifigan_forward.1} parent=1 // pred_check
      _
    $region43: #{wrapper_hifigan_forward.1} parent=1 // pred_check_branch
      %137 = sbr.rel (0) target = $region45
    $region44: #{wrapper_hifigan_forward.1} parent=1 // pred_region
      _
    $region45: #{wrapper_hifigan_forward.1} parent=1 // pred_fallthru
      _
    // Predicated region
    $region46: #{wrapper_hifigan_forward.1} parent=1 // pred_check
      _
    $region47: #{wrapper_hifigan_forward.1} parent=1 // pred_check_branch
      %139 = sbr.rel (0) target = $region49
    $region48: #{wrapper_hifigan_forward.1} parent=1 // pred_region
      %141 = vsyncadd [#allocation6], 0
      %s142 = sshll.u32 %s23, 4
      %s143 = int_to_ptr.hbm [resolvable:$true] %s142
      %s144 = sshll.u32 [#allocation5], 4
      %s145 = int_to_ptr.vmem [resolvable:$true] %s144
      %150 = dma.hbm_to_vmem [thread:$0]  %s143, 768, %s145, [#allocation6], 128, 128, 8
    $region49: #{wrapper_hifigan_forward.1} parent=1 // pred_fallthru
      _
    // Predicated region
    $region50: #{wrapper_hifigan_forward.1} parent=1 // pred_check
      _
    $region51: #{wrapper_hifigan_forward.1} parent=1 // pred_check_branch
      %152 = sbr.rel (0) target = $region53
    $region52: #{wrapper_hifigan_forward.1} parent=1 // pred_region
      _
    $region53: #{wrapper_hifigan_forward.1} parent=1 // pred_fallthru
      _
    // Predicated region
    $region54: #{wrapper_hifigan_forward.1} parent=1 // pred_check
      _
    $region55: #{wrapper_hifigan_forward.1} parent=1 // pred_check_branch
      %154 = sbr.rel (0) target = $region57
    $region56: #{wrapper_hifigan_forward.1} parent=1 // pred_region
      %156 = vsyncadd [#allocation6], 0
      %s157 = sshll.u32 %s27, 4
      %s158 = int_to_ptr.hbm [resolvable:$true] %s157
      %s159 = sshll.u32 [#allocation7], 4
      %s160 = int_to_ptr.vmem [resolvable:$true] %s159
      %165 = dma.hbm_to_vmem [thread:$0]  %s158, 768, %s160, [#allocation6], 128, 128, 8
    $region57: #{wrapper_hifigan_forward.1} parent=1 // pred_fallthru
      _
    // Predicated region
    $region58: #{wrapper_hifigan_forward.1} parent=1 // pred_check
      _
    $region59: #{wrapper_hifigan_forward.1} parent=1 // pred_check_branch
      %167 = sbr.rel (0) target = $region61
    $region60: #{wrapper_hifigan_forward.1} parent=1 // pred_region
      _
    $region61: #{wrapper_hifigan_forward.1} parent=1 // pred_fallthru
      _
    // Predicated region
    $region62: #{wrapper_hifigan_forward.1} parent=1 // pred_check
      _
    $region63: #{wrapper_hifigan_forward.1} parent=1 // pred_check_branch
      %169 = sbr.rel (0) target = $region65
    $region64: #{wrapper_hifigan_forward.1} parent=1 // pred_region
      %171 = vsyncadd [#allocation9], 0
      %s172 = sshll.u32 %s31, 4
      %s173 = int_to_ptr.hbm [resolvable:$true] %s172
      %s174 = sshll.u32 [#allocation8], 4
      %s175 = int_to_ptr.vmem [resolvable:$true] %s174
      %180 = dma.hbm_to_vmem [thread:$0]  %s173, 1280, %s175, [#allocation9], 128, 128, 8
    $region65: #{wrapper_hifigan_forward.1} parent=1 // pred_fallthru
      _
    // Predicated region
    $region66: #{wrapper_hifigan_forward.1} parent=1 // pred_check
      _
    $region67: #{wrapper_hifigan_forward.1} parent=1 // pred_check_branch
      %182 = sbr.rel (0) target = $region69
    $region68: #{wrapper_hifigan_forward.1} parent=1 // pred_region
      _
    $region69: #{wrapper_hifigan_forward.1} parent=1 // pred_fallthru
      _
    // Predicated region
    $region70: #{wrapper_hifigan_forward.1} parent=1 // pred_check
      _
    $region71: #{wrapper_hifigan_forward.1} parent=1 // pred_check_branch
      %184 = sbr.rel (0) target = $region73
    $region72: #{wrapper_hifigan_forward.1} parent=1 // pred_region
      %186 = vsyncadd [#allocation9], 0
      %s187 = sshll.u32 %s35, 4
      %s188 = int_to_ptr.hbm [resolvable:$true] %s187
      %s189 = sshll.u32 [#allocation10], 4
      %s190 = int_to_ptr.vmem [resolvable:$true] %s189
      %195 = dma.hbm_to_vmem [thread:$0]  %s188, 1280, %s190, [#allocation9], 128, 128, 8
    $region73: #{wrapper_hifigan_forward.1} parent=1 // pred_fallthru
      _
    // Predicated region
    $region74: #{wrapper_hifigan_forward.1} parent=1 // pred_check
      _
    $region75: #{wrapper_hifigan_forward.1} parent=1 // pred_check_branch
      %197 = sbr.rel (0) target = $region77
    $region76: #{wrapper_hifigan_forward.1} parent=1 // pred_region
      _
    $region77: #{wrapper_hifigan_forward.1} parent=1 // pred_fallthru
      _
    // Predicated region
    $region78: #{wrapper_hifigan_forward.1} parent=1 // pred_check
      _
    $region79: #{wrapper_hifigan_forward.1} parent=1 // pred_check_branch
      %199 = sbr.rel (0) target = $region81
    $region80: #{wrapper_hifigan_forward.1} parent=1 // pred_region
      %201 = vsyncadd [#allocation12], 0
      %s202 = sshll.u32 %s39, 4
      %s203 = int_to_ptr.hbm [resolvable:$true] %s202
      %s204 = sshll.u32 [#allocation11], 4
      %s205 = int_to_ptr.vmem [resolvable:$true] %s204
      %210 = dma.hbm_to_vmem [thread:$0]  %s203, 1280, %s205, [#allocation12], 128, 128, 8
    $region81: #{wrapper_hifigan_forward.1} parent=1 // pred_fallthru
      _
    // Predicated region
    $region82: #{wrapper_hifigan_forward.1} parent=1 // pred_check
      _
    $region83: #{wrapper_hifigan_forward.1} parent=1 // pred_check_branch
      %212 = sbr.rel (0) target = $region85
    $region84: #{wrapper_hifigan_forward.1} parent=1 // pred_region
      _
    $region85: #{wrapper_hifigan_forward.1} parent=1 // pred_fallthru
      _
    // Predicated region
    $region86: #{wrapper_hifigan_forward.1} parent=1 // pred_check
      _
    $region87: #{wrapper_hifigan_forward.1} parent=1 // pred_check_branch
      %214 = sbr.rel (0) target = $region89
    $region88: #{wrapper_hifigan_forward.1} parent=1 // pred_region
      %216 = vsyncadd [#allocation12], 0
      %s217 = sshll.u32 %s43, 4
      %s218 = int_to_ptr.hbm [resolvable:$true] %s217
      %s219 = sshll.u32 [#allocation13], 4
      %s220 = int_to_ptr.vmem [resolvable:$true] %s219
      %225 = dma.hbm_to_vmem [thread:$0]  %s218, 1280, %s220, [#allocation12], 128, 128, 8
    $region89: #{wrapper_hifigan_forward.1} parent=1 // pred_fallthru
      _
    // Predicated region
    $region90: #{wrapper_hifigan_forward.1} parent=1 // pred_check
      _
    $region91: #{wrapper_hifigan_forward.1} parent=1 // pred_check_branch
      %227 = sbr.rel (0) target = $region93
    $region92: #{wrapper_hifigan_forward.1} parent=1 // pred_region
      _
    $region93: #{wrapper_hifigan_forward.1} parent=1 // pred_fallthru
      _
    // Predicated region
    $region94: #{wrapper_hifigan_forward.1} parent=1 // pred_check
      _
    $region95: #{wrapper_hifigan_forward.1} parent=1 // pred_check_branch
      %229 = sbr.rel (0) target = $region97
    $region96: #{wrapper_hifigan_forward.1} parent=1 // pred_region
      _
    $region97: #{wrapper_hifigan_forward.1} parent=1 // pred_fallthru
      _
    // Predicated region
    $region98: #{wrapper_hifigan_forward.1} parent=1 // pred_check
      _
    $region99: #{wrapper_hifigan_forward.1} parent=1 // pred_check_branch
      %231 = sbr.rel (0) target = $region101
    $region100: #{wrapper_hifigan_forward.1} parent=1 // pred_region
      _
    $region101: #{wrapper_hifigan_forward.1} parent=1 // pred_fallthru
      _
    // Predicated region
    $region102: #{wrapper_hifigan_forward.1} parent=1 // pred_check
      _
    $region103: #{wrapper_hifigan_forward.1} parent=1 // pred_check_branch
      %233 = sbr.rel (0) target = $region105
    $region104: #{wrapper_hifigan_forward.1} parent=1 // pred_region
      _
    $region105: #{wrapper_hifigan_forward.1} parent=1 // pred_fallthru
      _
    // Predicated region
    $region106: #{wrapper_hifigan_forward.1} parent=1 // pred_check
      _
    $region107: #{wrapper_hifigan_forward.1} parent=1 // pred_check_branch
      %235 = sbr.rel (0) target = $region109
    $region108: #{wrapper_hifigan_forward.1} parent=1 // pred_region
      _
    $region109: #{wrapper_hifigan_forward.1} parent=1 // pred_fallthru
      _
    // Predicated region
    $region110: #{wrapper_hifigan_forward.1} parent=1 // pred_check
      _
    $region111: #{wrapper_hifigan_forward.1} parent=1 // pred_check_branch
      %237 = sbr.rel (0) target = $region113
    $region112: #{wrapper_hifigan_forward.1} parent=1 // pred_region
      %239 = vsyncadd [#allocation15], 0
      %s240 = sshll.u32 %s55, 4
      %s241 = int_to_ptr.hbm [resolvable:$true] %s240
      %s242 = sshll.u32 [#allocation14], 4
      %s243 = int_to_ptr.vmem [resolvable:$true] %s242
      %248 = dma.hbm_to_vmem [thread:$0]  %s241, 384, %s243, [#allocation15], 128, 128, 8
    $region113: #{wrapper_hifigan_forward.1} parent=1 // pred_fallthru
      _
    // Predicated region
    $region114: #{wrapper_hifigan_forward.1} parent=1 // pred_check
      _
    $region115: #{wrapper_hifigan_forward.1} parent=1 // pred_check_branch
      %250 = sbr.rel (0) target = $region117
    $region116: #{wrapper_hifigan_forward.1} parent=1 // pred_region
      _
    $region117: #{wrapper_hifigan_forward.1} parent=1 // pred_fallthru
      _
    // Predicated region
    $region118: #{wrapper_hifigan_forward.1} parent=1 // pred_check
      _
    $region119: #{wrapper_hifigan_forward.1} parent=1 // pred_check_branch
      %252 = sbr.rel (0) target = $region121
    $region120: #{wrapper_hifigan_forward.1} parent=1 // pred_region
      %254 = vsyncadd [#allocation15], 0
      %s255 = sshll.u32 %s59, 4
      %s256 = int_to_ptr.hbm [resolvable:$true] %s255
      %s257 = sshll.u32 [#allocation16], 4
      %s258 = int_to_ptr.vmem [resolvable:$true] %s257
      %263 = dma.hbm_to_vmem [thread:$0]  %s256, 384, %s258, [#allocation15], 128, 128, 8
    $region121: #{wrapper_hifigan_forward.1} parent=1 // pred_fallthru
      _
    // Predicated region
    $region122: #{wrapper_hifigan_forward.1} parent=1 // pred_check
      _
    $region123: #{wrapper_hifigan_forward.1} parent=1 // pred_check_branch
      %265 = sbr.rel (0) target = $region125
    $region124: #{wrapper_hifigan_forward.1} parent=1 // pred_region
      _
    $region125: #{wrapper_hifigan_forward.1} parent=1 // pred_fallthru
      _
    // Predicated region
    $region126: #{wrapper_hifigan_forward.1} parent=1 // pred_check
      _
    $region127: #{wrapper_hifigan_forward.1} parent=1 // pred_check_branch
      %267 = sbr.rel (0) target = $region129
    $region128: #{wrapper_hifigan_forward.1} parent=1 // pred_region
      %269 = vsyncadd [#allocation18], 0
      %s270 = sshll.u32 %s63, 4
      %s271 = int_to_ptr.hbm [resolvable:$true] %s270
      %s272 = sshll.u32 [#allocation17], 4
      %s273 = int_to_ptr.vmem [resolvable:$true] %s272
      %278 = dma.hbm_to_vmem [thread:$0]  %s271, 384, %s273, [#allocation18], 128, 128, 8
    $region129: #{wrapper_hifigan_forward.1} parent=1 // pred_fallthru
      _
    // Predicated region
    $region130: #{wrapper_hifigan_forward.1} parent=1 // pred_check
      _
    $region131: #{wrapper_hifigan_forward.1} parent=1 // pred_check_branch
      %280 = sbr.rel (0) target = $region133
    $region132: #{wrapper_hifigan_forward.1} parent=1 // pred_region
      _
    $region133: #{wrapper_hifigan_forward.1} parent=1 // pred_fallthru
      _
    // Predicated region
    $region134: #{wrapper_hifigan_forward.1} parent=1 // pred_check
      _
    $region135: #{wrapper_hifigan_forward.1} parent=1 // pred_check_branch
      %282 = sbr.rel (0) target = $region137
    $region136: #{wrapper_hifigan_forward.1} parent=1 // pred_region
      %284 = vsyncadd [#allocation18], 0
      %s285 = sshll.u32 %s67, 4
      %s286 = int_to_ptr.hbm [resolvable:$true] %s285
      %s287 = sshll.u32 [#allocation19], 4
      %s288 = int_to_ptr.vmem [resolvable:$true] %s287
      %293 = dma.hbm_to_vmem [thread:$0]  %s286, 384, %s288, [#allocation18], 128, 128, 8
    $region137: #{wrapper_hifigan_forward.1} parent=1 // pred_fallthru
      _
    // Predicated region
    $region138: #{wrapper_hifigan_forward.1} parent=1 // pred_check
      _
    $region139: #{wrapper_hifigan_forward.1} parent=1 // pred_check_branch
      %295 = sbr.rel (0) target = $region141
    $region140: #{wrapper_hifigan_forward.1} parent=1 // pred_region
      _
    $region141: #{wrapper_hifigan_forward.1} parent=1 // pred_fallthru
      _
    // Predicated region
    $region142: #{wrapper_hifigan_forward.1} parent=1 // pred_check
      _
    $region143: #{wrapper_hifigan_forward.1} parent=1 // pred_check_branch
      %297 = sbr.rel (0) target = $region145
    $region144: #{wrapper_hifigan_forward.1} parent=1 // pred_region
      _
    $region145: #{wrapper_hifigan_forward.1} parent=1 // pred_fallthru
      _
    // Predicated region
    $region146: #{wrapper_hifigan_forward.1} parent=1 // pred_check
      _
    $region147: #{wrapper_hifigan_forward.1} parent=1 // pred_check_branch
      %299 = sbr.rel (0) target = $region149
    $region148: #{wrapper_hifigan_forward.1} parent=1 // pred_region
      _
    $region149: #{wrapper_hifigan_forward.1} parent=1 // pred_fallthru
      _
    // Predicated region
    $region150: #{wrapper_hifigan_forward.1} parent=1 // pred_check
      _
    $region151: #{wrapper_hifigan_forward.1} parent=1 // pred_check_branch
      %301 = sbr.rel (0) target = $region153
    $region152: #{wrapper_hifigan_forward.1} parent=1 // pred_region
      _
    $region153: #{wrapper_hifigan_forward.1} parent=1 // pred_fallthru
      _
    // Predicated region
    $region154: #{wrapper_hifigan_forward.1} parent=1 // pred_check
      _
    $region155: #{wrapper_hifigan_forward.1} parent=1 // pred_check_branch
      %303 = sbr.rel (0) target = $region157
    $region156: #{wrapper_hifigan_forward.1} parent=1 // pred_region
      _
    $region157: #{wrapper_hifigan_forward.1} parent=1 // pred_fallthru
      _
    // Predicated region
    $region158: #{wrapper_hifigan_forward.1} parent=1 // pred_check
      _
    $region159: #{wrapper_hifigan_forward.1} parent=1 // pred_check_branch
      %305 = sbr.rel (0) target = $region161
    $region160: #{wrapper_hifigan_forward.1} parent=1 // pred_region
      %307 = vsyncadd [#allocation21], 0
      %s308 = sshll.u32 %s79, 4
      %s309 = int_to_ptr.hbm [resolvable:$true] %s308
      %s310 = sshll.u32 [#allocation20], 4
      %s311 = int_to_ptr.vmem [resolvable:$true] %s310
      %316 = dma.hbm_to_vmem [thread:$0]  %s309, 640, %s311, [#allocation21], 128, 128, 8
    $region161: #{wrapper_hifigan_forward.1} parent=1 // pred_fallthru
      _
    // Predicated region
    $region162: #{wrapper_hifigan_forward.1} parent=1 // pred_check
      _
    $region163: #{wrapper_hifigan_forward.1} parent=1 // pred_check_branch
      %318 = sbr.rel (0) target = $region165
    $region164: #{wrapper_hifigan_forward.1} parent=1 // pred_region
      _
    $region165: #{wrapper_hifigan_forward.1} parent=1 // pred_fallthru
      _
    // Predicated region
    $region166: #{wrapper_hifigan_forward.1} parent=1 // pred_check
      _
    $region167: #{wrapper_hifigan_forward.1} parent=1 // pred_check_branch
      %320 = sbr.rel (0) target = $region169
    $region168: #{wrapper_hifigan_forward.1} parent=1 // pred_region
      %322 = vsyncadd [#allocation21], 0
      %s323 = sshll.u32 %s83, 4
      %s324 = int_to_ptr.hbm [resolvable:$true] %s323
      %s325 = sshll.u32 [#allocation22], 4
      %s326 = int_to_ptr.vmem [resolvable:$true] %s325
      %331 = dma.hbm_to_vmem [thread:$0]  %s324, 640, %s326, [#allocation21], 128, 128, 8
    $region169: #{wrapper_hifigan_forward.1} parent=1 // pred_fallthru
      _
    // Predicated region
    $region170: #{wrapper_hifigan_forward.1} parent=1 // pred_check
      _
    $region171: #{wrapper_hifigan_forward.1} parent=1 // pred_check_branch
      %333 = sbr.rel (0) target = $region173
    $region172: #{wrapper_hifigan_forward.1} parent=1 // pred_region
      _
    $region173: #{wrapper_hifigan_forward.1} parent=1 // pred_fallthru
      _
    // Predicated region
    $region174: #{wrapper_hifigan_forward.1} parent=1 // pred_check
      _
    $region175: #{wrapper_hifigan_forward.1} parent=1 // pred_check_branch
      %335 = sbr.rel (0) target = $region177
    $region176: #{wrapper_hifigan_forward.1} parent=1 // pred_region
      _
    $region177: #{wrapper_hifigan_forward.1} parent=1 // pred_fallthru
      _
    // Predicated region
    $region178: #{wrapper_hifigan_forward.1} parent=1 // pred_check
      _
    $region179: #{wrapper_hifigan_forward.1} parent=1 // pred_check_branch
      %337 = sbr.rel (0) target = $region181
    $region180: #{wrapper_hifigan_forward.1} parent=1 // pred_region
      _
    $region181: #{wrapper_hifigan_forward.1} parent=1 // pred_fallthru
      _
    // Predicated region
    $region182: #{wrapper_hifigan_forward.1} parent=1 // pred_check
      _
    $region183: #{wrapper_hifigan_forward.1} parent=1 // pred_check_branch
      %339 = sbr.rel (0) target = $region185
    $region184: #{wrapper_hifigan_forward.1} parent=1 // pred_region
      %341 = dma.done [#allocation4], 768
    $region185: #{wrapper_hifigan_forward.1} parent=1 // pred_fallthru
      _
    // Predicated region
    $region186: #{wrapper_hifigan_forward.1} parent=1 // pred_check
      _
    $region187: #{wrapper_hifigan_forward.1} parent=1 // pred_check_branch
      %343 = sbr.rel (0) target = $region189
    $region188: #{wrapper_hifigan_forward.1} parent=1 // pred_region
      %345 = dma.done [#allocation6], 768
    $region189: #{wrapper_hifigan_forward.1} parent=1 // pred_fallthru
      _
    // Predicated region
    $region190: #{wrapper_hifigan_forward.1} parent=1 // pred_check
      _
    $region191: #{wrapper_hifigan_forward.1} parent=1 // pred_check_branch
      %347 = sbr.rel (0) target = $region193
    $region192: #{wrapper_hifigan_forward.1} parent=1 // pred_region
      %349 = dma.done [#allocation6], 768
    $region193: #{wrapper_hifigan_forward.1} parent=1 // pred_fallthru
      _
    // Predicated region
    $region194: #{wrapper_hifigan_forward.1} parent=1 // pred_check
      _
    $region195: #{wrapper_hifigan_forward.1} parent=1 // pred_check_branch
      %351 = sbr.rel (0) target = $region197
    $region196: #{wrapper_hifigan_forward.1} parent=1 // pred_region
      %353 = dma.done [#allocation9], 1280
    $region197: #{wrapper_hifigan_forward.1} parent=1 // pred_fallthru
      _
    // Predicated region
    $region198: #{wrapper_hifigan_forward.1} parent=1 // pred_check
      _
    $region199: #{wrapper_hifigan_forward.1} parent=1 // pred_check_branch
      %355 = sbr.rel (0) target = $region201
    $region200: #{wrapper_hifigan_forward.1} parent=1 // pred_region
      %357 = dma.done [#allocation9], 1280
    $region201: #{wrapper_hifigan_forward.1} parent=1 // pred_fallthru
      _
    // Predicated region
    $region202: #{wrapper_hifigan_forward.1} parent=1 // pred_check
      _
    $region203: #{wrapper_hifigan_forward.1} parent=1 // pred_check_branch
      %359 = sbr.rel (0) target = $region205
    $region204: #{wrapper_hifigan_forward.1} parent=1 // pred_region
      %361 = dma.done [#allocation12], 1280
    $region205: #{wrapper_hifigan_forward.1} parent=1 // pred_fallthru
      _
    // Predicated region
    $region206: #{wrapper_hifigan_forward.1} parent=1 // pred_check
      _
    $region207: #{wrapper_hifigan_forward.1} parent=1 // pred_check_branch
      %363 = sbr.rel (0) target = $region209
    $region208: #{wrapper_hifigan_forward.1} parent=1 // pred_region
      %365 = dma.done [#allocation12], 1280
    $region209: #{wrapper_hifigan_forward.1} parent=1 // pred_fallthru
      _
    // Predicated region
    $region210: #{wrapper_hifigan_forward.1} parent=1 // pred_check
      _
    $region211: #{wrapper_hifigan_forward.1} parent=1 // pred_check_branch
      %367 = sbr.rel (0) target = $region213
    $region212: #{wrapper_hifigan_forward.1} parent=1 // pred_region
      %369 = dma.done [#allocation15], 384
    $region213: #{wrapper_hifigan_forward.1} parent=1 // pred_fallthru
      _
    // Predicated region
    $region214: #{wrapper_hifigan_forward.1} parent=1 // pred_check
      _
    $region215: #{wrapper_hifigan_forward.1} parent=1 // pred_check_branch
      %371 = sbr.rel (0) target = $region217
    $region216: #{wrapper_hifigan_forward.1} parent=1 // pred_region
      %373 = dma.done [#allocation15], 384
    $region217: #{wrapper_hifigan_forward.1} parent=1 // pred_fallthru
      _
    // Predicated region
    $region218: #{wrapper_hifigan_forward.1} parent=1 // pred_check
      _
    $region219: #{wrapper_hifigan_forward.1} parent=1 // pred_check_branch
      %375 = sbr.rel (0) target = $region221
    $region220: #{wrapper_hifigan_forward.1} parent=1 // pred_region
      %377 = dma.done [#allocation18], 384
    $region221: #{wrapper_hifigan_forward.1} parent=1 // pred_fallthru
      _
    // Predicated region
    $region222: #{wrapper_hifigan_forward.1} parent=1 // pred_check
      _
    $region223: #{wrapper_hifigan_forward.1} parent=1 // pred_check_branch
      %379 = sbr.rel (0) target = $region225
    $region224: #{wrapper_hifigan_forward.1} parent=1 // pred_region
      %381 = dma.done [#allocation18], 384
    $region225: #{wrapper_hifigan_forward.1} parent=1 // pred_fallthru
      _
    // Predicated region
    $region226: #{wrapper_hifigan_forward.1} parent=1 // pred_check
      _
    $region227: #{wrapper_hifigan_forward.1} parent=1 // pred_check_branch
      %383 = sbr.rel (0) target = $region229
    $region228: #{wrapper_hifigan_forward.1} parent=1 // pred_region
      %385 = dma.done [#allocation21], 640
    $region229: #{wrapper_hifigan_forward.1} parent=1 // pred_fallthru
      _
    // Predicated region
    $region230: #{wrapper_hifigan_forward.1} parent=1 // pred_check
      _
    $region231: #{wrapper_hifigan_forward.1} parent=1 // pred_check_branch
      %387 = sbr.rel (0) target = $region233
    $region232: #{wrapper_hifigan_forward.1} parent=1 // pred_region
      %389 = dma.done [#allocation21], 640
    $region233: #{wrapper_hifigan_forward.1} parent=1 // pred_fallthru
      _
    %v390 = vld [vmem:[%s1] sm:$0xff]
    %v391 = vld [vmem:[%s3] sm:$0xff]
    %v392 = vld [vmem:[%s3 + $0x8] sm:$0xff]
    %v393 = vld [vmem:[%s3 + $0x10] sm:$0xff]
    %v394 = vld [vmem:[%s3 + $0x18] sm:$0xff]
    %s395 = scalar_lea.vmem %s3, 32
    %v396 = vld [vmem:[%s395] sm:$0xff]
    %v397 = vld [vmem:[%s395 + $0x8] sm:$0xff]
    %v398 = vld [vmem:[%s395 + $0x10] sm:$0xff]
    %v399 = vld [vmem:[%s395 + $0x18] sm:$0xff]
    %vm402 = vcmask 1041408
    %v403 = vrot.slane 0.0, 6
    %v404 = vrot.slane %v390, 6
    %v405 = vsel %vm402, %v403, %v404
    %vm406 = vcmask 261120
    %v407 = vsel %vm406, %v405, 0
    %409 = vmatpush.msra.mxu0 0.0
    %410 = vmatpush.msra.mxu0 0.0
    %411 = vmatpush.msra.mxu0 0.0
    %412 = vmatpush.msra.mxu0 0.0
    %413 = vmatpush.msra.mxu0 0.0
    %414 = vmatpush.msra.mxu0 0.0
    %415 = vmatpush.msra.mxu0 0.0
    %416 = vmatpush.msra.mxu0 0.0
    %417 = vmatpush.msra.mxu0 0.0
    %418 = vmatpush.msra.mxu0 0.0
    %419 = vmatpush.msra.mxu0 0.0
    %420 = vmatpush.msra.mxu0 0.0
    %421 = vmatpush.msra.mxu0 %v399
    %422 = vmatpush.msra.mxu0 %v398
    %423 = vmatpush.msra.mxu0 %v397
    %424 = vmatpush.msra.mxu0 %v396
    %425 = vmatmul.f32.gmra.mxu0 %v407
    %v426 = vpop.f32.mrf.mxu0
    %v427 = vadd.f32 0.0, %v426
    %428 = vdwg.mxu0
    %vm429 = vcmask 1042432
    %v430 = vrot.slane 0.0, 5
    %v431 = vrot.slane %v390, 5
    %v432 = vsel %vm429, %v430, %v431
    %v433 = vsel %vm406, %v432, 0
    %435 = vmatpush.msra.mxu0 0.0
    %436 = vmatpush.msra.mxu0 0.0
    %437 = vmatpush.msra.mxu0 0.0
    %438 = vmatpush.msra.mxu0 0.0
    %439 = vmatpush.msra.mxu0 0.0
    %440 = vmatpush.msra.mxu0 0.0
    %441 = vmatpush.msra.mxu0 0.0
    %442 = vmatpush.msra.mxu0 0.0
    %443 = vmatpush.msra.mxu0 0.0
    %444 = vmatpush.msra.mxu0 0.0
    %445 = vmatpush.msra.mxu0 0.0
    %446 = vmatpush.msra.mxu0 0.0
    %447 = vmatpush.msra.mxu0 %v394
    %448 = vmatpush.msra.mxu0 %v393
    %449 = vmatpush.msra.mxu0 %v392
    %450 = vmatpush.msra.mxu0 %v391
    %451 = vmatmul.f32.gmra.mxu0 %v433
    %v452 = vpop.f32.mrf.mxu0
    %v453 = vadd.f32 %v427, %v452
    %454 = vdwg.mxu0
    %s455 = scalar_lea.vmem %s3, 64
    %v456 = vld [vmem:[%s455] sm:$0xff]
    %v457 = vld [vmem:[%s455 + $0x8] sm:$0xff]
    %v458 = vld [vmem:[%s455 + $0x10] sm:$0xff]
    %v459 = vld [vmem:[%s455 + $0x18] sm:$0xff]
    %vm460 = vcmask 1040384
    %v461 = vrot.slane 0.0, 7
    %v462 = vrot.slane %v390, 7
    %v463 = vsel %vm460, %v461, %v462
    %v464 = vsel %vm406, %v463, 0
    %466 = vmatpush.msra.mxu0 0.0
    %467 = vmatpush.msra.mxu0 0.0
    %468 = vmatpush.msra.mxu0 0.0
    %469 = vmatpush.msra.mxu0 0.0
    %470 = vmatpush.msra.mxu0 0.0
    %471 = vmatpush.msra.mxu0 0.0
    %472 = vmatpush.msra.mxu0 0.0
    %473 = vmatpush.msra.mxu0 0.0
    %474 = vmatpush.msra.mxu0 0.0
    %475 = vmatpush.msra.mxu0 0.0
    %476 = vmatpush.msra.mxu0 0.0
    %477 = vmatpush.msra.mxu0 0.0
    %478 = vmatpush.msra.mxu0 %v459
    %479 = vmatpush.msra.mxu0 %v458
    %480 = vmatpush.msra.mxu0 %v457
    %481 = vmatpush.msra.mxu0 %v456
    %482 = vmatmul.f32.gmra.mxu0 %v464
    %v483 = vpop.f32.mrf.mxu0
    %v484 = vadd.f32 0.0, %v483
    %485 = vdwg.mxu0
    %v486 = vadd.f32 %v453, %v484
    %s487 = scalar_lea.vmem %s3, 96
    %v488 = vld [vmem:[%s487] sm:$0xff]
    %v489 = vld [vmem:[%s487 + $0x8] sm:$0xff]
    %v490 = vld [vmem:[%s487 + $0x10] sm:$0xff]
    %v491 = vld [vmem:[%s487 + $0x18] sm:$0xff]
    %v492 = vsel %vm406, %v390, 0
    %494 = vmatpush.msra.mxu0 0.0
    %495 = vmatpush.msra.mxu0 0.0
    %496 = vmatpush.msra.mxu0 0.0
    %497 = vmatpush.msra.mxu0 0.0
    %498 = vmatpush.msra.mxu0 0.0
    %499 = vmatpush.msra.mxu0 0.0
    %500 = vmatpush.msra.mxu0 0.0
    %501 = vmatpush.msra.mxu0 0.0
    %502 = vmatpush.msra.mxu0 0.0
    %503 = vmatpush.msra.mxu0 0.0
    %504 = vmatpush.msra.mxu0 0.0
    %505 = vmatpush.msra.mxu0 0.0
    %506 = vmatpush.msra.mxu0 %v491
    %507 = vmatpush.msra.mxu0 %v490
    %508 = vmatpush.msra.mxu0 %v489
    %509 = vmatpush.msra.mxu0 %v488
    %510 = vmatmul.f32.gmra.mxu0 %v492
    %v511 = vpop.f32.mrf.mxu0
    %v512 = vadd.f32 0.0, %v511
    %513 = vdwg.mxu0
    %v514 = vadd.f32 %v486, %v512
    %s515 = scalar_lea.vmem %s3, 128
    %v516 = vld [vmem:[%s515] sm:$0xff]
    %v517 = vld [vmem:[%s515 + $0x8] sm:$0xff]
    %v518 = vld [vmem:[%s515 + $0x10] sm:$0xff]
    %v519 = vld [vmem:[%s515 + $0x18] sm:$0xff]
    %vm520 = vcmask 1046528
    %v521 = vrot.slane %v390, 1
    %v522 = vrot.slane 0.0, 1
    %v523 = vsel %vm520, %v521, %v522
    %v524 = vsel %vm406, %v523, 0
    %526 = vmatpush.msra.mxu0 0.0
    %527 = vmatpush.msra.mxu0 0.0
    %528 = vmatpush.msra.mxu0 0.0
    %529 = vmatpush.msra.mxu0 0.0
    %530 = vmatpush.msra.mxu0 0.0
    %531 = vmatpush.msra.mxu0 0.0
    %532 = vmatpush.msra.mxu0 0.0
    %533 = vmatpush.msra.mxu0 0.0
    %534 = vmatpush.msra.mxu0 0.0
    %535 = vmatpush.msra.mxu0 0.0
    %536 = vmatpush.msra.mxu0 0.0
    %537 = vmatpush.msra.mxu0 0.0
    %538 = vmatpush.msra.mxu0 %v519
    %539 = vmatpush.msra.mxu0 %v518
    %540 = vmatpush.msra.mxu0 %v517
    %541 = vmatpush.msra.mxu0 %v516
    %542 = vmatmul.f32.gmra.mxu0 %v524
    %v543 = vpop.f32.mrf.mxu0
    %v544 = vadd.f32 0.0, %v543
    %545 = vdwg.mxu0
    %v546 = vadd.f32 %v514, %v544
    %s547 = scalar_lea.vmem %s3, 160
    %v548 = vld [vmem:[%s547] sm:$0xff]
    %v549 = vld [vmem:[%s547 + $0x8] sm:$0xff]
    %v550 = vld [vmem:[%s547 + $0x10] sm:$0xff]
    %v551 = vld [vmem:[%s547 + $0x18] sm:$0xff]
    %vm552 = vcmask 1045504
    %v553 = vrot.slane %v390, 2
    %v554 = vrot.slane 0.0, 2
    %v555 = vsel %vm552, %v553, %v554
    %v556 = vsel %vm406, %v555, 0
    %558 = vmatpush.msra.mxu0 0.0
    %559 = vmatpush.msra.mxu0 0.0
    %560 = vmatpush.msra.mxu0 0.0
    %561 = vmatpush.msra.mxu0 0.0
    %562 = vmatpush.msra.mxu0 0.0
    %563 = vmatpush.msra.mxu0 0.0
    %564 = vmatpush.msra.mxu0 0.0
    %565 = vmatpush.msra.mxu0 0.0
    %566 = vmatpush.msra.mxu0 0.0
    %567 = vmatpush.msra.mxu0 0.0
    %568 = vmatpush.msra.mxu0 0.0
    %569 = vmatpush.msra.mxu0 0.0
    %570 = vmatpush.msra.mxu0 %v551
    %571 = vmatpush.msra.mxu0 %v550
    %572 = vmatpush.msra.mxu0 %v549
    %573 = vmatpush.msra.mxu0 %v548
    %574 = vmatmul.f32.gmra.mxu0 %v556
    %v575 = vpop.f32.mrf.mxu0
    %v576 = vadd.f32 0.0, %v575
    %577 = vdwg.mxu0
    %v578 = vadd.f32 %v546, %v576
    %s579 = scalar_lea.vmem %s3, 192
    %v580 = vld [vmem:[%s579] sm:$0xff]
    %v581 = vld [vmem:[%s579 + $0x8] sm:$0xff]
    %v582 = vld [vmem:[%s579 + $0x10] sm:$0xff]
    %v583 = vld [vmem:[%s579 + $0x18] sm:$0xff]
    %vm584 = vcmask 1044480
    %v585 = vrot.slane %v390, 3
    %v586 = vrot.slane 0.0, 3
    %v587 = vsel %vm584, %v585, %v586
    %v588 = vsel %vm406, %v587, 0
    %590 = vmatpush.msra.mxu0 0.0
    %591 = vmatpush.msra.mxu0 0.0
    %592 = vmatpush.msra.mxu0 0.0
    %593 = vmatpush.msra.mxu0 0.0
    %594 = vmatpush.msra.mxu0 0.0
    %595 = vmatpush.msra.mxu0 0.0
    %596 = vmatpush.msra.mxu0 0.0
    %597 = vmatpush.msra.mxu0 0.0
    %598 = vmatpush.msra.mxu0 0.0
    %599 = vmatpush.msra.mxu0 0.0
    %600 = vmatpush.msra.mxu0 0.0
    %601 = vmatpush.msra.mxu0 0.0
    %602 = vmatpush.msra.mxu0 %v583
    %603 = vmatpush.msra.mxu0 %v582
    %604 = vmatpush.msra.mxu0 %v581
    %605 = vmatpush.msra.mxu0 %v580
    %606 = vmatmul.f32.gmra.mxu0 %v588
    %v607 = vpop.f32.mrf.mxu0
    %v608 = vadd.f32 0.0, %v607
    %609 = vdwg.mxu0
    %v610 = vadd.f32 %v578, %v608
    %v611 = vld [vmem:[%s5] sm:$0x1]
    %v613 = vperm.slane %v611, 0
    %v615 = vadd.f32 %v610, %v613
    %vm616 = vcmp.gt.f32.partialorder %v615, 0.0
    %v617 = vmul.f32 %v615, 0.1
    %v618 = vsel %vm616, %v615, %v617
    %s619 = scalar_lea.vmem %s7, 32
    %v620 = vld [vmem:[%s619] sm:$0xff]
    %v621 = vld [vmem:[%s619 + $0x8] sm:$0xff]
    %v622 = vld [vmem:[%s619 + $0x10] sm:$0xff]
    %v623 = vld [vmem:[%s619 + $0x18] sm:$0xff]
    %s624 = scalar_lea.vmem %s7, 96
    %v625 = vld [vmem:[%s624] sm:$0xff]
    %v626 = vld [vmem:[%s624 + $0x8] sm:$0xff]
    %v627 = vld [vmem:[%s624 + $0x10] sm:$0xff]
    %v628 = vld [vmem:[%s624 + $0x18] sm:$0xff]
    %v630 = vrot.slane %v618, 7
    %v631 = vsel %vm460, %v461, %v630
    %v632 = vsel %vm406, %v631, 0
    %634 = vmatpush.msra.mxu0 0.0
    %635 = vmatpush.msra.mxu0 0.0
    %636 = vmatpush.msra.mxu0 0.0
    %637 = vmatpush.msra.mxu0 0.0
    %638 = vmatpush.msra.mxu0 0.0
    %639 = vmatpush.msra.mxu0 0.0
    %640 = vmatpush.msra.mxu0 0.0
    %641 = vmatpush.msra.mxu0 0.0
    %642 = vmatpush.msra.mxu0 0.0
    %643 = vmatpush.msra.mxu0 0.0
    %644 = vmatpush.msra.mxu0 0.0
    %645 = vmatpush.msra.mxu0 0.0
    %646 = vmatpush.msra.mxu0 %v628
    %647 = vmatpush.msra.mxu0 %v627
    %648 = vmatpush.msra.mxu0 %v626
    %649 = vmatpush.msra.mxu0 %v625
    %650 = vmatmul.f32.gmra.mxu0 %v632
    %v651 = vpop.f32.mrf.mxu0
    %v652 = vadd.f32 0.0, %v651
    %653 = vdwg.mxu0
    %v654 = vsel %vm406, %v618, 0
    %656 = vmatpush.msra.mxu0 0.0
    %657 = vmatpush.msra.mxu0 0.0
    %658 = vmatpush.msra.mxu0 0.0
    %659 = vmatpush.msra.mxu0 0.0
    %660 = vmatpush.msra.mxu0 0.0
    %661 = vmatpush.msra.mxu0 0.0
    %662 = vmatpush.msra.mxu0 0.0
    %663 = vmatpush.msra.mxu0 0.0
    %664 = vmatpush.msra.mxu0 0.0
    %665 = vmatpush.msra.mxu0 0.0
    %666 = vmatpush.msra.mxu0 0.0
    %667 = vmatpush.msra.mxu0 0.0
    %668 = vmatpush.msra.mxu0 %v623
    %669 = vmatpush.msra.mxu0 %v622
    %670 = vmatpush.msra.mxu0 %v621
    %671 = vmatpush.msra.mxu0 %v620
    %672 = vmatmul.f32.gmra.mxu0 %v654
    %v673 = vpop.f32.mrf.mxu0
    %v674 = vadd.f32 %v652, %v673
    %675 = vdwg.mxu0
    %v676 = vld [vmem:[%s7] sm:$0xff]
    %v677 = vld [vmem:[%s7 + $0x8] sm:$0xff]
    %v678 = vld [vmem:[%s7 + $0x10] sm:$0xff]
    %v679 = vld [vmem:[%s7 + $0x18] sm:$0xff]
    %s680 = scalar_lea.vmem %s7, 64
    %v681 = vld [vmem:[%s680] sm:$0xff]
    %v682 = vld [vmem:[%s680 + $0x8] sm:$0xff]
    %v683 = vld [vmem:[%s680 + $0x10] sm:$0xff]
    %v684 = vld [vmem:[%s680 + $0x18] sm:$0xff]
    %685 = vmatpush.msra.mxu0 0.0
    %686 = vmatpush.msra.mxu0 0.0
    %687 = vmatpush.msra.mxu0 0.0
    %688 = vmatpush.msra.mxu0 0.0
    %689 = vmatpush.msra.mxu0 0.0
    %690 = vmatpush.msra.mxu0 0.0
    %691 = vmatpush.msra.mxu0 0.0
    %692 = vmatpush.msra.mxu0 0.0
    %693 = vmatpush.msra.mxu0 0.0
    %694 = vmatpush.msra.mxu0 0.0
    %695 = vmatpush.msra.mxu0 0.0
    %696 = vmatpush.msra.mxu0 0.0
    %697 = vmatpush.msra.mxu0 %v684
    %698 = vmatpush.msra.mxu0 %v683
    %699 = vmatpush.msra.mxu0 %v682
    %700 = vmatpush.msra.mxu0 %v681
    %701 = vmatmul.f32.gmra.mxu0 %v654
    %v702 = vpop.f32.mrf.mxu0
    %v703 = vadd.f32 0.0, %v702
    %704 = vdwg.mxu0
    %v705 = vrot.slane %v618, 1
    %v706 = vsel %vm520, %v705, %v522
    %v707 = vsel %vm406, %v706, 0
    %709 = vmatpush.msra.mxu0 0.0
    %710 = vmatpush.msra.mxu0 0.0
    %711 = vmatpush.msra.mxu0 0.0
    %712 = vmatpush.msra.mxu0 0.0
    %713 = vmatpush.msra.mxu0 0.0
    %714 = vmatpush.msra.mxu0 0.0
    %715 = vmatpush.msra.mxu0 0.0
    %716 = vmatpush.msra.mxu0 0.0
    %717 = vmatpush.msra.mxu0 0.0
    %718 = vmatpush.msra.mxu0 0.0
    %719 = vmatpush.msra.mxu0 0.0
    %720 = vmatpush.msra.mxu0 0.0
    %721 = vmatpush.msra.mxu0 %v679
    %722 = vmatpush.msra.mxu0 %v678
    %723 = vmatpush.msra.mxu0 %v677
    %724 = vmatpush.msra.mxu0 %v676
    %725 = vmatmul.f32.gmra.mxu0 %v707
    %v726 = vpop.f32.mrf.mxu0
    %v727 = vadd.f32 %v703, %v726
    %728 = vdwg.mxu0
    %v729 = vld [vmem:[%s11] sm:$0xff]
    %v730 = vld [vmem:[%s11 + $0x8] sm:$0xff]
    %v731 = vld [vmem:[%s13] sm:$0xff]
    %v732 = vld [vmem:[%s13 + $0x8] sm:$0xff]
    %vm733 = vcmask 64512
    %v735 = vsel %vm733, %v731, 0
    %v738 = vsel %vm733, %v732, 0
    %740 = vmatpush.msra.mxu0 0.0
    %741 = vmatpush.msra.mxu0 0.0
    %742 = vmatpush.msra.mxu0 0.0
    %743 = vmatpush.msra.mxu0 0.0
    %744 = vmatpush.msra.mxu0 0.0
    %745 = vmatpush.msra.mxu0 0.0
    %746 = vmatpush.msra.mxu0 0.0
    %747 = vmatpush.msra.mxu0 0.0
    %748 = vmatpush.msra.mxu0 0.0
    %749 = vmatpush.msra.mxu0 0.0
    %750 = vmatpush.msra.mxu0 0.0
    %751 = vmatpush.msra.mxu0 0.0
    %752 = vmatpush.msra.mxu0 0.0
    %753 = vmatpush.msra.mxu0 0.0
    %754 = vmatpush.msra.mxu0 0.0
    %755 = vmatpush.msra.mxu0 %v727
    %756 = vmatmul.f32.gmra.mxu0 %v735
    %v757 = vpop.f32.mrf.mxu0
    %v758 = vadd.f32 0.0, %v757
    %759 = vmatmul.f32.gmra.mxu0 %v738
    %v760 = vpop.f32.mrf.mxu0
    %v761 = vadd.f32 0.0, %v760
    %762 = vdwg.mxu0
    %v764 = vsel %vm733, %v729, 0
    %v767 = vsel %vm733, %v730, 0
    %769 = vmatpush.msra.mxu0 0.0
    %770 = vmatpush.msra.mxu0 0.0
    %771 = vmatpush.msra.mxu0 0.0
    %772 = vmatpush.msra.mxu0 0.0
    %773 = vmatpush.msra.mxu0 0.0
    %774 = vmatpush.msra.mxu0 0.0
    %775 = vmatpush.msra.mxu0 0.0
    %776 = vmatpush.msra.mxu0 0.0
    %777 = vmatpush.msra.mxu0 0.0
    %778 = vmatpush.msra.mxu0 0.0
    %779 = vmatpush.msra.mxu0 0.0
    %780 = vmatpush.msra.mxu0 0.0
    %781 = vmatpush.msra.mxu0 0.0
    %782 = vmatpush.msra.mxu0 0.0
    %783 = vmatpush.msra.mxu0 0.0
    %784 = vmatpush.msra.mxu0 %v674
    %785 = vmatmul.f32.gmra.mxu0 %v764
    %v786 = vpop.f32.mrf.mxu0
    %v787 = vadd.f32 %v758, %v786
    %788 = vmatmul.f32.gmra.mxu0 %v767
    %v789 = vpop.f32.mrf.mxu0
    %v790 = vadd.f32 %v761, %v789
    %791 = vdwg.mxu0
    %v792 = vld [vmem:[%s9] sm:$0x1]
    %v794 = vperm.slane %v792, 0
    %v796 = vadd.f32 %v787, %v794
    %v797 = vadd.f32 %v790, %v794
    %vm798 = vcmp.gt.f32.partialorder %v796, 0.0
    %vm799 = vcmp.gt.f32.partialorder %v797, 0.0
    %v800 = vmul.f32 %v796, 0.1
    %v801 = vmul.f32 %v797, 0.1
    %v802 = vsel %vm798, %v796, %v800
    %v803 = vsel %vm799, %v797, %v801
    %v804 = vld [vmem:[%s15] sm:$0xff]
    %v805 = vld [vmem:[%s15 + $0x8] sm:$0xff]
    %s806 = scalar_lea.vmem %s15, 16
    %v807 = vld [vmem:[%s806] sm:$0xff]
    %v808 = vld [vmem:[%s806 + $0x8] sm:$0xff]
    %vm809 = vcmask 130048
    %v811 = vsel %vm809, %v802, 0
    %v814 = vsel %vm809, %v803, 0
    %816 = vmatpush.msra.mxu0 0.0
    %817 = vmatpush.msra.mxu0 0.0
    %818 = vmatpush.msra.mxu0 0.0
    %819 = vmatpush.msra.mxu0 0.0
    %820 = vmatpush.msra.mxu0 0.0
    %821 = vmatpush.msra.mxu0 0.0
    %822 = vmatpush.msra.mxu0 0.0
    %823 = vmatpush.msra.mxu0 0.0
    %824 = vmatpush.msra.mxu0 0.0
    %825 = vmatpush.msra.mxu0 0.0
    %826 = vmatpush.msra.mxu0 0.0
    %827 = vmatpush.msra.mxu0 0.0
    %828 = vmatpush.msra.mxu0 0.0
    %829 = vmatpush.msra.mxu0 0.0
    %830 = vmatpush.msra.mxu0 %v808
    %831 = vmatpush.msra.mxu0 %v807
    %832 = vmatmul.f32.gmra.mxu0 %v811
    %v833 = vpop.f32.mrf.mxu0
    %v834 = vadd.f32 0.0, %v833
    %835 = vmatmul.f32.gmra.mxu0 %v814
    %v836 = vpop.f32.mrf.mxu0
    %v837 = vadd.f32 0.0, %v836
    %838 = vdwg.mxu0
    %v839 = vrot.slane %v802, 7
    %v840 = vsel %vm460, %v461, %v839
    %v841 = vrot.slane %v803, 7
    %v842 = vsel %vm460, %v839, %v841
    %v843 = vsel %vm809, %v840, 0
    %v845 = vsel %vm809, %v842, 0
    %847 = vmatpush.msra.mxu0 0.0
    %848 = vmatpush.msra.mxu0 0.0
    %849 = vmatpush.msra.mxu0 0.0
    %850 = vmatpush.msra.mxu0 0.0
    %851 = vmatpush.msra.mxu0 0.0
    %852 = vmatpush.msra.mxu0 0.0
    %853 = vmatpush.msra.mxu0 0.0
    %854 = vmatpush.msra.mxu0 0.0
    %855 = vmatpush.msra.mxu0 0.0
    %856 = vmatpush.msra.mxu0 0.0
    %857 = vmatpush.msra.mxu0 0.0
    %858 = vmatpush.msra.mxu0 0.0
    %859 = vmatpush.msra.mxu0 0.0
    %860 = vmatpush.msra.mxu0 0.0
    %861 = vmatpush.msra.mxu0 %v805
    %862 = vmatpush.msra.mxu0 %v804
    %863 = vmatmul.f32.gmra.mxu0 %v843
    %v864 = vpop.f32.mrf.mxu0
    %v865 = vadd.f32 %v834, %v864
    %866 = vmatmul.f32.gmra.mxu0 %v845
    %v867 = vpop.f32.mrf.mxu0
    %v868 = vadd.f32 %v837, %v867
    %869 = vdwg.mxu0
    %s870 = scalar_lea.vmem %s15, 32
    %v871 = vld [vmem:[%s870] sm:$0xff]
    %v872 = vld [vmem:[%s870 + $0x8] sm:$0xff]
    %v873 = vrot.slane %v802, 1
    %v874 = vrot.slane %v803, 1
    %v875 = vsel %vm520, %v873, %v874
    %v876 = vsel %vm520, %v874, %v522
    %v877 = vsel %vm809, %v875, 0
    %v879 = vsel %vm809, %v876, 0
    %881 = vmatpush.msra.mxu0 0.0
    %882 = vmatpush.msra.mxu0 0.0
    %883 = vmatpush.msra.mxu0 0.0
    %884 = vmatpush.msra.mxu0 0.0
    %885 = vmatpush.msra.mxu0 0.0
    %886 = vmatpush.msra.mxu0 0.0
    %887 = vmatpush.msra.mxu0 0.0
    %888 = vmatpush.msra.mxu0 0.0
    %889 = vmatpush.msra.mxu0 0.0
    %890 = vmatpush.msra.mxu0 0.0
    %891 = vmatpush.msra.mxu0 0.0
    %892 = vmatpush.msra.mxu0 0.0
    %893 = vmatpush.msra.mxu0 0.0
    %894 = vmatpush.msra.mxu0 0.0
    %895 = vmatpush.msra.mxu0 %v872
    %896 = vmatpush.msra.mxu0 %v871
    %897 = vmatmul.f32.gmra.mxu0 %v877
    %v898 = vpop.f32.mrf.mxu0
    %v899 = vadd.f32 0.0, %v898
    %900 = vmatmul.f32.gmra.mxu0 %v879
    %v901 = vpop.f32.mrf.mxu0
    %v902 = vadd.f32 0.0, %v901
    %903 = vdwg.mxu0
    %v904 = vadd.f32 %v865, %v899
    %v905 = vadd.f32 %v868, %v902
    %v906 = vld [vmem:[%s17] sm:$0x1]
    %v908 = vperm.slane %v906, 0
    %v910 = vadd.f32 %v904, %v908
    %v911 = vadd.f32 %v905, %v908
    %vm912 = vcmp.gt.f32.partialorder %v910, 0.0
    %vm913 = vcmp.gt.f32.partialorder %v911, 0.0
    %v914 = vmul.f32 %v910, 0.1
    %v915 = vmul.f32 %v911, 0.1
    %v916 = vsel %vm912, %v910, %v914
    %v917 = vsel %vm913, %v911, %v915
    %v918 = vld [vmem:[#allocation5] sm:$0xff]
    %v919 = vld [vmem:[#allocation5 + $0x8] sm:$0xff]
    %s920 = scalar_lea.vmem [#allocation5], 16
    %v921 = vld [vmem:[%s920] sm:$0xff]
    %v922 = vld [vmem:[%s920 + $0x8] sm:$0xff]
    %v924 = vsel %vm809, %v916, 0
    %v927 = vsel %vm809, %v917, 0
    %929 = vmatpush.msra.mxu0 0.0
    %930 = vmatpush.msra.mxu0 0.0
    %931 = vmatpush.msra.mxu0 0.0
    %932 = vmatpush.msra.mxu0 0.0
    %933 = vmatpush.msra.mxu0 0.0
    %934 = vmatpush.msra.mxu0 0.0
    %935 = vmatpush.msra.mxu0 0.0
    %936 = vmatpush.msra.mxu0 0.0
    %937 = vmatpush.msra.mxu0 0.0
    %938 = vmatpush.msra.mxu0 0.0
    %939 = vmatpush.msra.mxu0 0.0
    %940 = vmatpush.msra.mxu0 0.0
    %941 = vmatpush.msra.mxu0 0.0
    %942 = vmatpush.msra.mxu0 0.0
    %943 = vmatpush.msra.mxu0 %v922
    %944 = vmatpush.msra.mxu0 %v921
    %945 = vmatmul.f32.gmra.mxu0 %v924
    %v946 = vpop.f32.mrf.mxu0
    %v947 = vadd.f32 0.0, %v946
    %948 = vmatmul.f32.gmra.mxu0 %v927
    %v949 = vpop.f32.mrf.mxu0
    %v950 = vadd.f32 0.0, %v949
    %951 = vdwg.mxu0
    %v952 = vrot.slane %v916, 7
    %v953 = vsel %vm460, %v461, %v952
    %v954 = vrot.slane %v917, 7
    %v955 = vsel %vm460, %v952, %v954
    %v956 = vsel %vm809, %v953, 0
    %v958 = vsel %vm809, %v955, 0
    %960 = vmatpush.msra.mxu0 0.0
    %961 = vmatpush.msra.mxu0 0.0
    %962 = vmatpush.msra.mxu0 0.0
    %963 = vmatpush.msra.mxu0 0.0
    %964 = vmatpush.msra.mxu0 0.0
    %965 = vmatpush.msra.mxu0 0.0
    %966 = vmatpush.msra.mxu0 0.0
    %967 = vmatpush.msra.mxu0 0.0
    %968 = vmatpush.msra.mxu0 0.0
    %969 = vmatpush.msra.mxu0 0.0
    %970 = vmatpush.msra.mxu0 0.0
    %971 = vmatpush.msra.mxu0 0.0
    %972 = vmatpush.msra.mxu0 0.0
    %973 = vmatpush.msra.mxu0 0.0
    %974 = vmatpush.msra.mxu0 %v919
    %975 = vmatpush.msra.mxu0 %v918
    %976 = vmatmul.f32.gmra.mxu0 %v956
    %v977 = vpop.f32.mrf.mxu0
    %v978 = vadd.f32 %v947, %v977
    %979 = vmatmul.f32.gmra.mxu0 %v958
    %v980 = vpop.f32.mrf.mxu0
    %v981 = vadd.f32 %v950, %v980
    %982 = vdwg.mxu0
    %s983 = scalar_lea.vmem [#allocation5], 32
    %v984 = vld [vmem:[%s983] sm:$0xff]
    %v985 = vld [vmem:[%s983 + $0x8] sm:$0xff]
    %v986 = vrot.slane %v916, 1
    %v987 = vrot.slane %v917, 1
    %v988 = vsel %vm520, %v986, %v987
    %v989 = vsel %vm520, %v987, %v522
    %v990 = vsel %vm809, %v988, 0
    %v992 = vsel %vm809, %v989, 0
    %994 = vmatpush.msra.mxu0 0.0
    %995 = vmatpush.msra.mxu0 0.0
    %996 = vmatpush.msra.mxu0 0.0
    %997 = vmatpush.msra.mxu0 0.0
    %998 = vmatpush.msra.mxu0 0.0
    %999 = vmatpush.msra.mxu0 0.0
    %1000 = vmatpush.msra.mxu0 0.0
    %1001 = vmatpush.msra.mxu0 0.0
    %1002 = vmatpush.msra.mxu0 0.0
    %1003 = vmatpush.msra.mxu0 0.0
    %1004 = vmatpush.msra.mxu0 0.0
    %1005 = vmatpush.msra.mxu0 0.0
    %1006 = vmatpush.msra.mxu0 0.0
    %1007 = vmatpush.msra.mxu0 0.0
    %1008 = vmatpush.msra.mxu0 %v985
    %1009 = vmatpush.msra.mxu0 %v984
    %1010 = vmatmul.f32.gmra.mxu0 %v990
    %v1011 = vpop.f32.mrf.mxu0
    %v1012 = vadd.f32 0.0, %v1011
    %1013 = vmatmul.f32.gmra.mxu0 %v992
    %v1014 = vpop.f32.mrf.mxu0
    %v1015 = vadd.f32 0.0, %v1014
    %1016 = vdwg.mxu0
    %v1017 = vadd.f32 %v978, %v1012
    %v1018 = vadd.f32 %v981, %v1015
    %v1019 = vld [vmem:[%s25] sm:$0x1]
    %v1021 = vperm.slane %v1019, 0
    %v1023 = vadd.f32 %v1017, %v1021
    %v1024 = vadd.f32 %v1018, %v1021
    %v1025 = vadd.f32 %v796, %v1023
    %v1026 = vadd.f32 %v797, %v1024
    %vm1027 = vcmp.gt.f32.partialorder %v1025, 0.0
    %vm1028 = vcmp.gt.f32.partialorder %v1026, 0.0
    %v1029 = vmul.f32 %v1025, 0.1
    %v1030 = vmul.f32 %v1026, 0.1
    %v1031 = vsel %vm1027, %v1025, %v1029
    %v1032 = vsel %vm1028, %v1026, %v1030
    %v1033 = vld [vmem:[#allocation3] sm:$0xff]
    %v1034 = vld [vmem:[#allocation3 + $0x8] sm:$0xff]
    %s1035 = scalar_lea.vmem [#allocation3], 16
    %v1036 = vld [vmem:[%s1035] sm:$0xff]
    %v1037 = vld [vmem:[%s1035 + $0x8] sm:$0xff]
    %v1039 = vsel %vm809, %v1031, 0
    %v1042 = vsel %vm809, %v1032, 0
    %1044 = vmatpush.msra.mxu0 0.0
    %1045 = vmatpush.msra.mxu0 0.0
    %1046 = vmatpush.msra.mxu0 0.0
    %1047 = vmatpush.msra.mxu0 0.0
    %1048 = vmatpush.msra.mxu0 0.0
    %1049 = vmatpush.msra.mxu0 0.0
    %1050 = vmatpush.msra.mxu0 0.0
    %1051 = vmatpush.msra.mxu0 0.0
    %1052 = vmatpush.msra.mxu0 0.0
    %1053 = vmatpush.msra.mxu0 0.0
    %1054 = vmatpush.msra.mxu0 0.0
    %1055 = vmatpush.msra.mxu0 0.0
    %1056 = vmatpush.msra.mxu0 0.0
    %1057 = vmatpush.msra.mxu0 0.0
    %1058 = vmatpush.msra.mxu0 %v1037
    %1059 = vmatpush.msra.mxu0 %v1036
    %1060 = vmatmul.f32.gmra.mxu0 %v1039
    %v1061 = vpop.f32.mrf.mxu0
    %v1062 = vadd.f32 0.0, %v1061
    %1063 = vmatmul.f32.gmra.mxu0 %v1042
    %v1064 = vpop.f32.mrf.mxu0
    %v1065 = vadd.f32 0.0, %v1064
    %1066 = vdwg.mxu0
    %v1067 = vrot.slane %v1031, 5
    %v1068 = vsel %vm429, %v430, %v1067
    %v1069 = vrot.slane %v1032, 5
    %v1070 = vsel %vm429, %v1067, %v1069
    %v1071 = vsel %vm809, %v1068, 0
    %v1073 = vsel %vm809, %v1070, 0
    %1075 = vmatpush.msra.mxu0 0.0
    %1076 = vmatpush.msra.mxu0 0.0
    %1077 = vmatpush.msra.mxu0 0.0
    %1078 = vmatpush.msra.mxu0 0.0
    %1079 = vmatpush.msra.mxu0 0.0
    %1080 = vmatpush.msra.mxu0 0.0
    %1081 = vmatpush.msra.mxu0 0.0
    %1082 = vmatpush.msra.mxu0 0.0
    %1083 = vmatpush.msra.mxu0 0.0
    %1084 = vmatpush.msra.mxu0 0.0
    %1085 = vmatpush.msra.mxu0 0.0
    %1086 = vmatpush.msra.mxu0 0.0
    %1087 = vmatpush.msra.mxu0 0.0
    %1088 = vmatpush.msra.mxu0 0.0
    %1089 = vmatpush.msra.mxu0 %v1034
    %1090 = vmatpush.msra.mxu0 %v1033
    %1091 = vmatmul.f32.gmra.mxu0 %v1071
    %v1092 = vpop.f32.mrf.mxu0
    %v1093 = vadd.f32 %v1062, %v1092
    %1094 = vmatmul.f32.gmra.mxu0 %v1073
    %v1095 = vpop.f32.mrf.mxu0
    %v1096 = vadd.f32 %v1065, %v1095
    %1097 = vdwg.mxu0
    %s1098 = scalar_lea.vmem [#allocation3], 32
    %v1099 = vld [vmem:[%s1098] sm:$0xff]
    %v1100 = vld [vmem:[%s1098 + $0x8] sm:$0xff]
    %v1101 = vrot.slane %v1031, 3
    %v1102 = vrot.slane %v1032, 3
    %v1103 = vsel %vm584, %v1101, %v1102
    %v1104 = vsel %vm584, %v1102, %v586
    %v1105 = vsel %vm809, %v1103, 0
    %v1107 = vsel %vm809, %v1104, 0
    %1109 = vmatpush.msra.mxu0 0.0
    %1110 = vmatpush.msra.mxu0 0.0
    %1111 = vmatpush.msra.mxu0 0.0
    %1112 = vmatpush.msra.mxu0 0.0
    %1113 = vmatpush.msra.mxu0 0.0
    %1114 = vmatpush.msra.mxu0 0.0
    %1115 = vmatpush.msra.mxu0 0.0
    %1116 = vmatpush.msra.mxu0 0.0
    %1117 = vmatpush.msra.mxu0 0.0
    %1118 = vmatpush.msra.mxu0 0.0
    %1119 = vmatpush.msra.mxu0 0.0
    %1120 = vmatpush.msra.mxu0 0.0
    %1121 = vmatpush.msra.mxu0 0.0
    %1122 = vmatpush.msra.mxu0 0.0
    %1123 = vmatpush.msra.mxu0 %v1100
    %1124 = vmatpush.msra.mxu0 %v1099
    %1125 = vmatmul.f32.gmra.mxu0 %v1105
    %v1126 = vpop.f32.mrf.mxu0
    %v1127 = vadd.f32 0.0, %v1126
    %1128 = vmatmul.f32.gmra.mxu0 %v1107
    %v1129 = vpop.f32.mrf.mxu0
    %v1130 = vadd.f32 0.0, %v1129
    %1131 = vdwg.mxu0
    %v1132 = vadd.f32 %v1093, %v1127
    %v1133 = vadd.f32 %v1096, %v1130
    %v1134 = vld [vmem:[%s21] sm:$0x1]
    %v1136 = vperm.slane %v1134, 0
    %v1138 = vadd.f32 %v1132, %v1136
    %v1139 = vadd.f32 %v1133, %v1136
    %vm1140 = vcmp.gt.f32.partialorder %v1138, 0.0
    %vm1141 = vcmp.gt.f32.partialorder %v1139, 0.0
    %v1142 = vmul.f32 %v1138, 0.1
    %v1143 = vmul.f32 %v1139, 0.1
    %v1144 = vsel %vm1140, %v1138, %v1142
    %v1145 = vsel %vm1141, %v1139, %v1143
    %v1146 = vld [vmem:[#allocation7] sm:$0xff]
    %v1147 = vld [vmem:[#allocation7 + $0x8] sm:$0xff]
    %s1148 = scalar_lea.vmem [#allocation7], 16
    %v1149 = vld [vmem:[%s1148] sm:$0xff]
    %v1150 = vld [vmem:[%s1148 + $0x8] sm:$0xff]
    %v1152 = vsel %vm809, %v1144, 0
    %v1155 = vsel %vm809, %v1145, 0
    %1157 = vmatpush.msra.mxu0 0.0
    %1158 = vmatpush.msra.mxu0 0.0
    %1159 = vmatpush.msra.mxu0 0.0
    %1160 = vmatpush.msra.mxu0 0.0
    %1161 = vmatpush.msra.mxu0 0.0
    %1162 = vmatpush.msra.mxu0 0.0
    %1163 = vmatpush.msra.mxu0 0.0
    %1164 = vmatpush.msra.mxu0 0.0
    %1165 = vmatpush.msra.mxu0 0.0
    %1166 = vmatpush.msra.mxu0 0.0
    %1167 = vmatpush.msra.mxu0 0.0
    %1168 = vmatpush.msra.mxu0 0.0
    %1169 = vmatpush.msra.mxu0 0.0
    %1170 = vmatpush.msra.mxu0 0.0
    %1171 = vmatpush.msra.mxu0 %v1150
    %1172 = vmatpush.msra.mxu0 %v1149
    %1173 = vmatmul.f32.gmra.mxu0 %v1152
    %v1174 = vpop.f32.mrf.mxu0
    %v1175 = vadd.f32 0.0, %v1174
    %1176 = vmatmul.f32.gmra.mxu0 %v1155
    %v1177 = vpop.f32.mrf.mxu0
    %v1178 = vadd.f32 0.0, %v1177
    %1179 = vdwg.mxu0
    %v1180 = vrot.slane %v1144, 7
    %v1181 = vsel %vm460, %v461, %v1180
    %v1182 = vrot.slane %v1145, 7
    %v1183 = vsel %vm460, %v1180, %v1182
    %v1184 = vsel %vm809, %v1181, 0
    %v1186 = vsel %vm809, %v1183, 0
    %1188 = vmatpush.msra.mxu0 0.0
    %1189 = vmatpush.msra.mxu0 0.0
    %1190 = vmatpush.msra.mxu0 0.0
    %1191 = vmatpush.msra.mxu0 0.0
    %1192 = vmatpush.msra.mxu0 0.0
    %1193 = vmatpush.msra.mxu0 0.0
    %1194 = vmatpush.msra.mxu0 0.0
    %1195 = vmatpush.msra.mxu0 0.0
    %1196 = vmatpush.msra.mxu0 0.0
    %1197 = vmatpush.msra.mxu0 0.0
    %1198 = vmatpush.msra.mxu0 0.0
    %1199 = vmatpush.msra.mxu0 0.0
    %1200 = vmatpush.msra.mxu0 0.0
    %1201 = vmatpush.msra.mxu0 0.0
    %1202 = vmatpush.msra.mxu0 %v1147
    %1203 = vmatpush.msra.mxu0 %v1146
    %1204 = vmatmul.f32.gmra.mxu0 %v1184
    %v1205 = vpop.f32.mrf.mxu0
    %v1206 = vadd.f32 %v1175, %v1205
    %1207 = vmatmul.f32.gmra.mxu0 %v1186
    %v1208 = vpop.f32.mrf.mxu0
    %v1209 = vadd.f32 %v1178, %v1208
    %1210 = vdwg.mxu0
    %s1211 = scalar_lea.vmem [#allocation7], 32
    %v1212 = vld [vmem:[%s1211] sm:$0xff]
    %v1213 = vld [vmem:[%s1211 + $0x8] sm:$0xff]
    %v1214 = vrot.slane %v1144, 1
    %v1215 = vrot.slane %v1145, 1
    %v1216 = vsel %vm520, %v1214, %v1215
    %v1217 = vsel %vm520, %v1215, %v522
    %v1218 = vsel %vm809, %v1216, 0
    %v1220 = vsel %vm809, %v1217, 0
    %1222 = vmatpush.msra.mxu0 0.0
    %1223 = vmatpush.msra.mxu0 0.0
    %1224 = vmatpush.msra.mxu0 0.0
    %1225 = vmatpush.msra.mxu0 0.0
    %1226 = vmatpush.msra.mxu0 0.0
    %1227 = vmatpush.msra.mxu0 0.0
    %1228 = vmatpush.msra.mxu0 0.0
    %1229 = vmatpush.msra.mxu0 0.0
    %1230 = vmatpush.msra.mxu0 0.0
    %1231 = vmatpush.msra.mxu0 0.0
    %1232 = vmatpush.msra.mxu0 0.0
    %1233 = vmatpush.msra.mxu0 0.0
    %1234 = vmatpush.msra.mxu0 0.0
    %1235 = vmatpush.msra.mxu0 0.0
    %1236 = vmatpush.msra.mxu0 %v1213
    %1237 = vmatpush.msra.mxu0 %v1212
    %1238 = vmatmul.f32.gmra.mxu0 %v1218
    %v1239 = vpop.f32.mrf.mxu0
    %v1240 = vadd.f32 0.0, %v1239
    %1241 = vmatmul.f32.gmra.mxu0 %v1220
    %v1242 = vpop.f32.mrf.mxu0
    %v1243 = vadd.f32 0.0, %v1242
    %1244 = vdwg.mxu0
    %v1245 = vadd.f32 %v1206, %v1240
    %v1246 = vadd.f32 %v1209, %v1243
    %v1247 = vld [vmem:[%s29] sm:$0x1]
    %v1249 = vperm.slane %v1247, 0
    %v1251 = vadd.f32 %v1245, %v1249
    %v1252 = vadd.f32 %v1246, %v1249
    %v1253 = vadd.f32 %v1025, %v1251
    %v1254 = vadd.f32 %v1026, %v1252
    %v1255 = vld [vmem:[#allocation8] sm:$0xff]
    %v1256 = vld [vmem:[#allocation8 + $0x8] sm:$0xff]
    %s1257 = scalar_lea.vmem [#allocation8], 16
    %v1258 = vld [vmem:[%s1257] sm:$0xff]
    %v1259 = vld [vmem:[%s1257 + $0x8] sm:$0xff]
    %1260 = vmatpush.msra.mxu0 0.0
    %1261 = vmatpush.msra.mxu0 0.0
    %1262 = vmatpush.msra.mxu0 0.0
    %1263 = vmatpush.msra.mxu0 0.0
    %1264 = vmatpush.msra.mxu0 0.0
    %1265 = vmatpush.msra.mxu0 0.0
    %1266 = vmatpush.msra.mxu0 0.0
    %1267 = vmatpush.msra.mxu0 0.0
    %1268 = vmatpush.msra.mxu0 0.0
    %1269 = vmatpush.msra.mxu0 0.0
    %1270 = vmatpush.msra.mxu0 0.0
    %1271 = vmatpush.msra.mxu0 0.0
    %1272 = vmatpush.msra.mxu0 0.0
    %1273 = vmatpush.msra.mxu0 0.0
    %1274 = vmatpush.msra.mxu0 %v1259
    %1275 = vmatpush.msra.mxu0 %v1258
    %1276 = vmatmul.f32.gmra.mxu0 %v843
    %v1277 = vpop.f32.mrf.mxu0
    %v1278 = vadd.f32 0.0, %v1277
    %1279 = vmatmul.f32.gmra.mxu0 %v845
    %v1280 = vpop.f32.mrf.mxu0
    %v1281 = vadd.f32 0.0, %v1280
    %1282 = vdwg.mxu0
    %v1283 = vrot.slane %v802, 6
    %v1284 = vsel %vm402, %v403, %v1283
    %v1285 = vrot.slane %v803, 6
    %v1286 = vsel %vm402, %v1283, %v1285
    %v1287 = vsel %vm809, %v1284, 0
    %v1289 = vsel %vm809, %v1286, 0
    %1291 = vmatpush.msra.mxu0 0.0
    %1292 = vmatpush.msra.mxu0 0.0
    %1293 = vmatpush.msra.mxu0 0.0
    %1294 = vmatpush.msra.mxu0 0.0
    %1295 = vmatpush.msra.mxu0 0.0
    %1296 = vmatpush.msra.mxu0 0.0
    %1297 = vmatpush.msra.mxu0 0.0
    %1298 = vmatpush.msra.mxu0 0.0
    %1299 = vmatpush.msra.mxu0 0.0
    %1300 = vmatpush.msra.mxu0 0.0
    %1301 = vmatpush.msra.mxu0 0.0
    %1302 = vmatpush.msra.mxu0 0.0
    %1303 = vmatpush.msra.mxu0 0.0
    %1304 = vmatpush.msra.mxu0 0.0
    %1305 = vmatpush.msra.mxu0 %v1256
    %1306 = vmatpush.msra.mxu0 %v1255
    %1307 = vmatmul.f32.gmra.mxu0 %v1287
    %v1308 = vpop.f32.mrf.mxu0
    %v1309 = vadd.f32 %v1278, %v1308
    %1310 = vmatmul.f32.gmra.mxu0 %v1289
    %v1311 = vpop.f32.mrf.mxu0
    %v1312 = vadd.f32 %v1281, %v1311
    %1313 = vdwg.mxu0
    %s1314 = scalar_lea.vmem [#allocation8], 32
    %v1315 = vld [vmem:[%s1314] sm:$0xff]
    %v1316 = vld [vmem:[%s1314 + $0x8] sm:$0xff]
    %1317 = vmatpush.msra.mxu0 0.0
    %1318 = vmatpush.msra.mxu0 0.0
    %1319 = vmatpush.msra.mxu0 0.0
    %1320 = vmatpush.msra.mxu0 0.0
    %1321 = vmatpush.msra.mxu0 0.0
    %1322 = vmatpush.msra.mxu0 0.0
    %1323 = vmatpush.msra.mxu0 0.0
    %1324 = vmatpush.msra.mxu0 0.0
    %1325 = vmatpush.msra.mxu0 0.0
    %1326 = vmatpush.msra.mxu0 0.0
    %1327 = vmatpush.msra.mxu0 0.0
    %1328 = vmatpush.msra.mxu0 0.0
    %1329 = vmatpush.msra.mxu0 0.0
    %1330 = vmatpush.msra.mxu0 0.0
    %1331 = vmatpush.msra.mxu0 %v1316
    %1332 = vmatpush.msra.mxu0 %v1315
    %1333 = vmatmul.f32.gmra.mxu0 %v811
    %v1334 = vpop.f32.mrf.mxu0
    %v1335 = vadd.f32 0.0, %v1334
    %1336 = vmatmul.f32.gmra.mxu0 %v814
    %v1337 = vpop.f32.mrf.mxu0
    %v1338 = vadd.f32 0.0, %v1337
    %1339 = vdwg.mxu0
    %v1340 = vadd.f32 %v1309, %v1335
    %v1341 = vadd.f32 %v1312, %v1338
    %s1342 = scalar_lea.vmem [#allocation8], 48
    %v1343 = vld [vmem:[%s1342] sm:$0xff]
    %v1344 = vld [vmem:[%s1342 + $0x8] sm:$0xff]
    %1345 = vmatpush.msra.mxu0 0.0
    %1346 = vmatpush.msra.mxu0 0.0
    %1347 = vmatpush.msra.mxu0 0.0
    %1348 = vmatpush.msra.mxu0 0.0
    %1349 = vmatpush.msra.mxu0 0.0
    %1350 = vmatpush.msra.mxu0 0.0
    %1351 = vmatpush.msra.mxu0 0.0
    %1352 = vmatpush.msra.mxu0 0.0
    %1353 = vmatpush.msra.mxu0 0.0
    %1354 = vmatpush.msra.mxu0 0.0
    %1355 = vmatpush.msra.mxu0 0.0
    %1356 = vmatpush.msra.mxu0 0.0
    %1357 = vmatpush.msra.mxu0 0.0
    %1358 = vmatpush.msra.mxu0 0.0
    %1359 = vmatpush.msra.mxu0 %v1344
    %1360 = vmatpush.msra.mxu0 %v1343
    %1361 = vmatmul.f32.gmra.mxu0 %v877
    %v1362 = vpop.f32.mrf.mxu0
    %v1363 = vadd.f32 0.0, %v1362
    %1364 = vmatmul.f32.gmra.mxu0 %v879
    %v1365 = vpop.f32.mrf.mxu0
    %v1366 = vadd.f32 0.0, %v1365
    %1367 = vdwg.mxu0
    %v1368 = vadd.f32 %v1340, %v1363
    %v1369 = vadd.f32 %v1341, %v1366
    %s1370 = scalar_lea.vmem [#allocation8], 64
    %v1371 = vld [vmem:[%s1370] sm:$0xff]
    %v1372 = vld [vmem:[%s1370 + $0x8] sm:$0xff]
    %v1373 = vrot.slane %v802, 2
    %v1374 = vrot.slane %v803, 2
    %v1375 = vsel %vm552, %v1373, %v1374
    %v1376 = vsel %vm552, %v1374, %v554
    %v1377 = vsel %vm809, %v1375, 0
    %v1379 = vsel %vm809, %v1376, 0
    %1381 = vmatpush.msra.mxu0 0.0
    %1382 = vmatpush.msra.mxu0 0.0
    %1383 = vmatpush.msra.mxu0 0.0
    %1384 = vmatpush.msra.mxu0 0.0
    %1385 = vmatpush.msra.mxu0 0.0
    %1386 = vmatpush.msra.mxu0 0.0
    %1387 = vmatpush.msra.mxu0 0.0
    %1388 = vmatpush.msra.mxu0 0.0
    %1389 = vmatpush.msra.mxu0 0.0
    %1390 = vmatpush.msra.mxu0 0.0
    %1391 = vmatpush.msra.mxu0 0.0
    %1392 = vmatpush.msra.mxu0 0.0
    %1393 = vmatpush.msra.mxu0 0.0
    %1394 = vmatpush.msra.mxu0 0.0
    %1395 = vmatpush.msra.mxu0 %v1372
    %1396 = vmatpush.msra.mxu0 %v1371
    %1397 = vmatmul.f32.gmra.mxu0 %v1377
    %v1398 = vpop.f32.mrf.mxu0
    %v1399 = vadd.f32 0.0, %v1398
    %1400 = vmatmul.f32.gmra.mxu0 %v1379
    %v1401 = vpop.f32.mrf.mxu0
    %v1402 = vadd.f32 0.0, %v1401
    %1403 = vdwg.mxu0
    %v1404 = vadd.f32 %v1368, %v1399
    %v1405 = vadd.f32 %v1369, %v1402
    %v1406 = vld [vmem:[%s33] sm:$0x1]
    %v1408 = vperm.slane %v1406, 0
    %v1410 = vadd.f32 %v1404, %v1408
    %v1411 = vadd.f32 %v1405, %v1408
    %vm1412 = vcmp.gt.f32.partialorder %v1410, 0.0
    %vm1413 = vcmp.gt.f32.partialorder %v1411, 0.0
    %v1414 = vmul.f32 %v1410, 0.1
    %v1415 = vmul.f32 %v1411, 0.1
    %v1416 = vsel %vm1412, %v1410, %v1414
    %v1417 = vsel %vm1413, %v1411, %v1415
    %v1418 = vld [vmem:[#allocation11] sm:$0xff]
    %v1419 = vld [vmem:[#allocation11 + $0x8] sm:$0xff]
    %s1420 = scalar_lea.vmem [#allocation11], 16
    %v1421 = vld [vmem:[%s1420] sm:$0xff]
    %v1422 = vld [vmem:[%s1420 + $0x8] sm:$0xff]
    %v1425 = vrot.slane %v1416, 7
    %v1426 = vsel %vm460, %v461, %v1425
    %v1427 = vrot.slane %v1417, 7
    %v1428 = vsel %vm460, %v1425, %v1427
    %v1429 = vsel %vm809, %v1426, 0
    %v1431 = vsel %vm809, %v1428, 0
    %1433 = vmatpush.msra.mxu0 0.0
    %1434 = vmatpush.msra.mxu0 0.0
    %1435 = vmatpush.msra.mxu0 0.0
    %1436 = vmatpush.msra.mxu0 0.0
    %1437 = vmatpush.msra.mxu0 0.0
    %1438 = vmatpush.msra.mxu0 0.0
    %1439 = vmatpush.msra.mxu0 0.0
    %1440 = vmatpush.msra.mxu0 0.0
    %1441 = vmatpush.msra.mxu0 0.0
    %1442 = vmatpush.msra.mxu0 0.0
    %1443 = vmatpush.msra.mxu0 0.0
    %1444 = vmatpush.msra.mxu0 0.0
    %1445 = vmatpush.msra.mxu0 0.0
    %1446 = vmatpush.msra.mxu0 0.0
    %1447 = vmatpush.msra.mxu0 %v1422
    %1448 = vmatpush.msra.mxu0 %v1421
    %1449 = vmatmul.f32.gmra.mxu0 %v1429
    %v1450 = vpop.f32.mrf.mxu0
    %v1451 = vadd.f32 0.0, %v1450
    %1452 = vmatmul.f32.gmra.mxu0 %v1431
    %v1453 = vpop.f32.mrf.mxu0
    %v1454 = vadd.f32 0.0, %v1453
    %1455 = vdwg.mxu0
    %v1456 = vrot.slane %v1416, 6
    %v1457 = vsel %vm402, %v403, %v1456
    %v1458 = vrot.slane %v1417, 6
    %v1459 = vsel %vm402, %v1456, %v1458
    %v1460 = vsel %vm809, %v1457, 0
    %v1462 = vsel %vm809, %v1459, 0
    %1464 = vmatpush.msra.mxu0 0.0
    %1465 = vmatpush.msra.mxu0 0.0
    %1466 = vmatpush.msra.mxu0 0.0
    %1467 = vmatpush.msra.mxu0 0.0
    %1468 = vmatpush.msra.mxu0 0.0
    %1469 = vmatpush.msra.mxu0 0.0
    %1470 = vmatpush.msra.mxu0 0.0
    %1471 = vmatpush.msra.mxu0 0.0
    %1472 = vmatpush.msra.mxu0 0.0
    %1473 = vmatpush.msra.mxu0 0.0
    %1474 = vmatpush.msra.mxu0 0.0
    %1475 = vmatpush.msra.mxu0 0.0
    %1476 = vmatpush.msra.mxu0 0.0
    %1477 = vmatpush.msra.mxu0 0.0
    %1478 = vmatpush.msra.mxu0 %v1419
    %1479 = vmatpush.msra.mxu0 %v1418
    %1480 = vmatmul.f32.gmra.mxu0 %v1460
    %v1481 = vpop.f32.mrf.mxu0
    %v1482 = vadd.f32 %v1451, %v1481
    %1483 = vmatmul.f32.gmra.mxu0 %v1462
    %v1484 = vpop.f32.mrf.mxu0
    %v1485 = vadd.f32 %v1454, %v1484
    %1486 = vdwg.mxu0
    %s1487 = scalar_lea.vmem [#allocation11], 32
    %v1488 = vld [vmem:[%s1487] sm:$0xff]
    %v1489 = vld [vmem:[%s1487 + $0x8] sm:$0xff]
    %v1490 = vsel %vm809, %v1416, 0
    %v1492 = vsel %vm809, %v1417, 0
    %1494 = vmatpush.msra.mxu0 0.0
    %1495 = vmatpush.msra.mxu0 0.0
    %1496 = vmatpush.msra.mxu0 0.0
    %1497 = vmatpush.msra.mxu0 0.0
    %1498 = vmatpush.msra.mxu0 0.0
    %1499 = vmatpush.msra.mxu0 0.0
    %1500 = vmatpush.msra.mxu0 0.0
    %1501 = vmatpush.msra.mxu0 0.0
    %1502 = vmatpush.msra.mxu0 0.0
    %1503 = vmatpush.msra.mxu0 0.0
    %1504 = vmatpush.msra.mxu0 0.0
    %1505 = vmatpush.msra.mxu0 0.0
    %1506 = vmatpush.msra.mxu0 0.0
    %1507 = vmatpush.msra.mxu0 0.0
    %1508 = vmatpush.msra.mxu0 %v1489
    %1509 = vmatpush.msra.mxu0 %v1488
    %1510 = vmatmul.f32.gmra.mxu0 %v1490
    %v1511 = vpop.f32.mrf.mxu0
    %v1512 = vadd.f32 0.0, %v1511
    %1513 = vmatmul.f32.gmra.mxu0 %v1492
    %v1514 = vpop.f32.mrf.mxu0
    %v1515 = vadd.f32 0.0, %v1514
    %1516 = vdwg.mxu0
    %v1517 = vadd.f32 %v1482, %v1512
    %v1518 = vadd.f32 %v1485, %v1515
    %s1519 = scalar_lea.vmem [#allocation11], 48
    %v1520 = vld [vmem:[%s1519] sm:$0xff]
    %v1521 = vld [vmem:[%s1519 + $0x8] sm:$0xff]
    %v1522 = vrot.slane %v1416, 1
    %v1523 = vrot.slane %v1417, 1
    %v1524 = vsel %vm520, %v1522, %v1523
    %v1525 = vsel %vm520, %v1523, %v522
    %v1526 = vsel %vm809, %v1524, 0
    %v1528 = vsel %vm809, %v1525, 0
    %1530 = vmatpush.msra.mxu0 0.0
    %1531 = vmatpush.msra.mxu0 0.0
    %1532 = vmatpush.msra.mxu0 0.0
    %1533 = vmatpush.msra.mxu0 0.0
    %1534 = vmatpush.msra.mxu0 0.0
    %1535 = vmatpush.msra.mxu0 0.0
    %1536 = vmatpush.msra.mxu0 0.0
    %1537 = vmatpush.msra.mxu0 0.0
    %1538 = vmatpush.msra.mxu0 0.0
    %1539 = vmatpush.msra.mxu0 0.0
    %1540 = vmatpush.msra.mxu0 0.0
    %1541 = vmatpush.msra.mxu0 0.0
    %1542 = vmatpush.msra.mxu0 0.0
    %1543 = vmatpush.msra.mxu0 0.0
    %1544 = vmatpush.msra.mxu0 %v1521
    %1545 = vmatpush.msra.mxu0 %v1520
    %1546 = vmatmul.f32.gmra.mxu0 %v1526
    %v1547 = vpop.f32.mrf.mxu0
    %v1548 = vadd.f32 0.0, %v1547
    %1549 = vmatmul.f32.gmra.mxu0 %v1528
    %v1550 = vpop.f32.mrf.mxu0
    %v1551 = vadd.f32 0.0, %v1550
    %1552 = vdwg.mxu0
    %v1553 = vadd.f32 %v1517, %v1548
    %v1554 = vadd.f32 %v1518, %v1551
    %s1555 = scalar_lea.vmem [#allocation11], 64
    %v1556 = vld [vmem:[%s1555] sm:$0xff]
    %v1557 = vld [vmem:[%s1555 + $0x8] sm:$0xff]
    %v1558 = vrot.slane %v1416, 2
    %v1559 = vrot.slane %v1417, 2
    %v1560 = vsel %vm552, %v1558, %v1559
    %v1561 = vsel %vm552, %v1559, %v554
    %v1562 = vsel %vm809, %v1560, 0
    %v1564 = vsel %vm809, %v1561, 0
    %1566 = vmatpush.msra.mxu0 0.0
    %1567 = vmatpush.msra.mxu0 0.0
    %1568 = vmatpush.msra.mxu0 0.0
    %1569 = vmatpush.msra.mxu0 0.0
    %1570 = vmatpush.msra.mxu0 0.0
    %1571 = vmatpush.msra.mxu0 0.0
    %1572 = vmatpush.msra.mxu0 0.0
    %1573 = vmatpush.msra.mxu0 0.0
    %1574 = vmatpush.msra.mxu0 0.0
    %1575 = vmatpush.msra.mxu0 0.0
    %1576 = vmatpush.msra.mxu0 0.0
    %1577 = vmatpush.msra.mxu0 0.0
    %1578 = vmatpush.msra.mxu0 0.0
    %1579 = vmatpush.msra.mxu0 0.0
    %1580 = vmatpush.msra.mxu0 %v1557
    %1581 = vmatpush.msra.mxu0 %v1556
    %1582 = vmatmul.f32.gmra.mxu0 %v1562
    %v1583 = vpop.f32.mrf.mxu0
    %v1584 = vadd.f32 0.0, %v1583
    %1585 = vmatmul.f32.gmra.mxu0 %v1564
    %v1586 = vpop.f32.mrf.mxu0
    %v1587 = vadd.f32 0.0, %v1586
    %1588 = vdwg.mxu0
    %v1589 = vadd.f32 %v1553, %v1584
    %v1590 = vadd.f32 %v1554, %v1587
    %v1591 = vld [vmem:[%s41] sm:$0x1]
    %v1593 = vperm.slane %v1591, 0
    %v1595 = vadd.f32 %v1589, %v1593
    %v1596 = vadd.f32 %v1590, %v1593
    %v1597 = vadd.f32 %v796, %v1595
    %v1598 = vadd.f32 %v797, %v1596
    %vm1599 = vcmp.gt.f32.partialorder %v1597, 0.0
    %vm1600 = vcmp.gt.f32.partialorder %v1598, 0.0
    %v1601 = vmul.f32 %v1597, 0.1
    %v1602 = vmul.f32 %v1598, 0.1
    %v1603 = vsel %vm1599, %v1597, %v1601
    %v1604 = vsel %vm1600, %v1598, %v1602
    %v1605 = vld [vmem:[#allocation10] sm:$0xff]
    %v1606 = vld [vmem:[#allocation10 + $0x8] sm:$0xff]
    %s1607 = scalar_lea.vmem [#allocation10], 16
    %v1608 = vld [vmem:[%s1607] sm:$0xff]
    %v1609 = vld [vmem:[%s1607 + $0x8] sm:$0xff]
    %v1612 = vrot.slane %v1603, 5
    %v1613 = vsel %vm429, %v430, %v1612
    %v1614 = vrot.slane %v1604, 5
    %v1615 = vsel %vm429, %v1612, %v1614
    %v1616 = vsel %vm809, %v1613, 0
    %v1618 = vsel %vm809, %v1615, 0
    %1620 = vmatpush.msra.mxu0 0.0
    %1621 = vmatpush.msra.mxu0 0.0
    %1622 = vmatpush.msra.mxu0 0.0
    %1623 = vmatpush.msra.mxu0 0.0
    %1624 = vmatpush.msra.mxu0 0.0
    %1625 = vmatpush.msra.mxu0 0.0
    %1626 = vmatpush.msra.mxu0 0.0
    %1627 = vmatpush.msra.mxu0 0.0
    %1628 = vmatpush.msra.mxu0 0.0
    %1629 = vmatpush.msra.mxu0 0.0
    %1630 = vmatpush.msra.mxu0 0.0
    %1631 = vmatpush.msra.mxu0 0.0
    %1632 = vmatpush.msra.mxu0 0.0
    %1633 = vmatpush.msra.mxu0 0.0
    %1634 = vmatpush.msra.mxu0 %v1609
    %1635 = vmatpush.msra.mxu0 %v1608
    %1636 = vmatmul.f32.gmra.mxu0 %v1616
    %v1637 = vpop.f32.mrf.mxu0
    %v1638 = vadd.f32 0.0, %v1637
    %1639 = vmatmul.f32.gmra.mxu0 %v1618
    %v1640 = vpop.f32.mrf.mxu0
    %v1641 = vadd.f32 0.0, %v1640
    %1642 = vdwg.mxu0
    %v1643 = vrot.slane %v1603, 2
    %v1644 = vsel %vm552, %v554, %v1643
    %v1645 = vrot.slane %v1604, 2
    %v1646 = vsel %vm552, %v1643, %v1645
    %v1647 = vsel %vm809, %v1644, 0
    %v1649 = vsel %vm809, %v1646, 0
    %1651 = vmatpush.msra.mxu0 0.0
    %1652 = vmatpush.msra.mxu0 0.0
    %1653 = vmatpush.msra.mxu0 0.0
    %1654 = vmatpush.msra.mxu0 0.0
    %1655 = vmatpush.msra.mxu0 0.0
    %1656 = vmatpush.msra.mxu0 0.0
    %1657 = vmatpush.msra.mxu0 0.0
    %1658 = vmatpush.msra.mxu0 0.0
    %1659 = vmatpush.msra.mxu0 0.0
    %1660 = vmatpush.msra.mxu0 0.0
    %1661 = vmatpush.msra.mxu0 0.0
    %1662 = vmatpush.msra.mxu0 0.0
    %1663 = vmatpush.msra.mxu0 0.0
    %1664 = vmatpush.msra.mxu0 0.0
    %1665 = vmatpush.msra.mxu0 %v1606
    %1666 = vmatpush.msra.mxu0 %v1605
    %1667 = vmatmul.f32.gmra.mxu0 %v1647
    %v1668 = vpop.f32.mrf.mxu0
    %v1669 = vadd.f32 %v1638, %v1668
    %1670 = vmatmul.f32.gmra.mxu0 %v1649
    %v1671 = vpop.f32.mrf.mxu0
    %v1672 = vadd.f32 %v1641, %v1671
    %1673 = vdwg.mxu0
    %s1674 = scalar_lea.vmem [#allocation10], 32
    %v1675 = vld [vmem:[%s1674] sm:$0xff]
    %v1676 = vld [vmem:[%s1674 + $0x8] sm:$0xff]
    %v1677 = vsel %vm809, %v1603, 0
    %v1679 = vsel %vm809, %v1604, 0
    %1681 = vmatpush.msra.mxu0 0.0
    %1682 = vmatpush.msra.mxu0 0.0
    %1683 = vmatpush.msra.mxu0 0.0
    %1684 = vmatpush.msra.mxu0 0.0
    %1685 = vmatpush.msra.mxu0 0.0
    %1686 = vmatpush.msra.mxu0 0.0
    %1687 = vmatpush.msra.mxu0 0.0
    %1688 = vmatpush.msra.mxu0 0.0
    %1689 = vmatpush.msra.mxu0 0.0
    %1690 = vmatpush.msra.mxu0 0.0
    %1691 = vmatpush.msra.mxu0 0.0
    %1692 = vmatpush.msra.mxu0 0.0
    %1693 = vmatpush.msra.mxu0 0.0
    %1694 = vmatpush.msra.mxu0 0.0
    %1695 = vmatpush.msra.mxu0 %v1676
    %1696 = vmatpush.msra.mxu0 %v1675
    %1697 = vmatmul.f32.gmra.mxu0 %v1677
    %v1698 = vpop.f32.mrf.mxu0
    %v1699 = vadd.f32 0.0, %v1698
    %1700 = vmatmul.f32.gmra.mxu0 %v1679
    %v1701 = vpop.f32.mrf.mxu0
    %v1702 = vadd.f32 0.0, %v1701
    %1703 = vdwg.mxu0
    %v1704 = vadd.f32 %v1669, %v1699
    %v1705 = vadd.f32 %v1672, %v1702
    %s1706 = scalar_lea.vmem [#allocation10], 48
    %v1707 = vld [vmem:[%s1706] sm:$0xff]
    %v1708 = vld [vmem:[%s1706 + $0x8] sm:$0xff]
    %v1709 = vrot.slane %v1603, 3
    %v1710 = vrot.slane %v1604, 3
    %v1711 = vsel %vm584, %v1709, %v1710
    %v1712 = vsel %vm584, %v1710, %v586
    %v1713 = vsel %vm809, %v1711, 0
    %v1715 = vsel %vm809, %v1712, 0
    %1717 = vmatpush.msra.mxu0 0.0
    %1718 = vmatpush.msra.mxu0 0.0
    %1719 = vmatpush.msra.mxu0 0.0
    %1720 = vmatpush.msra.mxu0 0.0
    %1721 = vmatpush.msra.mxu0 0.0
    %1722 = vmatpush.msra.mxu0 0.0
    %1723 = vmatpush.msra.mxu0 0.0
    %1724 = vmatpush.msra.mxu0 0.0
    %1725 = vmatpush.msra.mxu0 0.0
    %1726 = vmatpush.msra.mxu0 0.0
    %1727 = vmatpush.msra.mxu0 0.0
    %1728 = vmatpush.msra.mxu0 0.0
    %1729 = vmatpush.msra.mxu0 0.0
    %1730 = vmatpush.msra.mxu0 0.0
    %1731 = vmatpush.msra.mxu0 %v1708
    %1732 = vmatpush.msra.mxu0 %v1707
    %1733 = vmatmul.f32.gmra.mxu0 %v1713
    %v1734 = vpop.f32.mrf.mxu0
    %v1735 = vadd.f32 0.0, %v1734
    %1736 = vmatmul.f32.gmra.mxu0 %v1715
    %v1737 = vpop.f32.mrf.mxu0
    %v1738 = vadd.f32 0.0, %v1737
    %1739 = vdwg.mxu0
    %v1740 = vadd.f32 %v1704, %v1735
    %v1741 = vadd.f32 %v1705, %v1738
    %s1742 = scalar_lea.vmem [#allocation10], 64
    %v1743 = vld [vmem:[%s1742] sm:$0xff]
    %v1744 = vld [vmem:[%s1742 + $0x8] sm:$0xff]
    %v1745 = vrot.slane %v1603, 6
    %v1746 = vrot.slane %v1604, 6
    %v1747 = vsel %vm402, %v1745, %v1746
    %v1748 = vsel %vm402, %v1746, %v403
    %v1749 = vsel %vm809, %v1747, 0
    %v1751 = vsel %vm809, %v1748, 0
    %1753 = vmatpush.msra.mxu0 0.0
    %1754 = vmatpush.msra.mxu0 0.0
    %1755 = vmatpush.msra.mxu0 0.0
    %1756 = vmatpush.msra.mxu0 0.0
    %1757 = vmatpush.msra.mxu0 0.0
    %1758 = vmatpush.msra.mxu0 0.0
    %1759 = vmatpush.msra.mxu0 0.0
    %1760 = vmatpush.msra.mxu0 0.0
    %1761 = vmatpush.msra.mxu0 0.0
    %1762 = vmatpush.msra.mxu0 0.0
    %1763 = vmatpush.msra.mxu0 0.0
    %1764 = vmatpush.msra.mxu0 0.0
    %1765 = vmatpush.msra.mxu0 0.0
    %1766 = vmatpush.msra.mxu0 0.0
    %1767 = vmatpush.msra.mxu0 %v1744
    %1768 = vmatpush.msra.mxu0 %v1743
    %1769 = vmatmul.f32.gmra.mxu0 %v1749
    %v1770 = vpop.f32.mrf.mxu0
    %v1771 = vadd.f32 0.0, %v1770
    %1772 = vmatmul.f32.gmra.mxu0 %v1751
    %v1773 = vpop.f32.mrf.mxu0
    %v1774 = vadd.f32 0.0, %v1773
    %1775 = vdwg.mxu0
    %v1776 = vadd.f32 %v1740, %v1771
    %v1777 = vadd.f32 %v1741, %v1774
    %v1778 = vld [vmem:[%s37] sm:$0x1]
    %v1780 = vperm.slane %v1778, 0
    %v1782 = vadd.f32 %v1776, %v1780
    %v1783 = vadd.f32 %v1777, %v1780
    %vm1784 = vcmp.gt.f32.partialorder %v1782, 0.0
    %vm1785 = vcmp.gt.f32.partialorder %v1783, 0.0
    %v1786 = vmul.f32 %v1782, 0.1
    %v1787 = vmul.f32 %v1783, 0.1
    %v1788 = vsel %vm1784, %v1782, %v1786
    %v1789 = vsel %vm1785, %v1783, %v1787
    %v1790 = vld [vmem:[#allocation13] sm:$0xff]
    %v1791 = vld [vmem:[#allocation13 + $0x8] sm:$0xff]
    %s1792 = scalar_lea.vmem [#allocation13], 16
    %v1793 = vld [vmem:[%s1792] sm:$0xff]
    %v1794 = vld [vmem:[%s1792 + $0x8] sm:$0xff]
    %v1797 = vrot.slane %v1788, 7
    %v1798 = vsel %vm460, %v461, %v1797
    %v1799 = vrot.slane %v1789, 7
    %v1800 = vsel %vm460, %v1797, %v1799
    %v1801 = vsel %vm809, %v1798, 0
    %v1803 = vsel %vm809, %v1800, 0
    %1805 = vmatpush.msra.mxu0 0.0
    %1806 = vmatpush.msra.mxu0 0.0
    %1807 = vmatpush.msra.mxu0 0.0
    %1808 = vmatpush.msra.mxu0 0.0
    %1809 = vmatpush.msra.mxu0 0.0
    %1810 = vmatpush.msra.mxu0 0.0
    %1811 = vmatpush.msra.mxu0 0.0
    %1812 = vmatpush.msra.mxu0 0.0
    %1813 = vmatpush.msra.mxu0 0.0
    %1814 = vmatpush.msra.mxu0 0.0
    %1815 = vmatpush.msra.mxu0 0.0
    %1816 = vmatpush.msra.mxu0 0.0
    %1817 = vmatpush.msra.mxu0 0.0
    %1818 = vmatpush.msra.mxu0 0.0
    %1819 = vmatpush.msra.mxu0 %v1794
    %1820 = vmatpush.msra.mxu0 %v1793
    %1821 = vmatmul.f32.gmra.mxu0 %v1801
    %v1822 = vpop.f32.mrf.mxu0
    %v1823 = vadd.f32 0.0, %v1822
    %1824 = vmatmul.f32.gmra.mxu0 %v1803
    %v1825 = vpop.f32.mrf.mxu0
    %v1826 = vadd.f32 0.0, %v1825
    %1827 = vdwg.mxu0
    %v1828 = vrot.slane %v1788, 6
    %v1829 = vsel %vm402, %v403, %v1828
    %v1830 = vrot.slane %v1789, 6
    %v1831 = vsel %vm402, %v1828, %v1830
    %v1832 = vsel %vm809, %v1829, 0
    %v1834 = vsel %vm809, %v1831, 0
    %1836 = vmatpush.msra.mxu0 0.0
    %1837 = vmatpush.msra.mxu0 0.0
    %1838 = vmatpush.msra.mxu0 0.0
    %1839 = vmatpush.msra.mxu0 0.0
    %1840 = vmatpush.msra.mxu0 0.0
    %1841 = vmatpush.msra.mxu0 0.0
    %1842 = vmatpush.msra.mxu0 0.0
    %1843 = vmatpush.msra.mxu0 0.0
    %1844 = vmatpush.msra.mxu0 0.0
    %1845 = vmatpush.msra.mxu0 0.0
    %1846 = vmatpush.msra.mxu0 0.0
    %1847 = vmatpush.msra.mxu0 0.0
    %1848 = vmatpush.msra.mxu0 0.0
    %1849 = vmatpush.msra.mxu0 0.0
    %1850 = vmatpush.msra.mxu0 %v1791
    %1851 = vmatpush.msra.mxu0 %v1790
    %1852 = vmatmul.f32.gmra.mxu0 %v1832
    %v1853 = vpop.f32.mrf.mxu0
    %v1854 = vadd.f32 %v1823, %v1853
    %1855 = vmatmul.f32.gmra.mxu0 %v1834
    %v1856 = vpop.f32.mrf.mxu0
    %v1857 = vadd.f32 %v1826, %v1856
    %1858 = vdwg.mxu0
    %s1859 = scalar_lea.vmem [#allocation13], 32
    %v1860 = vld [vmem:[%s1859] sm:$0xff]
    %v1861 = vld [vmem:[%s1859 + $0x8] sm:$0xff]
    %v1862 = vsel %vm809, %v1788, 0
    %v1864 = vsel %vm809, %v1789, 0
    %1866 = vmatpush.msra.mxu0 0.0
    %1867 = vmatpush.msra.mxu0 0.0
    %1868 = vmatpush.msra.mxu0 0.0
    %1869 = vmatpush.msra.mxu0 0.0
    %1870 = vmatpush.msra.mxu0 0.0
    %1871 = vmatpush.msra.mxu0 0.0
    %1872 = vmatpush.msra.mxu0 0.0
    %1873 = vmatpush.msra.mxu0 0.0
    %1874 = vmatpush.msra.mxu0 0.0
    %1875 = vmatpush.msra.mxu0 0.0
    %1876 = vmatpush.msra.mxu0 0.0
    %1877 = vmatpush.msra.mxu0 0.0
    %1878 = vmatpush.msra.mxu0 0.0
    %1879 = vmatpush.msra.mxu0 0.0
    %1880 = vmatpush.msra.mxu0 %v1861
    %1881 = vmatpush.msra.mxu0 %v1860
    %1882 = vmatmul.f32.gmra.mxu0 %v1862
    %v1883 = vpop.f32.mrf.mxu0
    %v1884 = vadd.f32 0.0, %v1883
    %1885 = vmatmul.f32.gmra.mxu0 %v1864
    %v1886 = vpop.f32.mrf.mxu0
    %v1887 = vadd.f32 0.0, %v1886
    %1888 = vdwg.mxu0
    %v1889 = vadd.f32 %v1854, %v1884
    %v1890 = vadd.f32 %v1857, %v1887
    %s1891 = scalar_lea.vmem [#allocation13], 48
    %v1892 = vld [vmem:[%s1891] sm:$0xff]
    %v1893 = vld [vmem:[%s1891 + $0x8] sm:$0xff]
    %v1894 = vrot.slane %v1788, 1
    %v1895 = vrot.slane %v1789, 1
    %v1896 = vsel %vm520, %v1894, %v1895
    %v1897 = vsel %vm520, %v1895, %v522
    %v1898 = vsel %vm809, %v1896, 0
    %v1900 = vsel %vm809, %v1897, 0
    %1902 = vmatpush.msra.mxu0 0.0
    %1903 = vmatpush.msra.mxu0 0.0
    %1904 = vmatpush.msra.mxu0 0.0
    %1905 = vmatpush.msra.mxu0 0.0
    %1906 = vmatpush.msra.mxu0 0.0
    %1907 = vmatpush.msra.mxu0 0.0
    %1908 = vmatpush.msra.mxu0 0.0
    %1909 = vmatpush.msra.mxu0 0.0
    %1910 = vmatpush.msra.mxu0 0.0
    %1911 = vmatpush.msra.mxu0 0.0
    %1912 = vmatpush.msra.mxu0 0.0
    %1913 = vmatpush.msra.mxu0 0.0
    %1914 = vmatpush.msra.mxu0 0.0
    %1915 = vmatpush.msra.mxu0 0.0
    %1916 = vmatpush.msra.mxu0 %v1893
    %1917 = vmatpush.msra.mxu0 %v1892
    %1918 = vmatmul.f32.gmra.mxu0 %v1898
    %v1919 = vpop.f32.mrf.mxu0
    %v1920 = vadd.f32 0.0, %v1919
    %1921 = vmatmul.f32.gmra.mxu0 %v1900
    %v1922 = vpop.f32.mrf.mxu0
    %v1923 = vadd.f32 0.0, %v1922
    %1924 = vdwg.mxu0
    %v1925 = vadd.f32 %v1889, %v1920
    %v1926 = vadd.f32 %v1890, %v1923
    %s1927 = scalar_lea.vmem [#allocation13], 64
    %v1928 = vld [vmem:[%s1927] sm:$0xff]
    %v1929 = vld [vmem:[%s1927 + $0x8] sm:$0xff]
    %v1930 = vrot.slane %v1788, 2
    %v1931 = vrot.slane %v1789, 2
    %v1932 = vsel %vm552, %v1930, %v1931
    %v1933 = vsel %vm552, %v1931, %v554
    %v1934 = vsel %vm809, %v1932, 0
    %v1936 = vsel %vm809, %v1933, 0
    %1938 = vmatpush.msra.mxu0 0.0
    %1939 = vmatpush.msra.mxu0 0.0
    %1940 = vmatpush.msra.mxu0 0.0
    %1941 = vmatpush.msra.mxu0 0.0
    %1942 = vmatpush.msra.mxu0 0.0
    %1943 = vmatpush.msra.mxu0 0.0
    %1944 = vmatpush.msra.mxu0 0.0
    %1945 = vmatpush.msra.mxu0 0.0
    %1946 = vmatpush.msra.mxu0 0.0
    %1947 = vmatpush.msra.mxu0 0.0
    %1948 = vmatpush.msra.mxu0 0.0
    %1949 = vmatpush.msra.mxu0 0.0
    %1950 = vmatpush.msra.mxu0 0.0
    %1951 = vmatpush.msra.mxu0 0.0
    %1952 = vmatpush.msra.mxu0 %v1929
    %1953 = vmatpush.msra.mxu0 %v1928
    %1954 = vmatmul.f32.gmra.mxu0 %v1934
    %v1955 = vpop.f32.mrf.mxu0
    %v1956 = vadd.f32 0.0, %v1955
    %1957 = vmatmul.f32.gmra.mxu0 %v1936
    %v1958 = vpop.f32.mrf.mxu0
    %v1959 = vadd.f32 0.0, %v1958
    %1960 = vdwg.mxu0
    %v1961 = vadd.f32 %v1925, %v1956
    %v1962 = vadd.f32 %v1926, %v1959
    %v1963 = vld [vmem:[%s45] sm:$0x1]
    %v1965 = vperm.slane %v1963, 0
    %v1967 = vadd.f32 %v1961, %v1965
    %v1968 = vadd.f32 %v1962, %v1965
    %v1969 = vadd.f32 %v1597, %v1967
    %v1970 = vadd.f32 %v1598, %v1968
    %v1971 = vadd.f32 %v1253, %v1969
    %v1972 = vadd.f32 %v1254, %v1970
    %v1973 = vmul.f32 %v1971, 0.5
    %v1974 = vmul.f32 %v1972, 0.5
    %vm1975 = vcmp.gt.f32.partialorder %v1973, 0.0
    %vm1976 = vcmp.gt.f32.partialorder %v1974, 0.0
    %v1977 = vmul.f32 %v1973, 0.1
    %v1978 = vmul.f32 %v1974, 0.1
    %v1979 = vsel %vm1975, %v1973, %v1977
    %v1980 = vsel %vm1976, %v1974, %v1978
    %s1981 = scalar_lea.vmem %s47, 16
    %v1982 = vld [vmem:[%s1981] sm:$0xff]
    %v1983 = vld [vmem:[%s1981 + $0x8] sm:$0xff]
    %s1984 = scalar_lea.vmem %s47, 48
    %v1985 = vld [vmem:[%s1984] sm:$0xff]
    %v1986 = vld [vmem:[%s1984 + $0x8] sm:$0xff]
    %v1989 = vrot.slane %v1979, 7
    %v1990 = vsel %vm460, %v461, %v1989
    %v1991 = vrot.slane %v1980, 7
    %v1992 = vsel %vm460, %v1989, %v1991
    %v1993 = vsel %vm809, %v1990, 0
    %v1995 = vsel %vm809, %v1992, 0
    %1997 = vmatpush.msra.mxu0 0.0
    %1998 = vmatpush.msra.mxu0 0.0
    %1999 = vmatpush.msra.mxu0 0.0
    %2000 = vmatpush.msra.mxu0 0.0
    %2001 = vmatpush.msra.mxu0 0.0
    %2002 = vmatpush.msra.mxu0 0.0
    %2003 = vmatpush.msra.mxu0 0.0
    %2004 = vmatpush.msra.mxu0 0.0
    %2005 = vmatpush.msra.mxu0 0.0
    %2006 = vmatpush.msra.mxu0 0.0
    %2007 = vmatpush.msra.mxu0 0.0
    %2008 = vmatpush.msra.mxu0 0.0
    %2009 = vmatpush.msra.mxu0 0.0
    %2010 = vmatpush.msra.mxu0 0.0
    %2011 = vmatpush.msra.mxu0 %v1986
    %2012 = vmatpush.msra.mxu0 %v1985
    %2013 = vmatmul.f32.gmra.mxu0 %v1993
    %v2014 = vpop.f32.mrf.mxu0
    %v2015 = vadd.f32 0.0, %v2014
    %2016 = vmatmul.f32.gmra.mxu0 %v1995
    %v2017 = vpop.f32.mrf.mxu0
    %v2018 = vadd.f32 0.0, %v2017
    %2019 = vdwg.mxu0
    %v2020 = vsel %vm809, %v1979, 0
    %v2022 = vsel %vm809, %v1980, 0
    %2024 = vmatpush.msra.mxu0 0.0
    %2025 = vmatpush.msra.mxu0 0.0
    %2026 = vmatpush.msra.mxu0 0.0
    %2027 = vmatpush.msra.mxu0 0.0
    %2028 = vmatpush.msra.mxu0 0.0
    %2029 = vmatpush.msra.mxu0 0.0
    %2030 = vmatpush.msra.mxu0 0.0
    %2031 = vmatpush.msra.mxu0 0.0
    %2032 = vmatpush.msra.mxu0 0.0
    %2033 = vmatpush.msra.mxu0 0.0
    %2034 = vmatpush.msra.mxu0 0.0
    %2035 = vmatpush.msra.mxu0 0.0
    %2036 = vmatpush.msra.mxu0 0.0
    %2037 = vmatpush.msra.mxu0 0.0
    %2038 = vmatpush.msra.mxu0 %v1983
    %2039 = vmatpush.msra.mxu0 %v1982
    %2040 = vmatmul.f32.gmra.mxu0 %v2020
    %v2041 = vpop.f32.mrf.mxu0
    %v2042 = vadd.f32 %v2015, %v2041
    %2043 = vmatmul.f32.gmra.mxu0 %v2022
    %v2044 = vpop.f32.mrf.mxu0
    %v2045 = vadd.f32 %v2018, %v2044
    %2046 = vdwg.mxu0
    %v2047 = vld [vmem:[%s47] sm:$0xff]
    %v2048 = vld [vmem:[%s47 + $0x8] sm:$0xff]
    %s2049 = scalar_lea.vmem %s47, 32
    %v2050 = vld [vmem:[%s2049] sm:$0xff]
    %v2051 = vld [vmem:[%s2049 + $0x8] sm:$0xff]
    %2052 = vmatpush.msra.mxu0 0.0
    %2053 = vmatpush.msra.mxu0 0.0
    %2054 = vmatpush.msra.mxu0 0.0
    %2055 = vmatpush.msra.mxu0 0.0
    %2056 = vmatpush.msra.mxu0 0.0
    %2057 = vmatpush.msra.mxu0 0.0
    %2058 = vmatpush.msra.mxu0 0.0
    %2059 = vmatpush.msra.mxu0 0.0
    %2060 = vmatpush.msra.mxu0 0.0
    %2061 = vmatpush.msra.mxu0 0.0
    %2062 = vmatpush.msra.mxu0 0.0
    %2063 = vmatpush.msra.mxu0 0.0
    %2064 = vmatpush.msra.mxu0 0.0
    %2065 = vmatpush.msra.mxu0 0.0
    %2066 = vmatpush.msra.mxu0 %v2051
    %2067 = vmatpush.msra.mxu0 %v2050
    %2068 = vmatmul.f32.gmra.mxu0 %v2020
    %v2069 = vpop.f32.mrf.mxu0
    %v2070 = vadd.f32 0.0, %v2069
    %2071 = vmatmul.f32.gmra.mxu0 %v2022
    %v2072 = vpop.f32.mrf.mxu0
    %v2073 = vadd.f32 0.0, %v2072
    %2074 = vdwg.mxu0
    %v2075 = vrot.slane %v1979, 1
    %v2076 = vrot.slane %v1980, 1
    %v2077 = vsel %vm520, %v2075, %v2076
    %v2078 = vsel %vm520, %v2076, %v522
    %v2079 = vsel %vm809, %v2077, 0
    %v2081 = vsel %vm809, %v2078, 0
    %2083 = vmatpush.msra.mxu0 0.0
    %2084 = vmatpush.msra.mxu0 0.0
    %2085 = vmatpush.msra.mxu0 0.0
    %2086 = vmatpush.msra.mxu0 0.0
    %2087 = vmatpush.msra.mxu0 0.0
    %2088 = vmatpush.msra.mxu0 0.0
    %2089 = vmatpush.msra.mxu0 0.0
    %2090 = vmatpush.msra.mxu0 0.0
    %2091 = vmatpush.msra.mxu0 0.0
    %2092 = vmatpush.msra.mxu0 0.0
    %2093 = vmatpush.msra.mxu0 0.0
    %2094 = vmatpush.msra.mxu0 0.0
    %2095 = vmatpush.msra.mxu0 0.0
    %2096 = vmatpush.msra.mxu0 0.0
    %2097 = vmatpush.msra.mxu0 %v2048
    %2098 = vmatpush.msra.mxu0 %v2047
    %2099 = vmatmul.f32.gmra.mxu0 %v2079
    %v2100 = vpop.f32.mrf.mxu0
    %v2101 = vadd.f32 %v2070, %v2100
    %2102 = vmatmul.f32.gmra.mxu0 %v2081
    %v2103 = vpop.f32.mrf.mxu0
    %v2104 = vadd.f32 %v2073, %v2103
    %2105 = vdwg.mxu0
    %v2106 = vld [vmem:[%s51] sm:$0xff]
    %v2107 = vld [vmem:[%s51 + $0x8] sm:$0xff]
    %v2108 = vld [vmem:[%s51 + $0x10] sm:$0xff]
    %v2109 = vld [vmem:[%s51 + $0x18] sm:$0xff]
    %v2110 = vld [vmem:[%s53] sm:$0xff]
    %v2111 = vld [vmem:[%s53 + $0x8] sm:$0xff]
    %v2112 = vld [vmem:[%s53 + $0x10] sm:$0xff]
    %v2113 = vld [vmem:[%s53 + $0x18] sm:$0xff]
    %v2115 = vsel %vm809, %v2110, 0
    %v2118 = vsel %vm809, %v2111, 0
    %v2121 = vsel %vm809, %v2112, 0
    %v2124 = vsel %vm809, %v2113, 0
    %2126 = vmatpush.msra.mxu0 0.0
    %2127 = vmatpush.msra.mxu0 0.0
    %2128 = vmatpush.msra.mxu0 0.0
    %2129 = vmatpush.msra.mxu0 0.0
    %2130 = vmatpush.msra.mxu0 0.0
    %2131 = vmatpush.msra.mxu0 0.0
    %2132 = vmatpush.msra.mxu0 0.0
    %2133 = vmatpush.msra.mxu0 0.0
    %2134 = vmatpush.msra.mxu0 0.0
    %2135 = vmatpush.msra.mxu0 0.0
    %2136 = vmatpush.msra.mxu0 0.0
    %2137 = vmatpush.msra.mxu0 0.0
    %2138 = vmatpush.msra.mxu0 0.0
    %2139 = vmatpush.msra.mxu0 0.0
    %2140 = vmatpush.msra.mxu0 %v2104
    %2141 = vmatpush.msra.mxu0 %v2101
    %2142 = vmatmul.f32.gmra.mxu0 %v2115
    %v2143 = vpop.f32.mrf.mxu0
    %v2144 = vadd.f32 0.0, %v2143
    %2145 = vmatmul.f32.gmra.mxu0 %v2118
    %v2146 = vpop.f32.mrf.mxu0
    %v2147 = vadd.f32 0.0, %v2146
    %2148 = vmatmul.f32.gmra.mxu0 %v2121
    %v2149 = vpop.f32.mrf.mxu0
    %v2150 = vadd.f32 0.0, %v2149
    %2151 = vmatmul.f32.gmra.mxu0 %v2124
    %v2152 = vpop.f32.mrf.mxu0
    %v2153 = vadd.f32 0.0, %v2152
    %2154 = vdwg.mxu0
    %v2156 = vsel %vm809, %v2106, 0
    %v2159 = vsel %vm809, %v2107, 0
    %v2162 = vsel %vm809, %v2108, 0
    %v2165 = vsel %vm809, %v2109, 0
    %2167 = vmatpush.msra.mxu0 0.0
    %2168 = vmatpush.msra.mxu0 0.0
    %2169 = vmatpush.msra.mxu0 0.0
    %2170 = vmatpush.msra.mxu0 0.0
    %2171 = vmatpush.msra.mxu0 0.0
    %2172 = vmatpush.msra.mxu0 0.0
    %2173 = vmatpush.msra.mxu0 0.0
    %2174 = vmatpush.msra.mxu0 0.0
    %2175 = vmatpush.msra.mxu0 0.0
    %2176 = vmatpush.msra.mxu0 0.0
    %2177 = vmatpush.msra.mxu0 0.0
    %2178 = vmatpush.msra.mxu0 0.0
    %2179 = vmatpush.msra.mxu0 0.0
    %2180 = vmatpush.msra.mxu0 0.0
    %2181 = vmatpush.msra.mxu0 %v2045
    %2182 = vmatpush.msra.mxu0 %v2042
    %2183 = vmatmul.f32.gmra.mxu0 %v2156
    %v2184 = vpop.f32.mrf.mxu0
    %v2185 = vadd.f32 %v2144, %v2184
    %2186 = vmatmul.f32.gmra.mxu0 %v2159
    %v2187 = vpop.f32.mrf.mxu0
    %v2188 = vadd.f32 %v2147, %v2187
    %2189 = vmatmul.f32.gmra.mxu0 %v2162
    %v2190 = vpop.f32.mrf.mxu0
    %v2191 = vadd.f32 %v2150, %v2190
    %2192 = vmatmul.f32.gmra.mxu0 %v2165
    %v2193 = vpop.f32.mrf.mxu0
    %v2194 = vadd.f32 %v2153, %v2193
    %2195 = vdwg.mxu0
    %v2196 = vld [vmem:[%s49] sm:$0x1]
    %v2198 = vperm.slane %v2196, 0
    %v2200 = vadd.f32 %v2185, %v2198
    %v2201 = vadd.f32 %v2188, %v2198
    %v2202 = vadd.f32 %v2191, %v2198
    %v2203 = vadd.f32 %v2194, %v2198
    %vm2204 = vcmp.gt.f32.partialorder %v2200, 0.0
    %vm2205 = vcmp.gt.f32.partialorder %v2201, 0.0
    %vm2206 = vcmp.gt.f32.partialorder %v2202, 0.0
    %vm2207 = vcmp.gt.f32.partialorder %v2203, 0.0
    %v2208 = vmul.f32 %v2200, 0.1
    %v2209 = vmul.f32 %v2201, 0.1
    %v2210 = vmul.f32 %v2202, 0.1
    %v2211 = vmul.f32 %v2203, 0.1
    %v2212 = vsel %vm2204, %v2200, %v2208
    %v2213 = vsel %vm2205, %v2201, %v2209
    %v2214 = vsel %vm2206, %v2202, %v2210
    %v2215 = vsel %vm2207, %v2203, %v2211
    %v2216 = vld [vmem:[#allocation14] sm:$0xff]
    %s2217 = scalar_lea.vmem [#allocation14], 8
    %v2218 = vld [vmem:[%s2217] sm:$0xff]
    %v2220 = vsel %vm733, %v2212, 0
    %v2223 = vsel %vm733, %v2213, 0
    %v2226 = vsel %vm733, %v2214, 0
    %v2229 = vsel %vm733, %v2215, 0
    %2231 = vmatpush.msra.mxu0 0.0
    %2232 = vmatpush.msra.mxu0 0.0
    %2233 = vmatpush.msra.mxu0 0.0
    %2234 = vmatpush.msra.mxu0 0.0
    %2235 = vmatpush.msra.mxu0 0.0
    %2236 = vmatpush.msra.mxu0 0.0
    %2237 = vmatpush.msra.mxu0 0.0
    %2238 = vmatpush.msra.mxu0 0.0
    %2239 = vmatpush.msra.mxu0 0.0
    %2240 = vmatpush.msra.mxu0 0.0
    %2241 = vmatpush.msra.mxu0 0.0
    %2242 = vmatpush.msra.mxu0 0.0
    %2243 = vmatpush.msra.mxu0 0.0
    %2244 = vmatpush.msra.mxu0 0.0
    %2245 = vmatpush.msra.mxu0 0.0
    %2246 = vmatpush.msra.mxu0 %v2218
    %2247 = vmatmul.f32.gmra.mxu0 %v2220
    %v2248 = vpop.f32.mrf.mxu0
    %v2249 = vadd.f32 0.0, %v2248
    %2250 = vmatmul.f32.gmra.mxu0 %v2223
    %v2251 = vpop.f32.mrf.mxu0
    %v2252 = vadd.f32 0.0, %v2251
    %2253 = vmatmul.f32.gmra.mxu0 %v2226
    %v2254 = vpop.f32.mrf.mxu0
    %v2255 = vadd.f32 0.0, %v2254
    %2256 = vmatmul.f32.gmra.mxu0 %v2229
    %v2257 = vpop.f32.mrf.mxu0
    %v2258 = vadd.f32 0.0, %v2257
    %2259 = vdwg.mxu0
    %v2260 = vrot.slane %v2212, 7
    %v2261 = vsel %vm460, %v461, %v2260
    %v2262 = vrot.slane %v2213, 7
    %v2263 = vsel %vm460, %v2260, %v2262
    %v2264 = vrot.slane %v2214, 7
    %v2265 = vsel %vm460, %v2262, %v2264
    %v2266 = vrot.slane %v2215, 7
    %v2267 = vsel %vm460, %v2264, %v2266
    %v2268 = vsel %vm733, %v2261, 0
    %v2270 = vsel %vm733, %v2263, 0
    %v2272 = vsel %vm733, %v2265, 0
    %v2274 = vsel %vm733, %v2267, 0
    %2276 = vmatpush.msra.mxu0 0.0
    %2277 = vmatpush.msra.mxu0 0.0
    %2278 = vmatpush.msra.mxu0 0.0
    %2279 = vmatpush.msra.mxu0 0.0
    %2280 = vmatpush.msra.mxu0 0.0
    %2281 = vmatpush.msra.mxu0 0.0
    %2282 = vmatpush.msra.mxu0 0.0
    %2283 = vmatpush.msra.mxu0 0.0
    %2284 = vmatpush.msra.mxu0 0.0
    %2285 = vmatpush.msra.mxu0 0.0
    %2286 = vmatpush.msra.mxu0 0.0
    %2287 = vmatpush.msra.mxu0 0.0
    %2288 = vmatpush.msra.mxu0 0.0
    %2289 = vmatpush.msra.mxu0 0.0
    %2290 = vmatpush.msra.mxu0 0.0
    %2291 = vmatpush.msra.mxu0 %v2216
    %2292 = vmatmul.f32.gmra.mxu0 %v2268
    %v2293 = vpop.f32.mrf.mxu0
    %v2294 = vadd.f32 %v2249, %v2293
    %2295 = vmatmul.f32.gmra.mxu0 %v2270
    %v2296 = vpop.f32.mrf.mxu0
    %v2297 = vadd.f32 %v2252, %v2296
    %2298 = vmatmul.f32.gmra.mxu0 %v2272
    %v2299 = vpop.f32.mrf.mxu0
    %v2300 = vadd.f32 %v2255, %v2299
    %2301 = vmatmul.f32.gmra.mxu0 %v2274
    %v2302 = vpop.f32.mrf.mxu0
    %v2303 = vadd.f32 %v2258, %v2302
    %2304 = vdwg.mxu0
    %s2305 = scalar_lea.vmem [#allocation14], 16
    %v2306 = vld [vmem:[%s2305] sm:$0xff]
    %v2307 = vrot.slane %v2212, 1
    %v2308 = vrot.slane %v2213, 1
    %v2309 = vsel %vm520, %v2307, %v2308
    %v2310 = vrot.slane %v2214, 1
    %v2311 = vsel %vm520, %v2308, %v2310
    %v2312 = vrot.slane %v2215, 1
    %v2313 = vsel %vm520, %v2310, %v2312
    %v2314 = vsel %vm520, %v2312, %v522
    %v2315 = vsel %vm733, %v2309, 0
    %v2317 = vsel %vm733, %v2311, 0
    %v2319 = vsel %vm733, %v2313, 0
    %v2321 = vsel %vm733, %v2314, 0
    %2323 = vmatpush.msra.mxu0 0.0
    %2324 = vmatpush.msra.mxu0 0.0
    %2325 = vmatpush.msra.mxu0 0.0
    %2326 = vmatpush.msra.mxu0 0.0
    %2327 = vmatpush.msra.mxu0 0.0
    %2328 = vmatpush.msra.mxu0 0.0
    %2329 = vmatpush.msra.mxu0 0.0
    %2330 = vmatpush.msra.mxu0 0.0
    %2331 = vmatpush.msra.mxu0 0.0
    %2332 = vmatpush.msra.mxu0 0.0
    %2333 = vmatpush.msra.mxu0 0.0
    %2334 = vmatpush.msra.mxu0 0.0
    %2335 = vmatpush.msra.mxu0 0.0
    %2336 = vmatpush.msra.mxu0 0.0
    %2337 = vmatpush.msra.mxu0 0.0
    %2338 = vmatpush.msra.mxu0 %v2306
    %2339 = vmatmul.f32.gmra.mxu0 %v2315
    %v2340 = vpop.f32.mrf.mxu0
    %v2341 = vadd.f32 0.0, %v2340
    %2342 = vmatmul.f32.gmra.mxu0 %v2317
    %v2343 = vpop.f32.mrf.mxu0
    %v2344 = vadd.f32 0.0, %v2343
    %2345 = vmatmul.f32.gmra.mxu0 %v2319
    %v2346 = vpop.f32.mrf.mxu0
    %v2347 = vadd.f32 0.0, %v2346
    %2348 = vmatmul.f32.gmra.mxu0 %v2321
    %v2349 = vpop.f32.mrf.mxu0
    %v2350 = vadd.f32 0.0, %v2349
    %2351 = vdwg.mxu0
    %v2352 = vadd.f32 %v2294, %v2341
    %v2353 = vadd.f32 %v2297, %v2344
    %v2354 = vadd.f32 %v2300, %v2347
    %v2355 = vadd.f32 %v2303, %v2350
    %v2356 = vld [vmem:[%s57] sm:$0x1]
    %v2358 = vperm.slane %v2356, 0
    %v2360 = vadd.f32 %v2352, %v2358
    %v2361 = vadd.f32 %v2353, %v2358
    %v2362 = vadd.f32 %v2354, %v2358
    %v2363 = vadd.f32 %v2355, %v2358
    %vm2364 = vcmp.gt.f32.partialorder %v2360, 0.0
    %vm2365 = vcmp.gt.f32.partialorder %v2361, 0.0
    %vm2366 = vcmp.gt.f32.partialorder %v2362, 0.0
    %vm2367 = vcmp.gt.f32.partialorder %v2363, 0.0
    %v2368 = vmul.f32 %v2360, 0.1
    %v2369 = vmul.f32 %v2361, 0.1
    %v2370 = vmul.f32 %v2362, 0.1
    %v2371 = vmul.f32 %v2363, 0.1
    %v2372 = vsel %vm2364, %v2360, %v2368
    %v2373 = vsel %vm2365, %v2361, %v2369
    %v2374 = vsel %vm2366, %v2362, %v2370
    %v2375 = vsel %vm2367, %v2363, %v2371
    %v2376 = vld [vmem:[#allocation17] sm:$0xff]
    %s2377 = scalar_lea.vmem [#allocation17], 8
    %v2378 = vld [vmem:[%s2377] sm:$0xff]
    %v2380 = vsel %vm733, %v2372, 0
    %v2383 = vsel %vm733, %v2373, 0
    %v2386 = vsel %vm733, %v2374, 0
    %v2389 = vsel %vm733, %v2375, 0
    %2391 = vmatpush.msra.mxu0 0.0
    %2392 = vmatpush.msra.mxu0 0.0
    %2393 = vmatpush.msra.mxu0 0.0
    %2394 = vmatpush.msra.mxu0 0.0
    %2395 = vmatpush.msra.mxu0 0.0
    %2396 = vmatpush.msra.mxu0 0.0
    %2397 = vmatpush.msra.mxu0 0.0
    %2398 = vmatpush.msra.mxu0 0.0
    %2399 = vmatpush.msra.mxu0 0.0
    %2400 = vmatpush.msra.mxu0 0.0
    %2401 = vmatpush.msra.mxu0 0.0
    %2402 = vmatpush.msra.mxu0 0.0
    %2403 = vmatpush.msra.mxu0 0.0
    %2404 = vmatpush.msra.mxu0 0.0
    %2405 = vmatpush.msra.mxu0 0.0
    %2406 = vmatpush.msra.mxu0 %v2378
    %2407 = vmatmul.f32.gmra.mxu0 %v2380
    %v2408 = vpop.f32.mrf.mxu0
    %v2409 = vadd.f32 0.0, %v2408
    %2410 = vmatmul.f32.gmra.mxu0 %v2383
    %v2411 = vpop.f32.mrf.mxu0
    %v2412 = vadd.f32 0.0, %v2411
    %2413 = vmatmul.f32.gmra.mxu0 %v2386
    %v2414 = vpop.f32.mrf.mxu0
    %v2415 = vadd.f32 0.0, %v2414
    %2416 = vmatmul.f32.gmra.mxu0 %v2389
    %v2417 = vpop.f32.mrf.mxu0
    %v2418 = vadd.f32 0.0, %v2417
    %2419 = vdwg.mxu0
    %v2420 = vrot.slane %v2372, 7
    %v2421 = vsel %vm460, %v461, %v2420
    %v2422 = vrot.slane %v2373, 7
    %v2423 = vsel %vm460, %v2420, %v2422
    %v2424 = vrot.slane %v2374, 7
    %v2425 = vsel %vm460, %v2422, %v2424
    %v2426 = vrot.slane %v2375, 7
    %v2427 = vsel %vm460, %v2424, %v2426
    %v2428 = vsel %vm733, %v2421, 0
    %v2430 = vsel %vm733, %v2423, 0
    %v2432 = vsel %vm733, %v2425, 0
    %v2434 = vsel %vm733, %v2427, 0
    %2436 = vmatpush.msra.mxu0 0.0
    %2437 = vmatpush.msra.mxu0 0.0
    %2438 = vmatpush.msra.mxu0 0.0
    %2439 = vmatpush.msra.mxu0 0.0
    %2440 = vmatpush.msra.mxu0 0.0
    %2441 = vmatpush.msra.mxu0 0.0
    %2442 = vmatpush.msra.mxu0 0.0
    %2443 = vmatpush.msra.mxu0 0.0
    %2444 = vmatpush.msra.mxu0 0.0
    %2445 = vmatpush.msra.mxu0 0.0
    %2446 = vmatpush.msra.mxu0 0.0
    %2447 = vmatpush.msra.mxu0 0.0
    %2448 = vmatpush.msra.mxu0 0.0
    %2449 = vmatpush.msra.mxu0 0.0
    %2450 = vmatpush.msra.mxu0 0.0
    %2451 = vmatpush.msra.mxu0 %v2376
    %2452 = vmatmul.f32.gmra.mxu0 %v2428
    %v2453 = vpop.f32.mrf.mxu0
    %v2454 = vadd.f32 %v2409, %v2453
    %2455 = vmatmul.f32.gmra.mxu0 %v2430
    %v2456 = vpop.f32.mrf.mxu0
    %v2457 = vadd.f32 %v2412, %v2456
    %2458 = vmatmul.f32.gmra.mxu0 %v2432
    %v2459 = vpop.f32.mrf.mxu0
    %v2460 = vadd.f32 %v2415, %v2459
    %2461 = vmatmul.f32.gmra.mxu0 %v2434
    %v2462 = vpop.f32.mrf.mxu0
    %v2463 = vadd.f32 %v2418, %v2462
    %2464 = vdwg.mxu0
    %s2465 = scalar_lea.vmem [#allocation17], 16
    %v2466 = vld [vmem:[%s2465] sm:$0xff]
    %v2467 = vrot.slane %v2372, 1
    %v2468 = vrot.slane %v2373, 1
    %v2469 = vsel %vm520, %v2467, %v2468
    %v2470 = vrot.slane %v2374, 1
    %v2471 = vsel %vm520, %v2468, %v2470
    %v2472 = vrot.slane %v2375, 1
    %v2473 = vsel %vm520, %v2470, %v2472
    %v2474 = vsel %vm520, %v2472, %v522
    %v2475 = vsel %vm733, %v2469, 0
    %v2477 = vsel %vm733, %v2471, 0
    %v2479 = vsel %vm733, %v2473, 0
    %v2481 = vsel %vm733, %v2474, 0
    %2483 = vmatpush.msra.mxu0 0.0
    %2484 = vmatpush.msra.mxu0 0.0
    %2485 = vmatpush.msra.mxu0 0.0
    %2486 = vmatpush.msra.mxu0 0.0
    %2487 = vmatpush.msra.mxu0 0.0
    %2488 = vmatpush.msra.mxu0 0.0
    %2489 = vmatpush.msra.mxu0 0.0
    %2490 = vmatpush.msra.mxu0 0.0
    %2491 = vmatpush.msra.mxu0 0.0
    %2492 = vmatpush.msra.mxu0 0.0
    %2493 = vmatpush.msra.mxu0 0.0
    %2494 = vmatpush.msra.mxu0 0.0
    %2495 = vmatpush.msra.mxu0 0.0
    %2496 = vmatpush.msra.mxu0 0.0
    %2497 = vmatpush.msra.mxu0 0.0
    %2498 = vmatpush.msra.mxu0 %v2466
    %2499 = vmatmul.f32.gmra.mxu0 %v2475
    %v2500 = vpop.f32.mrf.mxu0
    %v2501 = vadd.f32 0.0, %v2500
    %2502 = vmatmul.f32.gmra.mxu0 %v2477
    %v2503 = vpop.f32.mrf.mxu0
    %v2504 = vadd.f32 0.0, %v2503
    %2505 = vmatmul.f32.gmra.mxu0 %v2479
    %v2506 = vpop.f32.mrf.mxu0
    %v2507 = vadd.f32 0.0, %v2506
    %2508 = vmatmul.f32.gmra.mxu0 %v2481
    %v2509 = vpop.f32.mrf.mxu0
    %v2510 = vadd.f32 0.0, %v2509
    %2511 = vdwg.mxu0
    %v2512 = vadd.f32 %v2454, %v2501
    %v2513 = vadd.f32 %v2457, %v2504
    %v2514 = vadd.f32 %v2460, %v2507
    %v2515 = vadd.f32 %v2463, %v2510
    %v2516 = vld [vmem:[%s65] sm:$0x1]
    %v2518 = vperm.slane %v2516, 0
    %v2520 = vadd.f32 %v2512, %v2518
    %v2521 = vadd.f32 %v2513, %v2518
    %v2522 = vadd.f32 %v2514, %v2518
    %v2523 = vadd.f32 %v2515, %v2518
    %v2524 = vadd.f32 %v2200, %v2520
    %v2525 = vadd.f32 %v2201, %v2521
    %v2526 = vadd.f32 %v2202, %v2522
    %v2527 = vadd.f32 %v2203, %v2523
    %vm2528 = vcmp.gt.f32.partialorder %v2524, 0.0
    %vm2529 = vcmp.gt.f32.partialorder %v2525, 0.0
    %vm2530 = vcmp.gt.f32.partialorder %v2526, 0.0
    %vm2531 = vcmp.gt.f32.partialorder %v2527, 0.0
    %v2532 = vmul.f32 %v2524, 0.1
    %v2533 = vmul.f32 %v2525, 0.1
    %v2534 = vmul.f32 %v2526, 0.1
    %v2535 = vmul.f32 %v2527, 0.1
    %v2536 = vsel %vm2528, %v2524, %v2532
    %v2537 = vsel %vm2529, %v2525, %v2533
    %v2538 = vsel %vm2530, %v2526, %v2534
    %v2539 = vsel %vm2531, %v2527, %v2535
    %v2540 = vld [vmem:[#allocation16] sm:$0xff]
    %s2541 = scalar_lea.vmem [#allocation16], 8
    %v2542 = vld [vmem:[%s2541] sm:$0xff]
    %v2544 = vsel %vm733, %v2536, 0
    %v2547 = vsel %vm733, %v2537, 0
    %v2550 = vsel %vm733, %v2538, 0
    %v2553 = vsel %vm733, %v2539, 0
    %2555 = vmatpush.msra.mxu0 0.0
    %2556 = vmatpush.msra.mxu0 0.0
    %2557 = vmatpush.msra.mxu0 0.0
    %2558 = vmatpush.msra.mxu0 0.0
    %2559 = vmatpush.msra.mxu0 0.0
    %2560 = vmatpush.msra.mxu0 0.0
    %2561 = vmatpush.msra.mxu0 0.0
    %2562 = vmatpush.msra.mxu0 0.0
    %2563 = vmatpush.msra.mxu0 0.0
    %2564 = vmatpush.msra.mxu0 0.0
    %2565 = vmatpush.msra.mxu0 0.0
    %2566 = vmatpush.msra.mxu0 0.0
    %2567 = vmatpush.msra.mxu0 0.0
    %2568 = vmatpush.msra.mxu0 0.0
    %2569 = vmatpush.msra.mxu0 0.0
    %2570 = vmatpush.msra.mxu0 %v2542
    %2571 = vmatmul.f32.gmra.mxu0 %v2544
    %v2572 = vpop.f32.mrf.mxu0
    %v2573 = vadd.f32 0.0, %v2572
    %2574 = vmatmul.f32.gmra.mxu0 %v2547
    %v2575 = vpop.f32.mrf.mxu0
    %v2576 = vadd.f32 0.0, %v2575
    %2577 = vmatmul.f32.gmra.mxu0 %v2550
    %v2578 = vpop.f32.mrf.mxu0
    %v2579 = vadd.f32 0.0, %v2578
    %2580 = vmatmul.f32.gmra.mxu0 %v2553
    %v2581 = vpop.f32.mrf.mxu0
    %v2582 = vadd.f32 0.0, %v2581
    %2583 = vdwg.mxu0
    %v2584 = vrot.slane %v2536, 5
    %v2585 = vsel %vm429, %v430, %v2584
    %v2586 = vrot.slane %v2537, 5
    %v2587 = vsel %vm429, %v2584, %v2586
    %v2588 = vrot.slane %v2538, 5
    %v2589 = vsel %vm429, %v2586, %v2588
    %v2590 = vrot.slane %v2539, 5
    %v2591 = vsel %vm429, %v2588, %v2590
    %v2592 = vsel %vm733, %v2585, 0
    %v2594 = vsel %vm733, %v2587, 0
    %v2596 = vsel %vm733, %v2589, 0
    %v2598 = vsel %vm733, %v2591, 0
    %2600 = vmatpush.msra.mxu0 0.0
    %2601 = vmatpush.msra.mxu0 0.0
    %2602 = vmatpush.msra.mxu0 0.0
    %2603 = vmatpush.msra.mxu0 0.0
    %2604 = vmatpush.msra.mxu0 0.0
    %2605 = vmatpush.msra.mxu0 0.0
    %2606 = vmatpush.msra.mxu0 0.0
    %2607 = vmatpush.msra.mxu0 0.0
    %2608 = vmatpush.msra.mxu0 0.0
    %2609 = vmatpush.msra.mxu0 0.0
    %2610 = vmatpush.msra.mxu0 0.0
    %2611 = vmatpush.msra.mxu0 0.0
    %2612 = vmatpush.msra.mxu0 0.0
    %2613 = vmatpush.msra.mxu0 0.0
    %2614 = vmatpush.msra.mxu0 0.0
    %2615 = vmatpush.msra.mxu0 %v2540
    %2616 = vmatmul.f32.gmra.mxu0 %v2592
    %v2617 = vpop.f32.mrf.mxu0
    %v2618 = vadd.f32 %v2573, %v2617
    %2619 = vmatmul.f32.gmra.mxu0 %v2594
    %v2620 = vpop.f32.mrf.mxu0
    %v2621 = vadd.f32 %v2576, %v2620
    %2622 = vmatmul.f32.gmra.mxu0 %v2596
    %v2623 = vpop.f32.mrf.mxu0
    %v2624 = vadd.f32 %v2579, %v2623
    %2625 = vmatmul.f32.gmra.mxu0 %v2598
    %v2626 = vpop.f32.mrf.mxu0
    %v2627 = vadd.f32 %v2582, %v2626
    %2628 = vdwg.mxu0
    %s2629 = scalar_lea.vmem [#allocation16], 16
    %v2630 = vld [vmem:[%s2629] sm:$0xff]
    %v2631 = vrot.slane %v2536, 3
    %v2632 = vrot.slane %v2537, 3
    %v2633 = vsel %vm584, %v2631, %v2632
    %v2634 = vrot.slane %v2538, 3
    %v2635 = vsel %vm584, %v2632, %v2634
    %v2636 = vrot.slane %v2539, 3
    %v2637 = vsel %vm584, %v2634, %v2636
    %v2638 = vsel %vm584, %v2636, %v586
    %v2639 = vsel %vm733, %v2633, 0
    %v2641 = vsel %vm733, %v2635, 0
    %v2643 = vsel %vm733, %v2637, 0
    %v2645 = vsel %vm733, %v2638, 0
    %2647 = vmatpush.msra.mxu0 0.0
    %2648 = vmatpush.msra.mxu0 0.0
    %2649 = vmatpush.msra.mxu0 0.0
    %2650 = vmatpush.msra.mxu0 0.0
    %2651 = vmatpush.msra.mxu0 0.0
    %2652 = vmatpush.msra.mxu0 0.0
    %2653 = vmatpush.msra.mxu0 0.0
    %2654 = vmatpush.msra.mxu0 0.0
    %2655 = vmatpush.msra.mxu0 0.0
    %2656 = vmatpush.msra.mxu0 0.0
    %2657 = vmatpush.msra.mxu0 0.0
    %2658 = vmatpush.msra.mxu0 0.0
    %2659 = vmatpush.msra.mxu0 0.0
    %2660 = vmatpush.msra.mxu0 0.0
    %2661 = vmatpush.msra.mxu0 0.0
    %2662 = vmatpush.msra.mxu0 %v2630
    %2663 = vmatmul.f32.gmra.mxu0 %v2639
    %v2664 = vpop.f32.mrf.mxu0
    %v2665 = vadd.f32 0.0, %v2664
    %2666 = vmatmul.f32.gmra.mxu0 %v2641
    %v2667 = vpop.f32.mrf.mxu0
    %v2668 = vadd.f32 0.0, %v2667
    %2669 = vmatmul.f32.gmra.mxu0 %v2643
    %v2670 = vpop.f32.mrf.mxu0
    %v2671 = vadd.f32 0.0, %v2670
    %2672 = vmatmul.f32.gmra.mxu0 %v2645
    %v2673 = vpop.f32.mrf.mxu0
    %v2674 = vadd.f32 0.0, %v2673
    %2675 = vdwg.mxu0
    %v2676 = vadd.f32 %v2618, %v2665
    %v2677 = vadd.f32 %v2621, %v2668
    %v2678 = vadd.f32 %v2624, %v2671
    %v2679 = vadd.f32 %v2627, %v2674
    %v2680 = vld [vmem:[%s61] sm:$0x1]
    %v2682 = vperm.slane %v2680, 0
    %v2684 = vadd.f32 %v2676, %v2682
    %v2685 = vadd.f32 %v2677, %v2682
    %v2686 = vadd.f32 %v2678, %v2682
    %v2687 = vadd.f32 %v2679, %v2682
    %vm2688 = vcmp.gt.f32.partialorder %v2684, 0.0
    %vm2689 = vcmp.gt.f32.partialorder %v2685, 0.0
    %vm2690 = vcmp.gt.f32.partialorder %v2686, 0.0
    %vm2691 = vcmp.gt.f32.partialorder %v2687, 0.0
    %v2692 = vmul.f32 %v2684, 0.1
    %v2693 = vmul.f32 %v2685, 0.1
    %v2694 = vmul.f32 %v2686, 0.1
    %v2695 = vmul.f32 %v2687, 0.1
    %v2696 = vsel %vm2688, %v2684, %v2692
    %v2697 = vsel %vm2689, %v2685, %v2693
    %v2698 = vsel %vm2690, %v2686, %v2694
    %v2699 = vsel %vm2691, %v2687, %v2695
    %v2700 = vld [vmem:[#allocation19] sm:$0xff]
    %s2701 = scalar_lea.vmem [#allocation19], 8
    %v2702 = vld [vmem:[%s2701] sm:$0xff]
    %v2704 = vsel %vm733, %v2696, 0
    %v2707 = vsel %vm733, %v2697, 0
    %v2710 = vsel %vm733, %v2698, 0
    %v2713 = vsel %vm733, %v2699, 0
    %2715 = vmatpush.msra.mxu0 0.0
    %2716 = vmatpush.msra.mxu0 0.0
    %2717 = vmatpush.msra.mxu0 0.0
    %2718 = vmatpush.msra.mxu0 0.0
    %2719 = vmatpush.msra.mxu0 0.0
    %2720 = vmatpush.msra.mxu0 0.0
    %2721 = vmatpush.msra.mxu0 0.0
    %2722 = vmatpush.msra.mxu0 0.0
    %2723 = vmatpush.msra.mxu0 0.0
    %2724 = vmatpush.msra.mxu0 0.0
    %2725 = vmatpush.msra.mxu0 0.0
    %2726 = vmatpush.msra.mxu0 0.0
    %2727 = vmatpush.msra.mxu0 0.0
    %2728 = vmatpush.msra.mxu0 0.0
    %2729 = vmatpush.msra.mxu0 0.0
    %2730 = vmatpush.msra.mxu0 %v2702
    %2731 = vmatmul.f32.gmra.mxu0 %v2704
    %v2732 = vpop.f32.mrf.mxu0
    %v2733 = vadd.f32 0.0, %v2732
    %2734 = vmatmul.f32.gmra.mxu0 %v2707
    %v2735 = vpop.f32.mrf.mxu0
    %v2736 = vadd.f32 0.0, %v2735
    %2737 = vmatmul.f32.gmra.mxu0 %v2710
    %v2738 = vpop.f32.mrf.mxu0
    %v2739 = vadd.f32 0.0, %v2738
    %2740 = vmatmul.f32.gmra.mxu0 %v2713
    %v2741 = vpop.f32.mrf.mxu0
    %v2742 = vadd.f32 0.0, %v2741
    %2743 = vdwg.mxu0
    %v2744 = vrot.slane %v2696, 7
    %v2745 = vsel %vm460, %v461, %v2744
    %v2746 = vrot.slane %v2697, 7
    %v2747 = vsel %vm460, %v2744, %v2746
    %v2748 = vrot.slane %v2698, 7
    %v2749 = vsel %vm460, %v2746, %v2748
    %v2750 = vrot.slane %v2699, 7
    %v2751 = vsel %vm460, %v2748, %v2750
    %v2752 = vsel %vm733, %v2745, 0
    %v2754 = vsel %vm733, %v2747, 0
    %v2756 = vsel %vm733, %v2749, 0
    %v2758 = vsel %vm733, %v2751, 0
    %2760 = vmatpush.msra.mxu0 0.0
    %2761 = vmatpush.msra.mxu0 0.0
    %2762 = vmatpush.msra.mxu0 0.0
    %2763 = vmatpush.msra.mxu0 0.0
    %2764 = vmatpush.msra.mxu0 0.0
    %2765 = vmatpush.msra.mxu0 0.0
    %2766 = vmatpush.msra.mxu0 0.0
    %2767 = vmatpush.msra.mxu0 0.0
    %2768 = vmatpush.msra.mxu0 0.0
    %2769 = vmatpush.msra.mxu0 0.0
    %2770 = vmatpush.msra.mxu0 0.0
    %2771 = vmatpush.msra.mxu0 0.0
    %2772 = vmatpush.msra.mxu0 0.0
    %2773 = vmatpush.msra.mxu0 0.0
    %2774 = vmatpush.msra.mxu0 0.0
    %2775 = vmatpush.msra.mxu0 %v2700
    %2776 = vmatmul.f32.gmra.mxu0 %v2752
    %v2777 = vpop.f32.mrf.mxu0
    %v2778 = vadd.f32 %v2733, %v2777
    %2779 = vmatmul.f32.gmra.mxu0 %v2754
    %v2780 = vpop.f32.mrf.mxu0
    %v2781 = vadd.f32 %v2736, %v2780
    %2782 = vmatmul.f32.gmra.mxu0 %v2756
    %v2783 = vpop.f32.mrf.mxu0
    %v2784 = vadd.f32 %v2739, %v2783
    %2785 = vmatmul.f32.gmra.mxu0 %v2758
    %v2786 = vpop.f32.mrf.mxu0
    %v2787 = vadd.f32 %v2742, %v2786
    %2788 = vdwg.mxu0
    %s2789 = scalar_lea.vmem [#allocation19], 16
    %v2790 = vld [vmem:[%s2789] sm:$0xff]
    %v2791 = vrot.slane %v2696, 1
    %v2792 = vrot.slane %v2697, 1
    %v2793 = vsel %vm520, %v2791, %v2792
    %v2794 = vrot.slane %v2698, 1
    %v2795 = vsel %vm520, %v2792, %v2794
    %v2796 = vrot.slane %v2699, 1
    %v2797 = vsel %vm520, %v2794, %v2796
    %v2798 = vsel %vm520, %v2796, %v522
    %v2799 = vsel %vm733, %v2793, 0
    %v2801 = vsel %vm733, %v2795, 0
    %v2803 = vsel %vm733, %v2797, 0
    %v2805 = vsel %vm733, %v2798, 0
    %2807 = vmatpush.msra.mxu0 0.0
    %2808 = vmatpush.msra.mxu0 0.0
    %2809 = vmatpush.msra.mxu0 0.0
    %2810 = vmatpush.msra.mxu0 0.0
    %2811 = vmatpush.msra.mxu0 0.0
    %2812 = vmatpush.msra.mxu0 0.0
    %2813 = vmatpush.msra.mxu0 0.0
    %2814 = vmatpush.msra.mxu0 0.0
    %2815 = vmatpush.msra.mxu0 0.0
    %2816 = vmatpush.msra.mxu0 0.0
    %2817 = vmatpush.msra.mxu0 0.0
    %2818 = vmatpush.msra.mxu0 0.0
    %2819 = vmatpush.msra.mxu0 0.0
    %2820 = vmatpush.msra.mxu0 0.0
    %2821 = vmatpush.msra.mxu0 0.0
    %2822 = vmatpush.msra.mxu0 %v2790
    %2823 = vmatmul.f32.gmra.mxu0 %v2799
    %v2824 = vpop.f32.mrf.mxu0
    %v2825 = vadd.f32 0.0, %v2824
    %2826 = vmatmul.f32.gmra.mxu0 %v2801
    %v2827 = vpop.f32.mrf.mxu0
    %v2828 = vadd.f32 0.0, %v2827
    %2829 = vmatmul.f32.gmra.mxu0 %v2803
    %v2830 = vpop.f32.mrf.mxu0
    %v2831 = vadd.f32 0.0, %v2830
    %2832 = vmatmul.f32.gmra.mxu0 %v2805
    %v2833 = vpop.f32.mrf.mxu0
    %v2834 = vadd.f32 0.0, %v2833
    %2835 = vdwg.mxu0
    %v2836 = vadd.f32 %v2778, %v2825
    %v2837 = vadd.f32 %v2781, %v2828
    %v2838 = vadd.f32 %v2784, %v2831
    %v2839 = vadd.f32 %v2787, %v2834
    %v2840 = vld [vmem:[%s69] sm:$0x1]
    %v2842 = vperm.slane %v2840, 0
    %v2844 = vadd.f32 %v2836, %v2842
    %v2845 = vadd.f32 %v2837, %v2842
    %v2846 = vadd.f32 %v2838, %v2842
    %v2847 = vadd.f32 %v2839, %v2842
    %v2848 = vadd.f32 %v2524, %v2844
    %v2849 = vadd.f32 %v2525, %v2845
    %v2850 = vadd.f32 %v2526, %v2846
    %v2851 = vadd.f32 %v2527, %v2847
    %v2852 = vld [vmem:[%s71] sm:$0xff]
    %s2853 = scalar_lea.vmem %s71, 8
    %v2854 = vld [vmem:[%s2853] sm:$0xff]
    %2855 = vmatpush.msra.mxu0 0.0
    %2856 = vmatpush.msra.mxu0 0.0
    %2857 = vmatpush.msra.mxu0 0.0
    %2858 = vmatpush.msra.mxu0 0.0
    %2859 = vmatpush.msra.mxu0 0.0
    %2860 = vmatpush.msra.mxu0 0.0
    %2861 = vmatpush.msra.mxu0 0.0
    %2862 = vmatpush.msra.mxu0 0.0
    %2863 = vmatpush.msra.mxu0 0.0
    %2864 = vmatpush.msra.mxu0 0.0
    %2865 = vmatpush.msra.mxu0 0.0
    %2866 = vmatpush.msra.mxu0 0.0
    %2867 = vmatpush.msra.mxu0 0.0
    %2868 = vmatpush.msra.mxu0 0.0
    %2869 = vmatpush.msra.mxu0 0.0
    %2870 = vmatpush.msra.mxu0 %v2854
    %2871 = vmatmul.f32.gmra.mxu0 %v2268
    %v2872 = vpop.f32.mrf.mxu0
    %v2873 = vadd.f32 0.0, %v2872
    %2874 = vmatmul.f32.gmra.mxu0 %v2270
    %v2875 = vpop.f32.mrf.mxu0
    %v2876 = vadd.f32 0.0, %v2875
    %2877 = vmatmul.f32.gmra.mxu0 %v2272
    %v2878 = vpop.f32.mrf.mxu0
    %v2879 = vadd.f32 0.0, %v2878
    %2880 = vmatmul.f32.gmra.mxu0 %v2274
    %v2881 = vpop.f32.mrf.mxu0
    %v2882 = vadd.f32 0.0, %v2881
    %2883 = vdwg.mxu0
    %v2884 = vrot.slane %v2212, 6
    %v2885 = vsel %vm402, %v403, %v2884
    %v2886 = vrot.slane %v2213, 6
    %v2887 = vsel %vm402, %v2884, %v2886
    %v2888 = vrot.slane %v2214, 6
    %v2889 = vsel %vm402, %v2886, %v2888
    %v2890 = vrot.slane %v2215, 6
    %v2891 = vsel %vm402, %v2888, %v2890
    %v2892 = vsel %vm733, %v2885, 0
    %v2894 = vsel %vm733, %v2887, 0
    %v2896 = vsel %vm733, %v2889, 0
    %v2898 = vsel %vm733, %v2891, 0
    %2900 = vmatpush.msra.mxu0 0.0
    %2901 = vmatpush.msra.mxu0 0.0
    %2902 = vmatpush.msra.mxu0 0.0
    %2903 = vmatpush.msra.mxu0 0.0
    %2904 = vmatpush.msra.mxu0 0.0
    %2905 = vmatpush.msra.mxu0 0.0
    %2906 = vmatpush.msra.mxu0 0.0
    %2907 = vmatpush.msra.mxu0 0.0
    %2908 = vmatpush.msra.mxu0 0.0
    %2909 = vmatpush.msra.mxu0 0.0
    %2910 = vmatpush.msra.mxu0 0.0
    %2911 = vmatpush.msra.mxu0 0.0
    %2912 = vmatpush.msra.mxu0 0.0
    %2913 = vmatpush.msra.mxu0 0.0
    %2914 = vmatpush.msra.mxu0 0.0
    %2915 = vmatpush.msra.mxu0 %v2852
    %2916 = vmatmul.f32.gmra.mxu0 %v2892
    %v2917 = vpop.f32.mrf.mxu0
    %v2918 = vadd.f32 %v2873, %v2917
    %2919 = vmatmul.f32.gmra.mxu0 %v2894
    %v2920 = vpop.f32.mrf.mxu0
    %v2921 = vadd.f32 %v2876, %v2920
    %2922 = vmatmul.f32.gmra.mxu0 %v2896
    %v2923 = vpop.f32.mrf.mxu0
    %v2924 = vadd.f32 %v2879, %v2923
    %2925 = vmatmul.f32.gmra.mxu0 %v2898
    %v2926 = vpop.f32.mrf.mxu0
    %v2927 = vadd.f32 %v2882, %v2926
    %2928 = vdwg.mxu0
    %s2929 = scalar_lea.vmem %s71, 16
    %v2930 = vld [vmem:[%s2929] sm:$0xff]
    %2931 = vmatpush.msra.mxu0 0.0
    %2932 = vmatpush.msra.mxu0 0.0
    %2933 = vmatpush.msra.mxu0 0.0
    %2934 = vmatpush.msra.mxu0 0.0
    %2935 = vmatpush.msra.mxu0 0.0
    %2936 = vmatpush.msra.mxu0 0.0
    %2937 = vmatpush.msra.mxu0 0.0
    %2938 = vmatpush.msra.mxu0 0.0
    %2939 = vmatpush.msra.mxu0 0.0
    %2940 = vmatpush.msra.mxu0 0.0
    %2941 = vmatpush.msra.mxu0 0.0
    %2942 = vmatpush.msra.mxu0 0.0
    %2943 = vmatpush.msra.mxu0 0.0
    %2944 = vmatpush.msra.mxu0 0.0
    %2945 = vmatpush.msra.mxu0 0.0
    %2946 = vmatpush.msra.mxu0 %v2930
    %2947 = vmatmul.f32.gmra.mxu0 %v2220
    %v2948 = vpop.f32.mrf.mxu0
    %v2949 = vadd.f32 0.0, %v2948
    %2950 = vmatmul.f32.gmra.mxu0 %v2223
    %v2951 = vpop.f32.mrf.mxu0
    %v2952 = vadd.f32 0.0, %v2951
    %2953 = vmatmul.f32.gmra.mxu0 %v2226
    %v2954 = vpop.f32.mrf.mxu0
    %v2955 = vadd.f32 0.0, %v2954
    %2956 = vmatmul.f32.gmra.mxu0 %v2229
    %v2957 = vpop.f32.mrf.mxu0
    %v2958 = vadd.f32 0.0, %v2957
    %2959 = vdwg.mxu0
    %v2960 = vadd.f32 %v2918, %v2949
    %v2961 = vadd.f32 %v2921, %v2952
    %v2962 = vadd.f32 %v2924, %v2955
    %v2963 = vadd.f32 %v2927, %v2958
    %s2964 = scalar_lea.vmem %s71, 24
    %v2965 = vld [vmem:[%s2964] sm:$0xff]
    %2966 = vmatpush.msra.mxu0 0.0
    %2967 = vmatpush.msra.mxu0 0.0
    %2968 = vmatpush.msra.mxu0 0.0
    %2969 = vmatpush.msra.mxu0 0.0
    %2970 = vmatpush.msra.mxu0 0.0
    %2971 = vmatpush.msra.mxu0 0.0
    %2972 = vmatpush.msra.mxu0 0.0
    %2973 = vmatpush.msra.mxu0 0.0
    %2974 = vmatpush.msra.mxu0 0.0
    %2975 = vmatpush.msra.mxu0 0.0
    %2976 = vmatpush.msra.mxu0 0.0
    %2977 = vmatpush.msra.mxu0 0.0
    %2978 = vmatpush.msra.mxu0 0.0
    %2979 = vmatpush.msra.mxu0 0.0
    %2980 = vmatpush.msra.mxu0 0.0
    %2981 = vmatpush.msra.mxu0 %v2965
    %2982 = vmatmul.f32.gmra.mxu0 %v2315
    %v2983 = vpop.f32.mrf.mxu0
    %v2984 = vadd.f32 0.0, %v2983
    %2985 = vmatmul.f32.gmra.mxu0 %v2317
    %v2986 = vpop.f32.mrf.mxu0
    %v2987 = vadd.f32 0.0, %v2986
    %2988 = vmatmul.f32.gmra.mxu0 %v2319
    %v2989 = vpop.f32.mrf.mxu0
    %v2990 = vadd.f32 0.0, %v2989
    %2991 = vmatmul.f32.gmra.mxu0 %v2321
    %v2992 = vpop.f32.mrf.mxu0
    %v2993 = vadd.f32 0.0, %v2992
    %2994 = vdwg.mxu0
    %v2995 = vadd.f32 %v2960, %v2984
    %v2996 = vadd.f32 %v2961, %v2987
    %v2997 = vadd.f32 %v2962, %v2990
    %v2998 = vadd.f32 %v2963, %v2993
    %s2999 = scalar_lea.vmem %s71, 32
    %v3000 = vld [vmem:[%s2999] sm:$0xff]
    %v3001 = vrot.slane %v2212, 2
    %v3002 = vrot.slane %v2213, 2
    %v3003 = vsel %vm552, %v3001, %v3002
    %v3004 = vrot.slane %v2214, 2
    %v3005 = vsel %vm552, %v3002, %v3004
    %v3006 = vrot.slane %v2215, 2
    %v3007 = vsel %vm552, %v3004, %v3006
    %v3008 = vsel %vm552, %v3006, %v554
    %v3009 = vsel %vm733, %v3003, 0
    %v3011 = vsel %vm733, %v3005, 0
    %v3013 = vsel %vm733, %v3007, 0
    %v3015 = vsel %vm733, %v3008, 0
    %3017 = vmatpush.msra.mxu0 0.0
    %3018 = vmatpush.msra.mxu0 0.0
    %3019 = vmatpush.msra.mxu0 0.0
    %3020 = vmatpush.msra.mxu0 0.0
    %3021 = vmatpush.msra.mxu0 0.0
    %3022 = vmatpush.msra.mxu0 0.0
    %3023 = vmatpush.msra.mxu0 0.0
    %3024 = vmatpush.msra.mxu0 0.0
    %3025 = vmatpush.msra.mxu0 0.0
    %3026 = vmatpush.msra.mxu0 0.0
    %3027 = vmatpush.msra.mxu0 0.0
    %3028 = vmatpush.msra.mxu0 0.0
    %3029 = vmatpush.msra.mxu0 0.0
    %3030 = vmatpush.msra.mxu0 0.0
    %3031 = vmatpush.msra.mxu0 0.0
    %3032 = vmatpush.msra.mxu0 %v3000
    %3033 = vmatmul.f32.gmra.mxu0 %v3009
    %v3034 = vpop.f32.mrf.mxu0
    %v3035 = vadd.f32 0.0, %v3034
    %3036 = vmatmul.f32.gmra.mxu0 %v3011
    %v3037 = vpop.f32.mrf.mxu0
    %v3038 = vadd.f32 0.0, %v3037
    %3039 = vmatmul.f32.gmra.mxu0 %v3013
    %v3040 = vpop.f32.mrf.mxu0
    %v3041 = vadd.f32 0.0, %v3040
    %3042 = vmatmul.f32.gmra.mxu0 %v3015
    %v3043 = vpop.f32.mrf.mxu0
    %v3044 = vadd.f32 0.0, %v3043
    %3045 = vdwg.mxu0
    %v3046 = vadd.f32 %v2995, %v3035
    %v3047 = vadd.f32 %v2996, %v3038
    %v3048 = vadd.f32 %v2997, %v3041
    %v3049 = vadd.f32 %v2998, %v3044
    %v3050 = vld [vmem:[%s73] sm:$0x1]
    %v3052 = vperm.slane %v3050, 0
    %v3054 = vadd.f32 %v3046, %v3052
    %v3055 = vadd.f32 %v3047, %v3052
    %v3056 = vadd.f32 %v3048, %v3052
    %v3057 = vadd.f32 %v3049, %v3052
    %vm3058 = vcmp.gt.f32.partialorder %v3054, 0.0
    %vm3059 = vcmp.gt.f32.partialorder %v3055, 0.0
    %vm3060 = vcmp.gt.f32.partialorder %v3056, 0.0
    %vm3061 = vcmp.gt.f32.partialorder %v3057, 0.0
    %v3062 = vmul.f32 %v3054, 0.1
    %v3063 = vmul.f32 %v3055, 0.1
    %v3064 = vmul.f32 %v3056, 0.1
    %v3065 = vmul.f32 %v3057, 0.1
    %v3066 = vsel %vm3058, %v3054, %v3062
    %v3067 = vsel %vm3059, %v3055, %v3063
    %v3068 = vsel %vm3060, %v3056, %v3064
    %v3069 = vsel %vm3061, %v3057, %v3065
    %v3070 = vld [vmem:[#allocation20] sm:$0xff]
    %s3071 = scalar_lea.vmem [#allocation20], 8
    %v3072 = vld [vmem:[%s3071] sm:$0xff]
    %v3077 = vrot.slane %v3066, 7
    %v3078 = vsel %vm460, %v461, %v3077
    %v3079 = vrot.slane %v3067, 7
    %v3080 = vsel %vm460, %v3077, %v3079
    %v3081 = vrot.slane %v3068, 7
    %v3082 = vsel %vm460, %v3079, %v3081
    %v3083 = vrot.slane %v3069, 7
    %v3084 = vsel %vm460, %v3081, %v3083
    %v3085 = vsel %vm733, %v3078, 0
    %v3087 = vsel %vm733, %v3080, 0
    %v3089 = vsel %vm733, %v3082, 0
    %v3091 = vsel %vm733, %v3084, 0
    %3093 = vmatpush.msra.mxu0 0.0
    %3094 = vmatpush.msra.mxu0 0.0
    %3095 = vmatpush.msra.mxu0 0.0
    %3096 = vmatpush.msra.mxu0 0.0
    %3097 = vmatpush.msra.mxu0 0.0
    %3098 = vmatpush.msra.mxu0 0.0
    %3099 = vmatpush.msra.mxu0 0.0
    %3100 = vmatpush.msra.mxu0 0.0
    %3101 = vmatpush.msra.mxu0 0.0
    %3102 = vmatpush.msra.mxu0 0.0
    %3103 = vmatpush.msra.mxu0 0.0
    %3104 = vmatpush.msra.mxu0 0.0
    %3105 = vmatpush.msra.mxu0 0.0
    %3106 = vmatpush.msra.mxu0 0.0
    %3107 = vmatpush.msra.mxu0 0.0
    %3108 = vmatpush.msra.mxu0 %v3072
    %3109 = vmatmul.f32.gmra.mxu0 %v3085
    %v3110 = vpop.f32.mrf.mxu0
    %v3111 = vadd.f32 0.0, %v3110
    %3112 = vmatmul.f32.gmra.mxu0 %v3087
    %v3113 = vpop.f32.mrf.mxu0
    %v3114 = vadd.f32 0.0, %v3113
    %3115 = vmatmul.f32.gmra.mxu0 %v3089
    %v3116 = vpop.f32.mrf.mxu0
    %v3117 = vadd.f32 0.0, %v3116
    %3118 = vmatmul.f32.gmra.mxu0 %v3091
    %v3119 = vpop.f32.mrf.mxu0
    %v3120 = vadd.f32 0.0, %v3119
    %3121 = vdwg.mxu0
    %v3122 = vrot.slane %v3066, 6
    %v3123 = vsel %vm402, %v403, %v3122
    %v3124 = vrot.slane %v3067, 6
    %v3125 = vsel %vm402, %v3122, %v3124
    %v3126 = vrot.slane %v3068, 6
    %v3127 = vsel %vm402, %v3124, %v3126
    %v3128 = vrot.slane %v3069, 6
    %v3129 = vsel %vm402, %v3126, %v3128
    %v3130 = vsel %vm733, %v3123, 0
    %v3132 = vsel %vm733, %v3125, 0
    %v3134 = vsel %vm733, %v3127, 0
    %v3136 = vsel %vm733, %v3129, 0
    %3138 = vmatpush.msra.mxu0 0.0
    %3139 = vmatpush.msra.mxu0 0.0
    %3140 = vmatpush.msra.mxu0 0.0
    %3141 = vmatpush.msra.mxu0 0.0
    %3142 = vmatpush.msra.mxu0 0.0
    %3143 = vmatpush.msra.mxu0 0.0
    %3144 = vmatpush.msra.mxu0 0.0
    %3145 = vmatpush.msra.mxu0 0.0
    %3146 = vmatpush.msra.mxu0 0.0
    %3147 = vmatpush.msra.mxu0 0.0
    %3148 = vmatpush.msra.mxu0 0.0
    %3149 = vmatpush.msra.mxu0 0.0
    %3150 = vmatpush.msra.mxu0 0.0
    %3151 = vmatpush.msra.mxu0 0.0
    %3152 = vmatpush.msra.mxu0 0.0
    %3153 = vmatpush.msra.mxu0 %v3070
    %3154 = vmatmul.f32.gmra.mxu0 %v3130
    %v3155 = vpop.f32.mrf.mxu0
    %v3156 = vadd.f32 %v3111, %v3155
    %3157 = vmatmul.f32.gmra.mxu0 %v3132
    %v3158 = vpop.f32.mrf.mxu0
    %v3159 = vadd.f32 %v3114, %v3158
    %3160 = vmatmul.f32.gmra.mxu0 %v3134
    %v3161 = vpop.f32.mrf.mxu0
    %v3162 = vadd.f32 %v3117, %v3161
    %3163 = vmatmul.f32.gmra.mxu0 %v3136
    %v3164 = vpop.f32.mrf.mxu0
    %v3165 = vadd.f32 %v3120, %v3164
    %3166 = vdwg.mxu0
    %s3167 = scalar_lea.vmem [#allocation20], 16
    %v3168 = vld [vmem:[%s3167] sm:$0xff]
    %v3169 = vsel %vm733, %v3066, 0
    %v3171 = vsel %vm733, %v3067, 0
    %v3173 = vsel %vm733, %v3068, 0
    %v3175 = vsel %vm733, %v3069, 0
    %3177 = vmatpush.msra.mxu0 0.0
    %3178 = vmatpush.msra.mxu0 0.0
    %3179 = vmatpush.msra.mxu0 0.0
    %3180 = vmatpush.msra.mxu0 0.0
    %3181 = vmatpush.msra.mxu0 0.0
    %3182 = vmatpush.msra.mxu0 0.0
    %3183 = vmatpush.msra.mxu0 0.0
    %3184 = vmatpush.msra.mxu0 0.0
    %3185 = vmatpush.msra.mxu0 0.0
    %3186 = vmatpush.msra.mxu0 0.0
    %3187 = vmatpush.msra.mxu0 0.0
    %3188 = vmatpush.msra.mxu0 0.0
    %3189 = vmatpush.msra.mxu0 0.0
    %3190 = vmatpush.msra.mxu0 0.0
    %3191 = vmatpush.msra.mxu0 0.0
    %3192 = vmatpush.msra.mxu0 %v3168
    %3193 = vmatmul.f32.gmra.mxu0 %v3169
    %v3194 = vpop.f32.mrf.mxu0
    %v3195 = vadd.f32 0.0, %v3194
    %3196 = vmatmul.f32.gmra.mxu0 %v3171
    %v3197 = vpop.f32.mrf.mxu0
    %v3198 = vadd.f32 0.0, %v3197
    %3199 = vmatmul.f32.gmra.mxu0 %v3173
    %v3200 = vpop.f32.mrf.mxu0
    %v3201 = vadd.f32 0.0, %v3200
    %3202 = vmatmul.f32.gmra.mxu0 %v3175
    %v3203 = vpop.f32.mrf.mxu0
    %v3204 = vadd.f32 0.0, %v3203
    %3205 = vdwg.mxu0
    %v3206 = vadd.f32 %v3156, %v3195
    %v3207 = vadd.f32 %v3159, %v3198
    %v3208 = vadd.f32 %v3162, %v3201
    %v3209 = vadd.f32 %v3165, %v3204
    %s3210 = scalar_lea.vmem [#allocation20], 24
    %v3211 = vld [vmem:[%s3210] sm:$0xff]
    %v3212 = vrot.slane %v3066, 1
    %v3213 = vrot.slane %v3067, 1
    %v3214 = vsel %vm520, %v3212, %v3213
    %v3215 = vrot.slane %v3068, 1
    %v3216 = vsel %vm520, %v3213, %v3215
    %v3217 = vrot.slane %v3069, 1
    %v3218 = vsel %vm520, %v3215, %v3217
    %v3219 = vsel %vm520, %v3217, %v522
    %v3220 = vsel %vm733, %v3214, 0
    %v3222 = vsel %vm733, %v3216, 0
    %v3224 = vsel %vm733, %v3218, 0
    %v3226 = vsel %vm733, %v3219, 0
    %3228 = vmatpush.msra.mxu0 0.0
    %3229 = vmatpush.msra.mxu0 0.0
    %3230 = vmatpush.msra.mxu0 0.0
    %3231 = vmatpush.msra.mxu0 0.0
    %3232 = vmatpush.msra.mxu0 0.0
    %3233 = vmatpush.msra.mxu0 0.0
    %3234 = vmatpush.msra.mxu0 0.0
    %3235 = vmatpush.msra.mxu0 0.0
    %3236 = vmatpush.msra.mxu0 0.0
    %3237 = vmatpush.msra.mxu0 0.0
    %3238 = vmatpush.msra.mxu0 0.0
    %3239 = vmatpush.msra.mxu0 0.0
    %3240 = vmatpush.msra.mxu0 0.0
    %3241 = vmatpush.msra.mxu0 0.0
    %3242 = vmatpush.msra.mxu0 0.0
    %3243 = vmatpush.msra.mxu0 %v3211
    %3244 = vmatmul.f32.gmra.mxu0 %v3220
    %v3245 = vpop.f32.mrf.mxu0
    %v3246 = vadd.f32 0.0, %v3245
    %3247 = vmatmul.f32.gmra.mxu0 %v3222
    %v3248 = vpop.f32.mrf.mxu0
    %v3249 = vadd.f32 0.0, %v3248
    %3250 = vmatmul.f32.gmra.mxu0 %v3224
    %v3251 = vpop.f32.mrf.mxu0
    %v3252 = vadd.f32 0.0, %v3251
    %3253 = vmatmul.f32.gmra.mxu0 %v3226
    %v3254 = vpop.f32.mrf.mxu0
    %v3255 = vadd.f32 0.0, %v3254
    %3256 = vdwg.mxu0
    %v3257 = vadd.f32 %v3206, %v3246
    %v3258 = vadd.f32 %v3207, %v3249
    %v3259 = vadd.f32 %v3208, %v3252
    %v3260 = vadd.f32 %v3209, %v3255
    %s3261 = scalar_lea.vmem [#allocation20], 32
    %v3262 = vld [vmem:[%s3261] sm:$0xff]
    %v3263 = vrot.slane %v3066, 2
    %v3264 = vrot.slane %v3067, 2
    %v3265 = vsel %vm552, %v3263, %v3264
    %v3266 = vrot.slane %v3068, 2
    %v3267 = vsel %vm552, %v3264, %v3266
    %v3268 = vrot.slane %v3069, 2
    %v3269 = vsel %vm552, %v3266, %v3268
    %v3270 = vsel %vm552, %v3268, %v554
    %v3271 = vsel %vm733, %v3265, 0
    %v3273 = vsel %vm733, %v3267, 0
    %v3275 = vsel %vm733, %v3269, 0
    %v3277 = vsel %vm733, %v3270, 0
    %3279 = vmatpush.msra.mxu0 0.0
    %3280 = vmatpush.msra.mxu0 0.0
    %3281 = vmatpush.msra.mxu0 0.0
    %3282 = vmatpush.msra.mxu0 0.0
    %3283 = vmatpush.msra.mxu0 0.0
    %3284 = vmatpush.msra.mxu0 0.0
    %3285 = vmatpush.msra.mxu0 0.0
    %3286 = vmatpush.msra.mxu0 0.0
    %3287 = vmatpush.msra.mxu0 0.0
    %3288 = vmatpush.msra.mxu0 0.0
    %3289 = vmatpush.msra.mxu0 0.0
    %3290 = vmatpush.msra.mxu0 0.0
    %3291 = vmatpush.msra.mxu0 0.0
    %3292 = vmatpush.msra.mxu0 0.0
    %3293 = vmatpush.msra.mxu0 0.0
    %3294 = vmatpush.msra.mxu0 %v3262
    %3295 = vmatmul.f32.gmra.mxu0 %v3271
    %v3296 = vpop.f32.mrf.mxu0
    %v3297 = vadd.f32 0.0, %v3296
    %3298 = vmatmul.f32.gmra.mxu0 %v3273
    %v3299 = vpop.f32.mrf.mxu0
    %v3300 = vadd.f32 0.0, %v3299
    %3301 = vmatmul.f32.gmra.mxu0 %v3275
    %v3302 = vpop.f32.mrf.mxu0
    %v3303 = vadd.f32 0.0, %v3302
    %3304 = vmatmul.f32.gmra.mxu0 %v3277
    %v3305 = vpop.f32.mrf.mxu0
    %v3306 = vadd.f32 0.0, %v3305
    %3307 = vdwg.mxu0
    %v3308 = vadd.f32 %v3257, %v3297
    %v3309 = vadd.f32 %v3258, %v3300
    %v3310 = vadd.f32 %v3259, %v3303
    %v3311 = vadd.f32 %v3260, %v3306
    %v3312 = vld [vmem:[%s81] sm:$0x1]
    %v3314 = vperm.slane %v3312, 0
    %v3316 = vadd.f32 %v3308, %v3314
    %v3317 = vadd.f32 %v3309, %v3314
    %v3318 = vadd.f32 %v3310, %v3314
    %v3319 = vadd.f32 %v3311, %v3314
    %v3320 = vadd.f32 %v2200, %v3316
    %v3321 = vadd.f32 %v2201, %v3317
    %v3322 = vadd.f32 %v2202, %v3318
    %v3323 = vadd.f32 %v2203, %v3319
    %vm3324 = vcmp.gt.f32.partialorder %v3320, 0.0
    %vm3325 = vcmp.gt.f32.partialorder %v3321, 0.0
    %vm3326 = vcmp.gt.f32.partialorder %v3322, 0.0
    %vm3327 = vcmp.gt.f32.partialorder %v3323, 0.0
    %v3328 = vmul.f32 %v3320, 0.1
    %v3329 = vmul.f32 %v3321, 0.1
    %v3330 = vmul.f32 %v3322, 0.1
    %v3331 = vmul.f32 %v3323, 0.1
    %v3332 = vsel %vm3324, %v3320, %v3328
    %v3333 = vsel %vm3325, %v3321, %v3329
    %v3334 = vsel %vm3326, %v3322, %v3330
    %v3335 = vsel %vm3327, %v3323, %v3331
    %v3336 = vld [vmem:[%s75] sm:$0xff]
    %s3337 = scalar_lea.vmem %s75, 8
    %v3338 = vld [vmem:[%s3337] sm:$0xff]
    %v3343 = vrot.slane %v3332, 5
    %v3344 = vsel %vm429, %v430, %v3343
    %v3345 = vrot.slane %v3333, 5
    %v3346 = vsel %vm429, %v3343, %v3345
    %v3347 = vrot.slane %v3334, 5
    %v3348 = vsel %vm429, %v3345, %v3347
    %v3349 = vrot.slane %v3335, 5
    %v3350 = vsel %vm429, %v3347, %v3349
    %v3351 = vsel %vm733, %v3344, 0
    %v3353 = vsel %vm733, %v3346, 0
    %v3355 = vsel %vm733, %v3348, 0
    %v3357 = vsel %vm733, %v3350, 0
    %3359 = vmatpush.msra.mxu0 0.0
    %3360 = vmatpush.msra.mxu0 0.0
    %3361 = vmatpush.msra.mxu0 0.0
    %3362 = vmatpush.msra.mxu0 0.0
    %3363 = vmatpush.msra.mxu0 0.0
    %3364 = vmatpush.msra.mxu0 0.0
    %3365 = vmatpush.msra.mxu0 0.0
    %3366 = vmatpush.msra.mxu0 0.0
    %3367 = vmatpush.msra.mxu0 0.0
    %3368 = vmatpush.msra.mxu0 0.0
    %3369 = vmatpush.msra.mxu0 0.0
    %3370 = vmatpush.msra.mxu0 0.0
    %3371 = vmatpush.msra.mxu0 0.0
    %3372 = vmatpush.msra.mxu0 0.0
    %3373 = vmatpush.msra.mxu0 0.0
    %3374 = vmatpush.msra.mxu0 %v3338
    %3375 = vmatmul.f32.gmra.mxu0 %v3351
    %v3376 = vpop.f32.mrf.mxu0
    %v3377 = vadd.f32 0.0, %v3376
    %3378 = vmatmul.f32.gmra.mxu0 %v3353
    %v3379 = vpop.f32.mrf.mxu0
    %v3380 = vadd.f32 0.0, %v3379
    %3381 = vmatmul.f32.gmra.mxu0 %v3355
    %v3382 = vpop.f32.mrf.mxu0
    %v3383 = vadd.f32 0.0, %v3382
    %3384 = vmatmul.f32.gmra.mxu0 %v3357
    %v3385 = vpop.f32.mrf.mxu0
    %v3386 = vadd.f32 0.0, %v3385
    %3387 = vdwg.mxu0
    %v3388 = vrot.slane %v3332, 2
    %v3389 = vsel %vm552, %v554, %v3388
    %v3390 = vrot.slane %v3333, 2
    %v3391 = vsel %vm552, %v3388, %v3390
    %v3392 = vrot.slane %v3334, 2
    %v3393 = vsel %vm552, %v3390, %v3392
    %v3394 = vrot.slane %v3335, 2
    %v3395 = vsel %vm552, %v3392, %v3394
    %v3396 = vsel %vm733, %v3389, 0
    %v3398 = vsel %vm733, %v3391, 0
    %v3400 = vsel %vm733, %v3393, 0
    %v3402 = vsel %vm733, %v3395, 0
    %3404 = vmatpush.msra.mxu0 0.0
    %3405 = vmatpush.msra.mxu0 0.0
    %3406 = vmatpush.msra.mxu0 0.0
    %3407 = vmatpush.msra.mxu0 0.0
    %3408 = vmatpush.msra.mxu0 0.0
    %3409 = vmatpush.msra.mxu0 0.0
    %3410 = vmatpush.msra.mxu0 0.0
    %3411 = vmatpush.msra.mxu0 0.0
    %3412 = vmatpush.msra.mxu0 0.0
    %3413 = vmatpush.msra.mxu0 0.0
    %3414 = vmatpush.msra.mxu0 0.0
    %3415 = vmatpush.msra.mxu0 0.0
    %3416 = vmatpush.msra.mxu0 0.0
    %3417 = vmatpush.msra.mxu0 0.0
    %3418 = vmatpush.msra.mxu0 0.0
    %3419 = vmatpush.msra.mxu0 %v3336
    %3420 = vmatmul.f32.gmra.mxu0 %v3396
    %v3421 = vpop.f32.mrf.mxu0
    %v3422 = vadd.f32 %v3377, %v3421
    %3423 = vmatmul.f32.gmra.mxu0 %v3398
    %v3424 = vpop.f32.mrf.mxu0
    %v3425 = vadd.f32 %v3380, %v3424
    %3426 = vmatmul.f32.gmra.mxu0 %v3400
    %v3427 = vpop.f32.mrf.mxu0
    %v3428 = vadd.f32 %v3383, %v3427
    %3429 = vmatmul.f32.gmra.mxu0 %v3402
    %v3430 = vpop.f32.mrf.mxu0
    %v3431 = vadd.f32 %v3386, %v3430
    %3432 = vdwg.mxu0
    %s3433 = scalar_lea.vmem %s75, 16
    %v3434 = vld [vmem:[%s3433] sm:$0xff]
    %v3435 = vsel %vm733, %v3332, 0
    %v3437 = vsel %vm733, %v3333, 0
    %v3439 = vsel %vm733, %v3334, 0
    %v3441 = vsel %vm733, %v3335, 0
    %3443 = vmatpush.msra.mxu0 0.0
    %3444 = vmatpush.msra.mxu0 0.0
    %3445 = vmatpush.msra.mxu0 0.0
    %3446 = vmatpush.msra.mxu0 0.0
    %3447 = vmatpush.msra.mxu0 0.0
    %3448 = vmatpush.msra.mxu0 0.0
    %3449 = vmatpush.msra.mxu0 0.0
    %3450 = vmatpush.msra.mxu0 0.0
    %3451 = vmatpush.msra.mxu0 0.0
    %3452 = vmatpush.msra.mxu0 0.0
    %3453 = vmatpush.msra.mxu0 0.0
    %3454 = vmatpush.msra.mxu0 0.0
    %3455 = vmatpush.msra.mxu0 0.0
    %3456 = vmatpush.msra.mxu0 0.0
    %3457 = vmatpush.msra.mxu0 0.0
    %3458 = vmatpush.msra.mxu0 %v3434
    %3459 = vmatmul.f32.gmra.mxu0 %v3435
    %v3460 = vpop.f32.mrf.mxu0
    %v3461 = vadd.f32 0.0, %v3460
    %3462 = vmatmul.f32.gmra.mxu0 %v3437
    %v3463 = vpop.f32.mrf.mxu0
    %v3464 = vadd.f32 0.0, %v3463
    %3465 = vmatmul.f32.gmra.mxu0 %v3439
    %v3466 = vpop.f32.mrf.mxu0
    %v3467 = vadd.f32 0.0, %v3466
    %3468 = vmatmul.f32.gmra.mxu0 %v3441
    %v3469 = vpop.f32.mrf.mxu0
    %v3470 = vadd.f32 0.0, %v3469
    %3471 = vdwg.mxu0
    %v3472 = vadd.f32 %v3422, %v3461
    %v3473 = vadd.f32 %v3425, %v3464
    %v3474 = vadd.f32 %v3428, %v3467
    %v3475 = vadd.f32 %v3431, %v3470
    %s3476 = scalar_lea.vmem %s75, 24
    %v3477 = vld [vmem:[%s3476] sm:$0xff]
    %v3478 = vrot.slane %v3332, 3
    %v3479 = vrot.slane %v3333, 3
    %v3480 = vsel %vm584, %v3478, %v3479
    %v3481 = vrot.slane %v3334, 3
    %v3482 = vsel %vm584, %v3479, %v3481
    %v3483 = vrot.slane %v3335, 3
    %v3484 = vsel %vm584, %v3481, %v3483
    %v3485 = vsel %vm584, %v3483, %v586
    %v3486 = vsel %vm733, %v3480, 0
    %v3488 = vsel %vm733, %v3482, 0
    %v3490 = vsel %vm733, %v3484, 0
    %v3492 = vsel %vm733, %v3485, 0
    %3494 = vmatpush.msra.mxu0 0.0
    %3495 = vmatpush.msra.mxu0 0.0
    %3496 = vmatpush.msra.mxu0 0.0
    %3497 = vmatpush.msra.mxu0 0.0
    %3498 = vmatpush.msra.mxu0 0.0
    %3499 = vmatpush.msra.mxu0 0.0
    %3500 = vmatpush.msra.mxu0 0.0
    %3501 = vmatpush.msra.mxu0 0.0
    %3502 = vmatpush.msra.mxu0 0.0
    %3503 = vmatpush.msra.mxu0 0.0
    %3504 = vmatpush.msra.mxu0 0.0
    %3505 = vmatpush.msra.mxu0 0.0
    %3506 = vmatpush.msra.mxu0 0.0
    %3507 = vmatpush.msra.mxu0 0.0
    %3508 = vmatpush.msra.mxu0 0.0
    %3509 = vmatpush.msra.mxu0 %v3477
    %3510 = vmatmul.f32.gmra.mxu0 %v3486
    %v3511 = vpop.f32.mrf.mxu0
    %v3512 = vadd.f32 0.0, %v3511
    %3513 = vmatmul.f32.gmra.mxu0 %v3488
    %v3514 = vpop.f32.mrf.mxu0
    %v3515 = vadd.f32 0.0, %v3514
    %3516 = vmatmul.f32.gmra.mxu0 %v3490
    %v3517 = vpop.f32.mrf.mxu0
    %v3518 = vadd.f32 0.0, %v3517
    %3519 = vmatmul.f32.gmra.mxu0 %v3492
    %v3520 = vpop.f32.mrf.mxu0
    %v3521 = vadd.f32 0.0, %v3520
    %3522 = vdwg.mxu0
    %v3523 = vadd.f32 %v3472, %v3512
    %v3524 = vadd.f32 %v3473, %v3515
    %v3525 = vadd.f32 %v3474, %v3518
    %v3526 = vadd.f32 %v3475, %v3521
    %s3527 = scalar_lea.vmem %s75, 32
    %v3528 = vld [vmem:[%s3527] sm:$0xff]
    %v3529 = vrot.slane %v3332, 6
    %v3530 = vrot.slane %v3333, 6
    %v3531 = vsel %vm402, %v3529, %v3530
    %v3532 = vrot.slane %v3334, 6
    %v3533 = vsel %vm402, %v3530, %v3532
    %v3534 = vrot.slane %v3335, 6
    %v3535 = vsel %vm402, %v3532, %v3534
    %v3536 = vsel %vm402, %v3534, %v403
    %v3537 = vsel %vm733, %v3531, 0
    %v3539 = vsel %vm733, %v3533, 0
    %v3541 = vsel %vm733, %v3535, 0
    %v3543 = vsel %vm733, %v3536, 0
    %3545 = vmatpush.msra.mxu0 0.0
    %3546 = vmatpush.msra.mxu0 0.0
    %3547 = vmatpush.msra.mxu0 0.0
    %3548 = vmatpush.msra.mxu0 0.0
    %3549 = vmatpush.msra.mxu0 0.0
    %3550 = vmatpush.msra.mxu0 0.0
    %3551 = vmatpush.msra.mxu0 0.0
    %3552 = vmatpush.msra.mxu0 0.0
    %3553 = vmatpush.msra.mxu0 0.0
    %3554 = vmatpush.msra.mxu0 0.0
    %3555 = vmatpush.msra.mxu0 0.0
    %3556 = vmatpush.msra.mxu0 0.0
    %3557 = vmatpush.msra.mxu0 0.0
    %3558 = vmatpush.msra.mxu0 0.0
    %3559 = vmatpush.msra.mxu0 0.0
    %3560 = vmatpush.msra.mxu0 %v3528
    %3561 = vmatmul.f32.gmra.mxu0 %v3537
    %v3562 = vpop.f32.mrf.mxu0
    %v3563 = vadd.f32 0.0, %v3562
    %3564 = vmatmul.f32.gmra.mxu0 %v3539
    %v3565 = vpop.f32.mrf.mxu0
    %v3566 = vadd.f32 0.0, %v3565
    %3567 = vmatmul.f32.gmra.mxu0 %v3541
    %v3568 = vpop.f32.mrf.mxu0
    %v3569 = vadd.f32 0.0, %v3568
    %3570 = vmatmul.f32.gmra.mxu0 %v3543
    %v3571 = vpop.f32.mrf.mxu0
    %v3572 = vadd.f32 0.0, %v3571
    %3573 = vdwg.mxu0
    %v3574 = vadd.f32 %v3523, %v3563
    %v3575 = vadd.f32 %v3524, %v3566
    %v3576 = vadd.f32 %v3525, %v3569
    %v3577 = vadd.f32 %v3526, %v3572
    %v3578 = vld [vmem:[%s77] sm:$0x1]
    %v3580 = vperm.slane %v3578, 0
    %v3582 = vadd.f32 %v3574, %v3580
    %v3583 = vadd.f32 %v3575, %v3580
    %v3584 = vadd.f32 %v3576, %v3580
    %v3585 = vadd.f32 %v3577, %v3580
    %vm3586 = vcmp.gt.f32.partialorder %v3582, 0.0
    %vm3587 = vcmp.gt.f32.partialorder %v3583, 0.0
    %vm3588 = vcmp.gt.f32.partialorder %v3584, 0.0
    %vm3589 = vcmp.gt.f32.partialorder %v3585, 0.0
    %v3590 = vmul.f32 %v3582, 0.1
    %v3591 = vmul.f32 %v3583, 0.1
    %v3592 = vmul.f32 %v3584, 0.1
    %v3593 = vmul.f32 %v3585, 0.1
    %v3594 = vsel %vm3586, %v3582, %v3590
    %v3595 = vsel %vm3587, %v3583, %v3591
    %v3596 = vsel %vm3588, %v3584, %v3592
    %v3597 = vsel %vm3589, %v3585, %v3593
    %v3598 = vld [vmem:[#allocation22] sm:$0xff]
    %s3599 = scalar_lea.vmem [#allocation22], 8
    %v3600 = vld [vmem:[%s3599] sm:$0xff]
    %v3605 = vrot.slane %v3594, 7
    %v3606 = vsel %vm460, %v461, %v3605
    %v3607 = vrot.slane %v3595, 7
    %v3608 = vsel %vm460, %v3605, %v3607
    %v3609 = vrot.slane %v3596, 7
    %v3610 = vsel %vm460, %v3607, %v3609
    %v3611 = vrot.slane %v3597, 7
    %v3612 = vsel %vm460, %v3609, %v3611
    %v3613 = vsel %vm733, %v3606, 0
    %v3615 = vsel %vm733, %v3608, 0
    %v3617 = vsel %vm733, %v3610, 0
    %v3619 = vsel %vm733, %v3612, 0
    %3621 = vmatpush.msra.mxu0 0.0
    %3622 = vmatpush.msra.mxu0 0.0
    %3623 = vmatpush.msra.mxu0 0.0
    %3624 = vmatpush.msra.mxu0 0.0
    %3625 = vmatpush.msra.mxu0 0.0
    %3626 = vmatpush.msra.mxu0 0.0
    %3627 = vmatpush.msra.mxu0 0.0
    %3628 = vmatpush.msra.mxu0 0.0
    %3629 = vmatpush.msra.mxu0 0.0
    %3630 = vmatpush.msra.mxu0 0.0
    %3631 = vmatpush.msra.mxu0 0.0
    %3632 = vmatpush.msra.mxu0 0.0
    %3633 = vmatpush.msra.mxu0 0.0
    %3634 = vmatpush.msra.mxu0 0.0
    %3635 = vmatpush.msra.mxu0 0.0
    %3636 = vmatpush.msra.mxu0 %v3600
    %3637 = vmatmul.f32.gmra.mxu0 %v3613
    %v3638 = vpop.f32.mrf.mxu0
    %v3639 = vadd.f32 0.0, %v3638
    %3640 = vmatmul.f32.gmra.mxu0 %v3615
    %v3641 = vpop.f32.mrf.mxu0
    %v3642 = vadd.f32 0.0, %v3641
    %3643 = vmatmul.f32.gmra.mxu0 %v3617
    %v3644 = vpop.f32.mrf.mxu0
    %v3645 = vadd.f32 0.0, %v3644
    %3646 = vmatmul.f32.gmra.mxu0 %v3619
    %v3647 = vpop.f32.mrf.mxu0
    %v3648 = vadd.f32 0.0, %v3647
    %3649 = vdwg.mxu0
    %v3650 = vrot.slane %v3594, 6
    %v3651 = vsel %vm402, %v403, %v3650
    %v3652 = vrot.slane %v3595, 6
    %v3653 = vsel %vm402, %v3650, %v3652
    %v3654 = vrot.slane %v3596, 6
    %v3655 = vsel %vm402, %v3652, %v3654
    %v3656 = vrot.slane %v3597, 6
    %v3657 = vsel %vm402, %v3654, %v3656
    %v3658 = vsel %vm733, %v3651, 0
    %v3660 = vsel %vm733, %v3653, 0
    %v3662 = vsel %vm733, %v3655, 0
    %v3664 = vsel %vm733, %v3657, 0
    %3666 = vmatpush.msra.mxu0 0.0
    %3667 = vmatpush.msra.mxu0 0.0
    %3668 = vmatpush.msra.mxu0 0.0
    %3669 = vmatpush.msra.mxu0 0.0
    %3670 = vmatpush.msra.mxu0 0.0
    %3671 = vmatpush.msra.mxu0 0.0
    %3672 = vmatpush.msra.mxu0 0.0
    %3673 = vmatpush.msra.mxu0 0.0
    %3674 = vmatpush.msra.mxu0 0.0
    %3675 = vmatpush.msra.mxu0 0.0
    %3676 = vmatpush.msra.mxu0 0.0
    %3677 = vmatpush.msra.mxu0 0.0
    %3678 = vmatpush.msra.mxu0 0.0
    %3679 = vmatpush.msra.mxu0 0.0
    %3680 = vmatpush.msra.mxu0 0.0
    %3681 = vmatpush.msra.mxu0 %v3598
    %3682 = vmatmul.f32.gmra.mxu0 %v3658
    %v3683 = vpop.f32.mrf.mxu0
    %v3684 = vadd.f32 %v3639, %v3683
    %3685 = vmatmul.f32.gmra.mxu0 %v3660
    %v3686 = vpop.f32.mrf.mxu0
    %v3687 = vadd.f32 %v3642, %v3686
    %3688 = vmatmul.f32.gmra.mxu0 %v3662
    %v3689 = vpop.f32.mrf.mxu0
    %v3690 = vadd.f32 %v3645, %v3689
    %3691 = vmatmul.f32.gmra.mxu0 %v3664
    %v3692 = vpop.f32.mrf.mxu0
    %v3693 = vadd.f32 %v3648, %v3692
    %3694 = vdwg.mxu0
    %s3695 = scalar_lea.vmem [#allocation22], 16
    %v3696 = vld [vmem:[%s3695] sm:$0xff]
    %v3697 = vsel %vm733, %v3594, 0
    %v3699 = vsel %vm733, %v3595, 0
    %v3701 = vsel %vm733, %v3596, 0
    %v3703 = vsel %vm733, %v3597, 0
    %3705 = vmatpush.msra.mxu0 0.0
    %3706 = vmatpush.msra.mxu0 0.0
    %3707 = vmatpush.msra.mxu0 0.0
    %3708 = vmatpush.msra.mxu0 0.0
    %3709 = vmatpush.msra.mxu0 0.0
    %3710 = vmatpush.msra.mxu0 0.0
    %3711 = vmatpush.msra.mxu0 0.0
    %3712 = vmatpush.msra.mxu0 0.0
    %3713 = vmatpush.msra.mxu0 0.0
    %3714 = vmatpush.msra.mxu0 0.0
    %3715 = vmatpush.msra.mxu0 0.0
    %3716 = vmatpush.msra.mxu0 0.0
    %3717 = vmatpush.msra.mxu0 0.0
    %3718 = vmatpush.msra.mxu0 0.0
    %3719 = vmatpush.msra.mxu0 0.0
    %3720 = vmatpush.msra.mxu0 %v3696
    %3721 = vmatmul.f32.gmra.mxu0 %v3697
    %v3722 = vpop.f32.mrf.mxu0
    %v3723 = vadd.f32 0.0, %v3722
    %3724 = vmatmul.f32.gmra.mxu0 %v3699
    %v3725 = vpop.f32.mrf.mxu0
    %v3726 = vadd.f32 0.0, %v3725
    %3727 = vmatmul.f32.gmra.mxu0 %v3701
    %v3728 = vpop.f32.mrf.mxu0
    %v3729 = vadd.f32 0.0, %v3728
    %3730 = vmatmul.f32.gmra.mxu0 %v3703
    %v3731 = vpop.f32.mrf.mxu0
    %v3732 = vadd.f32 0.0, %v3731
    %3733 = vdwg.mxu0
    %v3734 = vadd.f32 %v3684, %v3723
    %v3735 = vadd.f32 %v3687, %v3726
    %v3736 = vadd.f32 %v3690, %v3729
    %v3737 = vadd.f32 %v3693, %v3732
    %s3738 = scalar_lea.vmem [#allocation22], 24
    %v3739 = vld [vmem:[%s3738] sm:$0xff]
    %v3740 = vrot.slane %v3594, 1
    %v3741 = vrot.slane %v3595, 1
    %v3742 = vsel %vm520, %v3740, %v3741
    %v3743 = vrot.slane %v3596, 1
    %v3744 = vsel %vm520, %v3741, %v3743
    %v3745 = vrot.slane %v3597, 1
    %v3746 = vsel %vm520, %v3743, %v3745
    %v3747 = vsel %vm520, %v3745, %v522
    %v3748 = vsel %vm733, %v3742, 0
    %v3750 = vsel %vm733, %v3744, 0
    %v3752 = vsel %vm733, %v3746, 0
    %v3754 = vsel %vm733, %v3747, 0
    %3756 = vmatpush.msra.mxu0 0.0
    %3757 = vmatpush.msra.mxu0 0.0
    %3758 = vmatpush.msra.mxu0 0.0
    %3759 = vmatpush.msra.mxu0 0.0
    %3760 = vmatpush.msra.mxu0 0.0
    %3761 = vmatpush.msra.mxu0 0.0
    %3762 = vmatpush.msra.mxu0 0.0
    %3763 = vmatpush.msra.mxu0 0.0
    %3764 = vmatpush.msra.mxu0 0.0
    %3765 = vmatpush.msra.mxu0 0.0
    %3766 = vmatpush.msra.mxu0 0.0
    %3767 = vmatpush.msra.mxu0 0.0
    %3768 = vmatpush.msra.mxu0 0.0
    %3769 = vmatpush.msra.mxu0 0.0
    %3770 = vmatpush.msra.mxu0 0.0
    %3771 = vmatpush.msra.mxu0 %v3739
    %3772 = vmatmul.f32.gmra.mxu0 %v3748
    %v3773 = vpop.f32.mrf.mxu0
    %v3774 = vadd.f32 0.0, %v3773
    %3775 = vmatmul.f32.gmra.mxu0 %v3750
    %v3776 = vpop.f32.mrf.mxu0
    %v3777 = vadd.f32 0.0, %v3776
    %3778 = vmatmul.f32.gmra.mxu0 %v3752
    %v3779 = vpop.f32.mrf.mxu0
    %v3780 = vadd.f32 0.0, %v3779
    %3781 = vmatmul.f32.gmra.mxu0 %v3754
    %v3782 = vpop.f32.mrf.mxu0
    %v3783 = vadd.f32 0.0, %v3782
    %3784 = vdwg.mxu0
    %v3785 = vadd.f32 %v3734, %v3774
    %v3786 = vadd.f32 %v3735, %v3777
    %v3787 = vadd.f32 %v3736, %v3780
    %v3788 = vadd.f32 %v3737, %v3783
    %s3789 = scalar_lea.vmem [#allocation22], 32
    %v3790 = vld [vmem:[%s3789] sm:$0xff]
    %v3791 = vrot.slane %v3594, 2
    %v3792 = vrot.slane %v3595, 2
    %v3793 = vsel %vm552, %v3791, %v3792
    %v3794 = vrot.slane %v3596, 2
    %v3795 = vsel %vm552, %v3792, %v3794
    %v3796 = vrot.slane %v3597, 2
    %v3797 = vsel %vm552, %v3794, %v3796
    %v3798 = vsel %vm552, %v3796, %v554
    %v3799 = vsel %vm733, %v3793, 0
    %v3801 = vsel %vm733, %v3795, 0
    %v3803 = vsel %vm733, %v3797, 0
    %v3805 = vsel %vm733, %v3798, 0
    %3807 = vmatpush.msra.mxu0 0.0
    %3808 = vmatpush.msra.mxu0 0.0
    %3809 = vmatpush.msra.mxu0 0.0
    %3810 = vmatpush.msra.mxu0 0.0
    %3811 = vmatpush.msra.mxu0 0.0
    %3812 = vmatpush.msra.mxu0 0.0
    %3813 = vmatpush.msra.mxu0 0.0
    %3814 = vmatpush.msra.mxu0 0.0
    %3815 = vmatpush.msra.mxu0 0.0
    %3816 = vmatpush.msra.mxu0 0.0
    %3817 = vmatpush.msra.mxu0 0.0
    %3818 = vmatpush.msra.mxu0 0.0
    %3819 = vmatpush.msra.mxu0 0.0
    %3820 = vmatpush.msra.mxu0 0.0
    %3821 = vmatpush.msra.mxu0 0.0
    %3822 = vmatpush.msra.mxu0 %v3790
    %3823 = vmatmul.f32.gmra.mxu0 %v3799
    %v3824 = vpop.f32.mrf.mxu0
    %v3825 = vadd.f32 0.0, %v3824
    %3826 = vmatmul.f32.gmra.mxu0 %v3801
    %v3827 = vpop.f32.mrf.mxu0
    %v3828 = vadd.f32 0.0, %v3827
    %3829 = vmatmul.f32.gmra.mxu0 %v3803
    %v3830 = vpop.f32.mrf.mxu0
    %v3831 = vadd.f32 0.0, %v3830
    %3832 = vmatmul.f32.gmra.mxu0 %v3805
    %v3833 = vpop.f32.mrf.mxu0
    %v3834 = vadd.f32 0.0, %v3833
    %3835 = vdwg.mxu0
    %v3836 = vadd.f32 %v3785, %v3825
    %v3837 = vadd.f32 %v3786, %v3828
    %v3838 = vadd.f32 %v3787, %v3831
    %v3839 = vadd.f32 %v3788, %v3834
    %v3840 = vld [vmem:[%s85] sm:$0x1]
    %v3842 = vperm.slane %v3840, 0
    %v3844 = vadd.f32 %v3836, %v3842
    %v3845 = vadd.f32 %v3837, %v3842
    %v3846 = vadd.f32 %v3838, %v3842
    %v3847 = vadd.f32 %v3839, %v3842
    %v3848 = vadd.f32 %v3320, %v3844
    %v3849 = vadd.f32 %v3321, %v3845
    %v3850 = vadd.f32 %v3322, %v3846
    %v3851 = vadd.f32 %v3323, %v3847
    %v3852 = vadd.f32 %v2848, %v3848
    %v3853 = vadd.f32 %v2849, %v3849
    %v3854 = vadd.f32 %v2850, %v3850
    %v3855 = vadd.f32 %v2851, %v3851
    %v3856 = vmul.f32 %v3852, 0.5
    %v3857 = vmul.f32 %v3853, 0.5
    %v3858 = vmul.f32 %v3854, 0.5
    %v3859 = vmul.f32 %v3855, 0.5
    %vm3860 = vcmp.gt.f32.partialorder %v3856, 0.0
    %vm3861 = vcmp.gt.f32.partialorder %v3857, 0.0
    %vm3862 = vcmp.gt.f32.partialorder %v3858, 0.0
    %vm3863 = vcmp.gt.f32.partialorder %v3859, 0.0
    %v3864 = vmul.f32 %v3856, 0.1
    %v3865 = vmul.f32 %v3857, 0.1
    %v3866 = vmul.f32 %v3858, 0.1
    %v3867 = vmul.f32 %v3859, 0.1
    %v3868 = vsel %vm3860, %v3856, %v3864
    %v3869 = vsel %vm3861, %v3857, %v3865
    %v3870 = vsel %vm3862, %v3858, %v3866
    %v3871 = vsel %vm3863, %v3859, %v3867
    %v3872 = vld [vmem:[%s87] sm:$0xff]
    %s3873 = scalar_lea.vmem %s87, 8
    %v3874 = vld [vmem:[%s3873] sm:$0xff]
    %v3879 = vrot.slane %v3868, 6
    %v3880 = vsel %vm402, %v403, %v3879
    %v3881 = vrot.slane %v3869, 6
    %v3882 = vsel %vm402, %v3879, %v3881
    %v3883 = vrot.slane %v3870, 6
    %v3884 = vsel %vm402, %v3881, %v3883
    %v3885 = vrot.slane %v3871, 6
    %v3886 = vsel %vm402, %v3883, %v3885
    %v3887 = vsel %vm733, %v3880, 0
    %v3889 = vsel %vm733, %v3882, 0
    %v3891 = vsel %vm733, %v3884, 0
    %v3893 = vsel %vm733, %v3886, 0
    %3895 = vmatpush.msra.mxu0 0.0
    %3896 = vmatpush.msra.mxu0 0.0
    %3897 = vmatpush.msra.mxu0 0.0
    %3898 = vmatpush.msra.mxu0 0.0
    %3899 = vmatpush.msra.mxu0 0.0
    %3900 = vmatpush.msra.mxu0 0.0
    %3901 = vmatpush.msra.mxu0 0.0
    %3902 = vmatpush.msra.mxu0 0.0
    %3903 = vmatpush.msra.mxu0 0.0
    %3904 = vmatpush.msra.mxu0 0.0
    %3905 = vmatpush.msra.mxu0 0.0
    %3906 = vmatpush.msra.mxu0 0.0
    %3907 = vmatpush.msra.mxu0 0.0
    %3908 = vmatpush.msra.mxu0 0.0
    %3909 = vmatpush.msra.mxu0 0.0
    %3910 = vmatpush.msra.mxu0 %v3874
    %3911 = vmatmul.f32.gmra.mxu0 %v3887
    %v3912 = vpop.f32.mrf.mxu0
    %v3913 = vadd.f32 0.0, %v3912
    %3914 = vmatmul.f32.gmra.mxu0 %v3889
    %v3915 = vpop.f32.mrf.mxu0
    %v3916 = vadd.f32 0.0, %v3915
    %3917 = vmatmul.f32.gmra.mxu0 %v3891
    %v3918 = vpop.f32.mrf.mxu0
    %v3919 = vadd.f32 0.0, %v3918
    %3920 = vmatmul.f32.gmra.mxu0 %v3893
    %v3921 = vpop.f32.mrf.mxu0
    %v3922 = vadd.f32 0.0, %v3921
    %3923 = vdwg.mxu0
    %v3924 = vrot.slane %v3868, 5
    %v3925 = vsel %vm429, %v430, %v3924
    %v3926 = vrot.slane %v3869, 5
    %v3927 = vsel %vm429, %v3924, %v3926
    %v3928 = vrot.slane %v3870, 5
    %v3929 = vsel %vm429, %v3926, %v3928
    %v3930 = vrot.slane %v3871, 5
    %v3931 = vsel %vm429, %v3928, %v3930
    %v3932 = vsel %vm733, %v3925, 0
    %v3934 = vsel %vm733, %v3927, 0
    %v3936 = vsel %vm733, %v3929, 0
    %v3938 = vsel %vm733, %v3931, 0
    %3940 = vmatpush.msra.mxu0 0.0
    %3941 = vmatpush.msra.mxu0 0.0
    %3942 = vmatpush.msra.mxu0 0.0
    %3943 = vmatpush.msra.mxu0 0.0
    %3944 = vmatpush.msra.mxu0 0.0
    %3945 = vmatpush.msra.mxu0 0.0
    %3946 = vmatpush.msra.mxu0 0.0
    %3947 = vmatpush.msra.mxu0 0.0
    %3948 = vmatpush.msra.mxu0 0.0
    %3949 = vmatpush.msra.mxu0 0.0
    %3950 = vmatpush.msra.mxu0 0.0
    %3951 = vmatpush.msra.mxu0 0.0
    %3952 = vmatpush.msra.mxu0 0.0
    %3953 = vmatpush.msra.mxu0 0.0
    %3954 = vmatpush.msra.mxu0 0.0
    %3955 = vmatpush.msra.mxu0 %v3872
    %3956 = vmatmul.f32.gmra.mxu0 %v3932
    %v3957 = vpop.f32.mrf.mxu0
    %v3958 = vadd.f32 %v3913, %v3957
    %3959 = vmatmul.f32.gmra.mxu0 %v3934
    %v3960 = vpop.f32.mrf.mxu0
    %v3961 = vadd.f32 %v3916, %v3960
    %3962 = vmatmul.f32.gmra.mxu0 %v3936
    %v3963 = vpop.f32.mrf.mxu0
    %v3964 = vadd.f32 %v3919, %v3963
    %3965 = vmatmul.f32.gmra.mxu0 %v3938
    %v3966 = vpop.f32.mrf.mxu0
    %v3967 = vadd.f32 %v3922, %v3966
    %3968 = vdwg.mxu0
    %s3969 = scalar_lea.vmem %s87, 16
    %v3970 = vld [vmem:[%s3969] sm:$0xff]
    %v3971 = vrot.slane %v3868, 7
    %v3972 = vsel %vm460, %v461, %v3971
    %v3973 = vrot.slane %v3869, 7
    %v3974 = vsel %vm460, %v3971, %v3973
    %v3975 = vrot.slane %v3870, 7
    %v3976 = vsel %vm460, %v3973, %v3975
    %v3977 = vrot.slane %v3871, 7
    %v3978 = vsel %vm460, %v3975, %v3977
    %v3979 = vsel %vm733, %v3972, 0
    %v3981 = vsel %vm733, %v3974, 0
    %v3983 = vsel %vm733, %v3976, 0
    %v3985 = vsel %vm733, %v3978, 0
    %3987 = vmatpush.msra.mxu0 0.0
    %3988 = vmatpush.msra.mxu0 0.0
    %3989 = vmatpush.msra.mxu0 0.0
    %3990 = vmatpush.msra.mxu0 0.0
    %3991 = vmatpush.msra.mxu0 0.0
    %3992 = vmatpush.msra.mxu0 0.0
    %3993 = vmatpush.msra.mxu0 0.0
    %3994 = vmatpush.msra.mxu0 0.0
    %3995 = vmatpush.msra.mxu0 0.0
    %3996 = vmatpush.msra.mxu0 0.0
    %3997 = vmatpush.msra.mxu0 0.0
    %3998 = vmatpush.msra.mxu0 0.0
    %3999 = vmatpush.msra.mxu0 0.0
    %4000 = vmatpush.msra.mxu0 0.0
    %4001 = vmatpush.msra.mxu0 0.0
    %4002 = vmatpush.msra.mxu0 %v3970
    %4003 = vmatmul.f32.gmra.mxu0 %v3979
    %v4004 = vpop.f32.mrf.mxu0
    %v4005 = vadd.f32 0.0, %v4004
    %4006 = vmatmul.f32.gmra.mxu0 %v3981
    %v4007 = vpop.f32.mrf.mxu0
    %v4008 = vadd.f32 0.0, %v4007
    %4009 = vmatmul.f32.gmra.mxu0 %v3983
    %v4010 = vpop.f32.mrf.mxu0
    %v4011 = vadd.f32 0.0, %v4010
    %4012 = vmatmul.f32.gmra.mxu0 %v3985
    %v4013 = vpop.f32.mrf.mxu0
    %v4014 = vadd.f32 0.0, %v4013
    %4015 = vdwg.mxu0
    %v4016 = vadd.f32 %v3958, %v4005
    %v4017 = vadd.f32 %v3961, %v4008
    %v4018 = vadd.f32 %v3964, %v4011
    %v4019 = vadd.f32 %v3967, %v4014
    %s4020 = scalar_lea.vmem %s87, 24
    %v4021 = vld [vmem:[%s4020] sm:$0xff]
    %v4022 = vsel %vm733, %v3868, 0
    %v4024 = vsel %vm733, %v3869, 0
    %v4026 = vsel %vm733, %v3870, 0
    %v4028 = vsel %vm733, %v3871, 0
    %4030 = vmatpush.msra.mxu0 0.0
    %4031 = vmatpush.msra.mxu0 0.0
    %4032 = vmatpush.msra.mxu0 0.0
    %4033 = vmatpush.msra.mxu0 0.0
    %4034 = vmatpush.msra.mxu0 0.0
    %4035 = vmatpush.msra.mxu0 0.0
    %4036 = vmatpush.msra.mxu0 0.0
    %4037 = vmatpush.msra.mxu0 0.0
    %4038 = vmatpush.msra.mxu0 0.0
    %4039 = vmatpush.msra.mxu0 0.0
    %4040 = vmatpush.msra.mxu0 0.0
    %4041 = vmatpush.msra.mxu0 0.0
    %4042 = vmatpush.msra.mxu0 0.0
    %4043 = vmatpush.msra.mxu0 0.0
    %4044 = vmatpush.msra.mxu0 0.0
    %4045 = vmatpush.msra.mxu0 %v4021
    %4046 = vmatmul.f32.gmra.mxu0 %v4022
    %v4047 = vpop.f32.mrf.mxu0
    %v4048 = vadd.f32 0.0, %v4047
    %4049 = vmatmul.f32.gmra.mxu0 %v4024
    %v4050 = vpop.f32.mrf.mxu0
    %v4051 = vadd.f32 0.0, %v4050
    %4052 = vmatmul.f32.gmra.mxu0 %v4026
    %v4053 = vpop.f32.mrf.mxu0
    %v4054 = vadd.f32 0.0, %v4053
    %4055 = vmatmul.f32.gmra.mxu0 %v4028
    %v4056 = vpop.f32.mrf.mxu0
    %v4057 = vadd.f32 0.0, %v4056
    %4058 = vdwg.mxu0
    %v4059 = vadd.f32 %v4016, %v4048
    %v4060 = vadd.f32 %v4017, %v4051
    %v4061 = vadd.f32 %v4018, %v4054
    %v4062 = vadd.f32 %v4019, %v4057
    %s4063 = scalar_lea.vmem %s87, 32
    %v4064 = vld [vmem:[%s4063] sm:$0xff]
    %v4065 = vrot.slane %v3868, 1
    %v4066 = vrot.slane %v3869, 1
    %v4067 = vsel %vm520, %v4065, %v4066
    %v4068 = vrot.slane %v3870, 1
    %v4069 = vsel %vm520, %v4066, %v4068
    %v4070 = vrot.slane %v3871, 1
    %v4071 = vsel %vm520, %v4068, %v4070
    %v4072 = vsel %vm520, %v4070, %v522
    %v4073 = vsel %vm733, %v4067, 0
    %v4075 = vsel %vm733, %v4069, 0
    %v4077 = vsel %vm733, %v4071, 0
    %v4079 = vsel %vm733, %v4072, 0
    %4081 = vmatpush.msra.mxu0 0.0
    %4082 = vmatpush.msra.mxu0 0.0
    %4083 = vmatpush.msra.mxu0 0.0
    %4084 = vmatpush.msra.mxu0 0.0
    %4085 = vmatpush.msra.mxu0 0.0
    %4086 = vmatpush.msra.mxu0 0.0
    %4087 = vmatpush.msra.mxu0 0.0
    %4088 = vmatpush.msra.mxu0 0.0
    %4089 = vmatpush.msra.mxu0 0.0
    %4090 = vmatpush.msra.mxu0 0.0
    %4091 = vmatpush.msra.mxu0 0.0
    %4092 = vmatpush.msra.mxu0 0.0
    %4093 = vmatpush.msra.mxu0 0.0
    %4094 = vmatpush.msra.mxu0 0.0
    %4095 = vmatpush.msra.mxu0 0.0
    %4096 = vmatpush.msra.mxu0 %v4064
    %4097 = vmatmul.f32.gmra.mxu0 %v4073
    %v4098 = vpop.f32.mrf.mxu0
    %v4099 = vadd.f32 0.0, %v4098
    %4100 = vmatmul.f32.gmra.mxu0 %v4075
    %v4101 = vpop.f32.mrf.mxu0
    %v4102 = vadd.f32 0.0, %v4101
    %4103 = vmatmul.f32.gmra.mxu0 %v4077
    %v4104 = vpop.f32.mrf.mxu0
    %v4105 = vadd.f32 0.0, %v4104
    %4106 = vmatmul.f32.gmra.mxu0 %v4079
    %v4107 = vpop.f32.mrf.mxu0
    %v4108 = vadd.f32 0.0, %v4107
    %4109 = vdwg.mxu0
    %v4110 = vadd.f32 %v4059, %v4099
    %v4111 = vadd.f32 %v4060, %v4102
    %v4112 = vadd.f32 %v4061, %v4105
    %v4113 = vadd.f32 %v4062, %v4108
    %s4114 = scalar_lea.vmem %s87, 40
    %v4115 = vld [vmem:[%s4114] sm:$0xff]
    %v4116 = vrot.slane %v3868, 2
    %v4117 = vrot.slane %v3869, 2
    %v4118 = vsel %vm552, %v4116, %v4117
    %v4119 = vrot.slane %v3870, 2
    %v4120 = vsel %vm552, %v4117, %v4119
    %v4121 = vrot.slane %v3871, 2
    %v4122 = vsel %vm552, %v4119, %v4121
    %v4123 = vsel %vm552, %v4121, %v554
    %v4124 = vsel %vm733, %v4118, 0
    %v4126 = vsel %vm733, %v4120, 0
    %v4128 = vsel %vm733, %v4122, 0
    %v4130 = vsel %vm733, %v4123, 0
    %4132 = vmatpush.msra.mxu0 0.0
    %4133 = vmatpush.msra.mxu0 0.0
    %4134 = vmatpush.msra.mxu0 0.0
    %4135 = vmatpush.msra.mxu0 0.0
    %4136 = vmatpush.msra.mxu0 0.0
    %4137 = vmatpush.msra.mxu0 0.0
    %4138 = vmatpush.msra.mxu0 0.0
    %4139 = vmatpush.msra.mxu0 0.0
    %4140 = vmatpush.msra.mxu0 0.0
    %4141 = vmatpush.msra.mxu0 0.0
    %4142 = vmatpush.msra.mxu0 0.0
    %4143 = vmatpush.msra.mxu0 0.0
    %4144 = vmatpush.msra.mxu0 0.0
    %4145 = vmatpush.msra.mxu0 0.0
    %4146 = vmatpush.msra.mxu0 0.0
    %4147 = vmatpush.msra.mxu0 %v4115
    %4148 = vmatmul.f32.gmra.mxu0 %v4124
    %v4149 = vpop.f32.mrf.mxu0
    %v4150 = vadd.f32 0.0, %v4149
    %4151 = vmatmul.f32.gmra.mxu0 %v4126
    %v4152 = vpop.f32.mrf.mxu0
    %v4153 = vadd.f32 0.0, %v4152
    %4154 = vmatmul.f32.gmra.mxu0 %v4128
    %v4155 = vpop.f32.mrf.mxu0
    %v4156 = vadd.f32 0.0, %v4155
    %4157 = vmatmul.f32.gmra.mxu0 %v4130
    %v4158 = vpop.f32.mrf.mxu0
    %v4159 = vadd.f32 0.0, %v4158
    %4160 = vdwg.mxu0
    %v4161 = vadd.f32 %v4110, %v4150
    %v4162 = vadd.f32 %v4111, %v4153
    %v4163 = vadd.f32 %v4112, %v4156
    %v4164 = vadd.f32 %v4113, %v4159
    %s4165 = scalar_lea.vmem %s87, 48
    %v4166 = vld [vmem:[%s4165] sm:$0xff]
    %v4167 = vrot.slane %v3868, 3
    %v4168 = vrot.slane %v3869, 3
    %v4169 = vsel %vm584, %v4167, %v4168
    %v4170 = vrot.slane %v3870, 3
    %v4171 = vsel %vm584, %v4168, %v4170
    %v4172 = vrot.slane %v3871, 3
    %v4173 = vsel %vm584, %v4170, %v4172
    %v4174 = vsel %vm584, %v4172, %v586
    %v4175 = vsel %vm733, %v4169, 0
    %v4177 = vsel %vm733, %v4171, 0
    %v4179 = vsel %vm733, %v4173, 0
    %v4181 = vsel %vm733, %v4174, 0
    %4183 = vmatpush.msra.mxu0 0.0
    %4184 = vmatpush.msra.mxu0 0.0
    %4185 = vmatpush.msra.mxu0 0.0
    %4186 = vmatpush.msra.mxu0 0.0
    %4187 = vmatpush.msra.mxu0 0.0
    %4188 = vmatpush.msra.mxu0 0.0
    %4189 = vmatpush.msra.mxu0 0.0
    %4190 = vmatpush.msra.mxu0 0.0
    %4191 = vmatpush.msra.mxu0 0.0
    %4192 = vmatpush.msra.mxu0 0.0
    %4193 = vmatpush.msra.mxu0 0.0
    %4194 = vmatpush.msra.mxu0 0.0
    %4195 = vmatpush.msra.mxu0 0.0
    %4196 = vmatpush.msra.mxu0 0.0
    %4197 = vmatpush.msra.mxu0 0.0
    %4198 = vmatpush.msra.mxu0 %v4166
    %4199 = vmatmul.f32.gmra.mxu0 %v4175
    %v4200 = vpop.f32.mrf.mxu0
    %v4201 = vadd.f32 0.0, %v4200
    %4202 = vmatmul.f32.gmra.mxu0 %v4177
    %v4203 = vpop.f32.mrf.mxu0
    %v4204 = vadd.f32 0.0, %v4203
    %4205 = vmatmul.f32.gmra.mxu0 %v4179
    %v4206 = vpop.f32.mrf.mxu0
    %v4207 = vadd.f32 0.0, %v4206
    %4208 = vmatmul.f32.gmra.mxu0 %v4181
    %v4209 = vpop.f32.mrf.mxu0
    %v4210 = vadd.f32 0.0, %v4209
    %4211 = vdwg.mxu0
    %v4212 = vadd.f32 %v4161, %v4201
    %v4213 = vadd.f32 %v4162, %v4204
    %v4214 = vadd.f32 %v4163, %v4207
    %v4215 = vadd.f32 %v4164, %v4210
    %v4216 = vld [vmem:[#allocation2] sm:$0x1]
    %v4218 = vperm.slane %v4216, 0
    %v4220 = vadd.f32 %v4212, %v4218
    %v4221 = vadd.f32 %v4213, %v4218
    %v4222 = vadd.f32 %v4214, %v4218
    %v4223 = vadd.f32 %v4215, %v4218
    %v4224 = vtanh.pop %v4220
    %v4225 = vtanh.pop %v4221
    %v4226 = vtanh.pop %v4222
    %v4227 = vtanh.pop %v4223
    %vm4228 = vcmask 7168
    %4229 = vst.msk [vmem:[%s91] sm:$0xff] %vm4228, %v4224
    %4230 = vst.msk [vmem:[%s91 + $0x8] sm:$0xff] %vm4228, %v4225
    %4231 = vst.msk [vmem:[%s91 + $0x10] sm:$0xff] %vm4228, %v4226
    %4232 = vst.msk [vmem:[%s91 + $0x18] sm:$0xff] %vm4228, %v4227
    // Predicated region
    $region234: #{wrapper_hifigan_forward.1} parent=1 // pred_check
      _
    $region235: #{wrapper_hifigan_forward.1} parent=1 // pred_check_branch
      %4234 = sbr.rel (0) target = $region237
    $region236: #{wrapper_hifigan_forward.1} parent=1 // pred_region
      _
    $region237: #{wrapper_hifigan_forward.1} parent=1 // pred_fallthru
      _
    // Predicated region
    $region238: #{wrapper_hifigan_forward.1} parent=1 // pred_check
      _
    $region239: #{wrapper_hifigan_forward.1} parent=1 // pred_check_branch
      %4236 = sbr.rel (0) target = $region241
    $region240: #{wrapper_hifigan_forward.1} parent=1 // pred_region
      _
    $region241: #{wrapper_hifigan_forward.1} parent=1 // pred_fallthru
      _
    %4237 = vsyncpa [#allocation4], 1
    %4238 = vsyncpa [#allocation6], 1
    %4239 = vsyncpa [#allocation9], 1
    %4240 = vsyncpa [#allocation12], 1
    %4241 = vsyncpa [#allocation15], 1
    %4242 = vsyncpa [#allocation18], 1
    %4243 = vsyncpa [#allocation21], 1

</llo_original>
